<compile_context>
chip_gen: v7x
topology: tpu7x:2x2x1
jax: 0.10.0
libtpu: 0.0.40
codegen_flags: <defaults>
</compile_context>

<pallas_src>
import jax
import jax.numpy as jnp
import numpy as np
from jax.experimental import pallas as pl
from jax.experimental.pallas import tpu as pltpu


def make_deform_lka_kernel(H, W, Cp, OFF5, OFF7):
    HW = H * W
    TOT5 = 2 * OFF5 + HW
    TOT7 = 2 * OFF7 + HW
    BASE5 = OFF5 - (2 * W + 2)      # flat offset of tap (0,0): 5x5, pad=2
    BASE7 = OFF7 - (9 * W + 9)      # flat offset of tap (0,0): 7x7, dil=3, pad=9
    f32 = jnp.float32

    def kernel(x_ref, w5_ref, m5_ref, w7_ref, m7_ref, wp_ref, bp_ref, o_ref,
               pad5_ref, pad7_ref):
        u = x_ref[0]                                              # (Cp, HW)

        # ---- depthwise 5x5, padding=2 (zero-offset deformable path), no bias ----
        # Halo zeroes + interior copy are 128-lane aligned -> unmasked stores.
        pad5_ref[:, 0:OFF5] = jnp.zeros((Cp, OFF5), f32)
        pad5_ref[:, OFF5 + HW:TOT5] = jnp.zeros((Cp, OFF5), f32)
        pad5_ref[:, OFF5:OFF5 + HW] = u
        acc5 = jnp.zeros((Cp, HW), f32)                           # vreg-resident accumulator
        for kw in range(5):
            col = jnp.zeros((Cp, HW), f32)
            for kh in range(5):
                s = BASE5 + kh * W + kw                           # static lane offset of this tap
                col = col + pad5_ref[:, s:s + HW] * w5_ref[kh * 5 + kw]   # (Cp,1) lane bcast
            acc5 = acc5 + col * m5_ref[kw]                        # (1,HW) column-validity mask

        # ---- depthwise 7x7, dilation=3, padding=9, no bias ----
        pad7_ref[:, 0:OFF7] = jnp.zeros((Cp, OFF7), f32)
        pad7_ref[:, OFF7 + HW:TOT7] = jnp.zeros((Cp, OFF7), f32)
        pad7_ref[:, OFF7:OFF7 + HW] = acc5
        acc7 = jnp.zeros((Cp, HW), f32)
        for kw in range(7):
            col = jnp.zeros((Cp, HW), f32)
            for kh in range(7):
                s = BASE7 + 3 * kh * W + 3 * kw
                col = col + pad7_ref[:, s:s + HW] * w7_ref[kh * 7 + kw]
            acc7 = acc7 + col * m7_ref[kw]

        # ---- 1x1 pointwise conv + bias on the VPU (C tiny; MXU would be ~3% used) ----
        # Block-diagonal weight across the packed images keeps full-sublane vregs.
        attn = jnp.zeros((Cp, HW), f32)
        for si in range(Cp):
            attn = attn + wp_ref[si] * acc7[si:si + 1, :]         # (Cp,1) * (1,HW)
        attn = attn + bp_ref[...]                                 # (Cp,1) broadcast

        # ---- spatial gating: u * attn (full-sublane, lane-dense store) ----
        o_ref[0] = u * attn

    return kernel


def deformable_lka_pallas(x_nchw, params):
    """x_nchw: (B, C, H, W) float32 -> (B, C, H, W)."""
    B, C, H, W = x_nchw.shape
    HW = H * W
    f32 = jnp.float32

    # Pack 8//C images per grid step so f32 vregs use all 8 sublanes.
    pack = 8 // C if (0 < C <= 8 and 8 % C == 0) else 1
    if B % pack != 0:
        pack = 1
    Bg, Cp = B // pack, pack * C

    # Contiguous reshape only (no relayout): (B, C, H, W) -> (Bg, Cp, HW).
    x_flat = x_nchw.reshape(Bg, Cp, HW)

    def align128(n):
        return ((n + 127) // 128) * 128

    OFF5 = align128(2 * W + 2)      # 5x5 pad=2 flat halo, rounded to a lane boundary
    OFF7 = align128(9 * W + 9)      # 7x7 dil=3 pad=9 flat halo
    TOT5 = 2 * OFF5 + HW
    TOT7 = 2 * OFF7 + HW

    # Per-channel depthwise tap weights, tiled across the packed images: (K*K, Cp, 1).
    def tap_weights(w_dw, K):
        wt = jnp.transpose(w_dw[:, 0], (1, 2, 0)).reshape(K * K, C)   # [kh*K+kw, c]
        return jnp.tile(wt, (1, pack))[:, :, None]

    # Column-validity masks (one per kw, shared over kh and h): (K, 1, HW).
    def col_masks(K, dil, pad):
        wcol = jnp.arange(W)[None, :] + dil * jnp.arange(K)[:, None] - pad   # (K, W)
        valid = ((wcol >= 0) & (wcol < W)).astype(f32)
        return jnp.tile(valid, (1, H)).reshape(K, 1, HW)

    w5 = tap_weights(params['w5'], 5)          # (25, Cp, 1)
    w7 = tap_weights(params['w7'], 7)          # (49, Cp, 1)
    m5 = col_masks(5, 1, 2)                    # (5, 1, HW)
    m7 = col_masks(7, 3, 9)                    # (7, 1, HW)

    # 1x1 pointwise as a block-diagonal (per packed image) weight, transposed so that
    # wp[si] is the output-channel column for input sublane si.
    wbig = jnp.kron(jnp.eye(pack, dtype=f32), params['wl'])           # (Cp, Cp)
    wp = jnp.transpose(wbig)[:, :, None]                              # (Cp, Cp, 1)
    bp = jnp.tile(params['bl'], pack).reshape(Cp, 1)

    kernel = make_deform_lka_kernel(H, W, Cp, OFF5, OFF7)
    full = lambda shape: pl.BlockSpec(shape, lambda b: (0,) * len(shape))

    cost = pl.CostEstimate(
        flops=2 * (25 + 49 + C + 1) * B * C * HW,
        transcendentals=0,
        bytes_accessed=4 * (2 * B * C * HW + w5.size + w7.size + m5.size
                            + m7.size + wp.size + bp.size),
    )

    out = pl.pallas_call(
        kernel,
        out_shape=jax.ShapeDtypeStruct((Bg, Cp, HW), f32),
        grid_spec=pltpu.PrefetchScalarGridSpec(
            num_scalar_prefetch=0,
            grid=(Bg,),
            in_specs=[
                pl.BlockSpec((1, Cp, HW), lambda b: (b, 0, 0)),   # packed images
                full((25, Cp, 1)),                                # 5x5 per-channel tap weights
                full((5, 1, HW)),                                 # 5x5 column masks
                full((49, Cp, 1)),                                # 7x7 per-channel tap weights
                full((7, 1, HW)),                                 # 7x7 column masks
                full((Cp, Cp, 1)),                                # block-diag pw weight (transposed)
                full((Cp, 1)),                                    # pw bias (tiled)
            ],
            out_specs=pl.BlockSpec((1, Cp, HW), lambda b: (b, 0, 0)),
            scratch_shapes=[
                pltpu.VMEM((Cp, TOT5), f32),                      # aligned flat pad buffer, 5x5
                pltpu.VMEM((Cp, TOT7), f32),                      # aligned flat pad buffer, 7x7 dil=3
            ],
        ),
        compiler_params=pltpu.CompilerParams(
            dimension_semantics=("parallel",)),                   # 2 TCs on v7x
        cost_estimate=cost,
    )(x_flat, w5, m5, w7, m7, wp, bp)

    return out.reshape(B, C, H, W)


# ---------------- pure-JAX reference (NCHW, zero-offset deformable path) ----------------
def deformable_lka_ref(x, p):
    C = x.shape[1]

    def dw(z, w, padding, dilation):
        return jax.lax.conv_general_dilated(
            z, w, window_strides=(1, 1),
            padding=((padding, padding), (padding, padding)),
            rhs_dilation=(dilation, dilation),
            dimension_numbers=('NCHW', 'OIHW', 'NCHW'),
            feature_group_count=C)

    u = x
    a = dw(x, p['w5'], 2, 1)
    a = dw(a, p['w7'], 9, 3)
    attn = jnp.einsum('bchw,oc->bohw', a, p['wl']) + p['bl'][None, :, None, None]
    return u * attn


if __name__ == "__main__":
    B, C, H, W = 4, 4, 16, 16
    key = jax.random.PRNGKey(0)
    keys = jax.random.split(key, 6)

    # Deterministic synthetic parameters (PyTorch conv weight layouts).
    params = {
        'w5': 0.1 * jax.random.normal(keys[0], (C, 1, 5, 5), jnp.float32),  # depthwise 5x5
        'w7': 0.1 * jax.random.normal(keys[1], (C, 1, 7, 7), jnp.float32),  # depthwise 7x7 dil=3
        'wl': 0.1 * jax.random.normal(keys[2], (C, C), jnp.float32),        # 1x1 pw (O, I)
        'bl': 0.1 * jax.random.normal(keys[3], (C,), jnp.float32),
    }
    x = jax.random.normal(keys[4], (B, C, H, W), jnp.float32)

    out = jax.block_until_ready(deformable_lka_pallas(x, params))
    ref = jax.block_until_ready(deformable_lka_ref(x, params))
    np.testing.assert_allclose(np.asarray(out), np.asarray(ref), rtol=1e-4, atol=1e-4)

    print("KERNEL_OK")
</pallas_src>

<mosaic_0001>
module attributes {stable_mosaic.version = 11 : i64} {
  func.func @kernel(%arg0: i32, %arg1: memref<1x8x256xf32, #tpu.memory_space<vmem>>, %arg2: memref<25x8x1xf32, #tpu.memory_space<vmem>>, %arg3: memref<5x1x256xf32, #tpu.memory_space<vmem>>, %arg4: memref<49x8x1xf32, #tpu.memory_space<vmem>>, %arg5: memref<7x1x256xf32, #tpu.memory_space<vmem>>, %arg6: memref<8x8x1xf32, #tpu.memory_space<vmem>>, %arg7: memref<8x1xf32, #tpu.memory_space<vmem>>, %arg8: memref<1x8x256xf32, #tpu.memory_space<vmem>>, %arg9: memref<8x512xf32, #tpu.memory_space<vmem>>, %arg10: memref<8x768xf32, #tpu.memory_space<vmem>>) attributes {dimension_semantics = [#tpu.dimension_semantics<parallel>], iteration_bounds = array<i64: 2>, scalar_prefetch = 0 : i64, scratch_operands = 2 : i64, tpu.core_type = #tpu.core_type<tc>, window_params = [{transform_indices = @transform_0, window_bounds = array<i64: 1, 8, 256>}, {pipeline_mode = #tpu.pipeline_mode<synchronous>, transform_indices = @transform_1, window_bounds = array<i64: 25, 8, 1>}, {pipeline_mode = #tpu.pipeline_mode<synchronous>, transform_indices = @transform_2, window_bounds = array<i64: 5, 1, 256>}, {pipeline_mode = #tpu.pipeline_mode<synchronous>, transform_indices = @transform_3, window_bounds = array<i64: 49, 8, 1>}, {pipeline_mode = #tpu.pipeline_mode<synchronous>, transform_indices = @transform_4, window_bounds = array<i64: 7, 1, 256>}, {pipeline_mode = #tpu.pipeline_mode<synchronous>, transform_indices = @transform_5, window_bounds = array<i64: 8, 8, 1>}, {pipeline_mode = #tpu.pipeline_mode<synchronous>, transform_indices = @transform_6, window_bounds = array<i64: 8, 1>}, {transform_indices = @transform_7, window_bounds = array<i64: 1, 8, 256>}]} {
    %c0 = arith.constant 0 : index
    %c0_0 = arith.constant 0 : index
    %c0_1 = arith.constant 0 : index
    %0 = vector.load %arg1[%c0, %c0_0, %c0_1] : memref<1x8x256xf32, #tpu.memory_space<vmem>>, vector<1x8x256xf32>
    %1 = vector.shape_cast %0 : vector<1x8x256xf32> to vector<8x256xf32>
    %cst = arith.constant 0.000000e+00 : f32
    %2 = vector.broadcast %cst : f32 to vector<8x128xf32>
    %c0_2 = arith.constant 0 : index
    %c0_3 = arith.constant 0 : index
    %3 = vector.load %arg9[%c0_2, %c0_3] : memref<8x512xf32, #tpu.memory_space<vmem>>, vector<8x128xf32>
    tpu.vector_store %arg9[%c0_2, %c0_3], %2 {strides = array<i32>} : memref<8x512xf32, #tpu.memory_space<vmem>>, vector<8x128xf32>,
    %cst_4 = arith.constant 0.000000e+00 : f32
    %4 = vector.broadcast %cst_4 : f32 to vector<8x128xf32>
    %c0_5 = arith.constant 0 : index
    %c384 = arith.constant 384 : index
    %5 = vector.load %arg9[%c0_5, %c384] : memref<8x512xf32, #tpu.memory_space<vmem>>, vector<8x128xf32>
    tpu.vector_store %arg9[%c0_5, %c384], %4 {strides = array<i32>} : memref<8x512xf32, #tpu.memory_space<vmem>>, vector<8x128xf32>,
    %c0_6 = arith.constant 0 : index
    %c128 = arith.constant 128 : index
    %6 = vector.load %arg9[%c0_6, %c128] : memref<8x512xf32, #tpu.memory_space<vmem>>, vector<8x256xf32>
    tpu.vector_store %arg9[%c0_6, %c128], %1 {strides = array<i32>} : memref<8x512xf32, #tpu.memory_space<vmem>>, vector<8x256xf32>,
    %cst_7 = arith.constant 0.000000e+00 : f32
    %7 = vector.broadcast %cst_7 : f32 to vector<8x256xf32>
    %cst_8 = arith.constant 0.000000e+00 : f32
    %8 = vector.broadcast %cst_8 : f32 to vector<8x256xf32>
    %c0_9 = arith.constant 0 : index
    %c94 = arith.constant 94 : index
    %9 = vector.load %arg9[%c0_9, %c94] : memref<8x512xf32, #tpu.memory_space<vmem>>, vector<8x256xf32>
    %c0_10 = arith.constant 0 : index
    %c0_11 = arith.constant 0 : index
    %c0_12 = arith.constant 0 : index
    %10 = vector.load %arg2[%c0_10, %c0_11, %c0_12] : memref<25x8x1xf32, #tpu.memory_space<vmem>>, vector<1x8x1xf32>
    %11 = vector.shape_cast %10 : vector<1x8x1xf32> to vector<8x1xf32>
    %12 = vector.broadcast %11 : vector<8x1xf32> to vector<8x256xf32>
    %13 = arith.mulf %9, %12 : vector<8x256xf32>
    %14 = arith.addf %8, %13 : vector<8x256xf32>
    %c0_13 = arith.constant 0 : index
    %c110 = arith.constant 110 : index
    %15 = vector.load %arg9[%c0_13, %c110] : memref<8x512xf32, #tpu.memory_space<vmem>>, vector<8x256xf32>
    %c5 = arith.constant 5 : index
    %c0_14 = arith.constant 0 : index
    %c0_15 = arith.constant 0 : index
    %16 = vector.load %arg2[%c5, %c0_14, %c0_15] : memref<25x8x1xf32, #tpu.memory_space<vmem>>, vector<1x8x1xf32>
    %17 = vector.shape_cast %16 : vector<1x8x1xf32> to vector<8x1xf32>
    %18 = vector.broadcast %17 : vector<8x1xf32> to vector<8x256xf32>
    %19 = arith.mulf %15, %18 : vector<8x256xf32>
    %20 = arith.addf %14, %19 : vector<8x256xf32>
    %c0_16 = arith.constant 0 : index
    %c126 = arith.constant 126 : index
    %21 = vector.load %arg9[%c0_16, %c126] : memref<8x512xf32, #tpu.memory_space<vmem>>, vector<8x256xf32>
    %c10 = arith.constant 10 : index
    %c0_17 = arith.constant 0 : index
    %c0_18 = arith.constant 0 : index
    %22 = vector.load %arg2[%c10, %c0_17, %c0_18] : memref<25x8x1xf32, #tpu.memory_space<vmem>>, vector<1x8x1xf32>
    %23 = vector.shape_cast %22 : vector<1x8x1xf32> to vector<8x1xf32>
    %24 = vector.broadcast %23 : vector<8x1xf32> to vector<8x256xf32>
    %25 = arith.mulf %21, %24 : vector<8x256xf32>
    %26 = arith.addf %20, %25 : vector<8x256xf32>
    %c0_19 = arith.constant 0 : index
    %c142 = arith.constant 142 : index
    %27 = vector.load %arg9[%c0_19, %c142] : memref<8x512xf32, #tpu.memory_space<vmem>>, vector<8x256xf32>
    %c15 = arith.constant 15 : index
    %c0_20 = arith.constant 0 : index
    %c0_21 = arith.constant 0 : index
    %28 = vector.load %arg2[%c15, %c0_20, %c0_21] : memref<25x8x1xf32, #tpu.memory_space<vmem>>, vector<1x8x1xf32>
    %29 = vector.shape_cast %28 : vector<1x8x1xf32> to vector<8x1xf32>
    %30 = vector.broadcast %29 : vector<8x1xf32> to vector<8x256xf32>
    %31 = arith.mulf %27, %30 : vector<8x256xf32>
    %32 = arith.addf %26, %31 : vector<8x256xf32>
    %c0_22 = arith.constant 0 : index
    %c158 = arith.constant 158 : index
    %33 = vector.load %arg9[%c0_22, %c158] : memref<8x512xf32, #tpu.memory_space<vmem>>, vector<8x256xf32>
    %c20 = arith.constant 20 : index
    %c0_23 = arith.constant 0 : index
    %c0_24 = arith.constant 0 : index
    %34 = vector.load %arg2[%c20, %c0_23, %c0_24] : memref<25x8x1xf32, #tpu.memory_space<vmem>>, vector<1x8x1xf32>
    %35 = vector.shape_cast %34 : vector<1x8x1xf32> to vector<8x1xf32>
    %36 = vector.broadcast %35 : vector<8x1xf32> to vector<8x256xf32>
    %37 = arith.mulf %33, %36 : vector<8x256xf32>
    %38 = arith.addf %32, %37 : vector<8x256xf32>
    %c0_25 = arith.constant 0 : index
    %c0_26 = arith.constant 0 : index
    %c0_27 = arith.constant 0 : index
    %39 = vector.load %arg3[%c0_25, %c0_26, %c0_27] : memref<5x1x256xf32, #tpu.memory_space<vmem>>, vector<1x1x256xf32>
    %40 = vector.shape_cast %39 : vector<1x1x256xf32> to vector<1x256xf32>
    %41 = vector.broadcast %40 : vector<1x256xf32> to vector<8x256xf32>
    %42 = arith.mulf %38, %41 : vector<8x256xf32>
    %43 = arith.addf %7, %42 : vector<8x256xf32>
    %cst_28 = arith.constant 0.000000e+00 : f32
    %44 = vector.broadcast %cst_28 : f32 to vector<8x256xf32>
    %c0_29 = arith.constant 0 : index
    %c95 = arith.constant 95 : index
    %45 = vector.load %arg9[%c0_29, %c95] : memref<8x512xf32, #tpu.memory_space<vmem>>, vector<8x256xf32>
    %c1 = arith.constant 1 : index
    %c0_30 = arith.constant 0 : index
    %c0_31 = arith.constant 0 : index
    %46 = vector.load %arg2[%c1, %c0_30, %c0_31] : memref<25x8x1xf32, #tpu.memory_space<vmem>>, vector<1x8x1xf32>
    %47 = vector.shape_cast %46 : vector<1x8x1xf32> to vector<8x1xf32>
    %48 = vector.broadcast %47 : vector<8x1xf32> to vector<8x256xf32>
    %49 = arith.mulf %45, %48 : vector<8x256xf32>
    %50 = arith.addf %44, %49 : vector<8x256xf32>
    %c0_32 = arith.constant 0 : index
    %c111 = arith.constant 111 : index
    %51 = vector.load %arg9[%c0_32, %c111] : memref<8x512xf32, #tpu.memory_space<vmem>>, vector<8x256xf32>
    %c6 = arith.constant 6 : index
    %c0_33 = arith.constant 0 : index
    %c0_34 = arith.constant 0 : index
    %52 = vector.load %arg2[%c6, %c0_33, %c0_34] : memref<25x8x1xf32, #tpu.memory_space<vmem>>, vector<1x8x1xf32>
    %53 = vector.shape_cast %52 : vector<1x8x1xf32> to vector<8x1xf32>
    %54 = vector.broadcast %53 : vector<8x1xf32> to vector<8x256xf32>
    %55 = arith.mulf %51, %54 : vector<8x256xf32>
    %56 = arith.addf %50, %55 : vector<8x256xf32>
    %c0_35 = arith.constant 0 : index
    %c127 = arith.constant 127 : index
    %57 = vector.load %arg9[%c0_35, %c127] : memref<8x512xf32, #tpu.memory_space<vmem>>, vector<8x256xf32>
    %c11 = arith.constant 11 : index
    %c0_36 = arith.constant 0 : index
    %c0_37 = arith.constant 0 : index
    %58 = vector.load %arg2[%c11, %c0_36, %c0_37] : memref<25x8x1xf32, #tpu.memory_space<vmem>>, vector<1x8x1xf32>
    %59 = vector.shape_cast %58 : vector<1x8x1xf32> to vector<8x1xf32>
    %60 = vector.broadcast %59 : vector<8x1xf32> to vector<8x256xf32>
    %61 = arith.mulf %57, %60 : vector<8x256xf32>
    %62 = arith.addf %56, %61 : vector<8x256xf32>
    %c0_38 = arith.constant 0 : index
    %c143 = arith.constant 143 : index
    %63 = vector.load %arg9[%c0_38, %c143] : memref<8x512xf32, #tpu.memory_space<vmem>>, vector<8x256xf32>
    %c16 = arith.constant 16 : index
    %c0_39 = arith.constant 0 : index
    %c0_40 = arith.constant 0 : index
    %64 = vector.load %arg2[%c16, %c0_39, %c0_40] : memref<25x8x1xf32, #tpu.memory_space<vmem>>, vector<1x8x1xf32>
    %65 = vector.shape_cast %64 : vector<1x8x1xf32> to vector<8x1xf32>
    %66 = vector.broadcast %65 : vector<8x1xf32> to vector<8x256xf32>
    %67 = arith.mulf %63, %66 : vector<8x256xf32>
    %68 = arith.addf %62, %67 : vector<8x256xf32>
    %c0_41 = arith.constant 0 : index
    %c159 = arith.constant 159 : index
    %69 = vector.load %arg9[%c0_41, %c159] : memref<8x512xf32, #tpu.memory_space<vmem>>, vector<8x256xf32>
    %c21 = arith.constant 21 : index
    %c0_42 = arith.constant 0 : index
    %c0_43 = arith.constant 0 : index
    %70 = vector.load %arg2[%c21, %c0_42, %c0_43] : memref<25x8x1xf32, #tpu.memory_space<vmem>>, vector<1x8x1xf32>
    %71 = vector.shape_cast %70 : vector<1x8x1xf32> to vector<8x1xf32>
    %72 = vector.broadcast %71 : vector<8x1xf32> to vector<8x256xf32>
    %73 = arith.mulf %69, %72 : vector<8x256xf32>
    %74 = arith.addf %68, %73 : vector<8x256xf32>
    %c1_44 = arith.constant 1 : index
    %c0_45 = arith.constant 0 : index
    %c0_46 = arith.constant 0 : index
    %75 = vector.load %arg3[%c1_44, %c0_45, %c0_46] : memref<5x1x256xf32, #tpu.memory_space<vmem>>, vector<1x1x256xf32>
    %76 = vector.shape_cast %75 : vector<1x1x256xf32> to vector<1x256xf32>
    %77 = vector.broadcast %76 : vector<1x256xf32> to vector<8x256xf32>
    %78 = arith.mulf %74, %77 : vector<8x256xf32>
    %79 = arith.addf %43, %78 : vector<8x256xf32>
    %cst_47 = arith.constant 0.000000e+00 : f32
    %80 = vector.broadcast %cst_47 : f32 to vector<8x256xf32>
    %c0_48 = arith.constant 0 : index
    %c96 = arith.constant 96 : index
    %81 = vector.load %arg9[%c0_48, %c96] : memref<8x512xf32, #tpu.memory_space<vmem>>, vector<8x256xf32>
    %c2 = arith.constant 2 : index
    %c0_49 = arith.constant 0 : index
    %c0_50 = arith.constant 0 : index
    %82 = vector.load %arg2[%c2, %c0_49, %c0_50] : memref<25x8x1xf32, #tpu.memory_space<vmem>>, vector<1x8x1xf32>
    %83 = vector.shape_cast %82 : vector<1x8x1xf32> to vector<8x1xf32>
    %84 = vector.broadcast %83 : vector<8x1xf32> to vector<8x256xf32>
    %85 = arith.mulf %81, %84 : vector<8x256xf32>
    %86 = arith.addf %80, %85 : vector<8x256xf32>
    %c0_51 = arith.constant 0 : index
    %c112 = arith.constant 112 : index
    %87 = vector.load %arg9[%c0_51, %c112] : memref<8x512xf32, #tpu.memory_space<vmem>>, vector<8x256xf32>
    %c7 = arith.constant 7 : index
    %c0_52 = arith.constant 0 : index
    %c0_53 = arith.constant 0 : index
    %88 = vector.load %arg2[%c7, %c0_52, %c0_53] : memref<25x8x1xf32, #tpu.memory_space<vmem>>, vector<1x8x1xf32>
    %89 = vector.shape_cast %88 : vector<1x8x1xf32> to vector<8x1xf32>
    %90 = vector.broadcast %89 : vector<8x1xf32> to vector<8x256xf32>
    %91 = arith.mulf %87, %90 : vector<8x256xf32>
    %92 = arith.addf %86, %91 : vector<8x256xf32>
    %c0_54 = arith.constant 0 : index
    %c128_55 = arith.constant 128 : index
    %93 = vector.load %arg9[%c0_54, %c128_55] : memref<8x512xf32, #tpu.memory_space<vmem>>, vector<8x256xf32>
    %c12 = arith.constant 12 : index
    %c0_56 = arith.constant 0 : index
    %c0_57 = arith.constant 0 : index
    %94 = vector.load %arg2[%c12, %c0_56, %c0_57] : memref<25x8x1xf32, #tpu.memory_space<vmem>>, vector<1x8x1xf32>
    %95 = vector.shape_cast %94 : vector<1x8x1xf32> to vector<8x1xf32>
    %96 = vector.broadcast %95 : vector<8x1xf32> to vector<8x256xf32>
    %97 = arith.mulf %93, %96 : vector<8x256xf32>
    %98 = arith.addf %92, %97 : vector<8x256xf32>
    %c0_58 = arith.constant 0 : index
    %c144 = arith.constant 144 : index
    %99 = vector.load %arg9[%c0_58, %c144] : memref<8x512xf32, #tpu.memory_space<vmem>>, vector<8x256xf32>
    %c17 = arith.constant 17 : index
    %c0_59 = arith.constant 0 : index
    %c0_60 = arith.constant 0 : index
    %100 = vector.load %arg2[%c17, %c0_59, %c0_60] : memref<25x8x1xf32, #tpu.memory_space<vmem>>, vector<1x8x1xf32>
    %101 = vector.shape_cast %100 : vector<1x8x1xf32> to vector<8x1xf32>
    %102 = vector.broadcast %101 : vector<8x1xf32> to vector<8x256xf32>
    %103 = arith.mulf %99, %102 : vector<8x256xf32>
    %104 = arith.addf %98, %103 : vector<8x256xf32>
    %c0_61 = arith.constant 0 : index
    %c160 = arith.constant 160 : index
    %105 = vector.load %arg9[%c0_61, %c160] : memref<8x512xf32, #tpu.memory_space<vmem>>, vector<8x256xf32>
    %c22 = arith.constant 22 : index
    %c0_62 = arith.constant 0 : index
    %c0_63 = arith.constant 0 : index
    %106 = vector.load %arg2[%c22, %c0_62, %c0_63] : memref<25x8x1xf32, #tpu.memory_space<vmem>>, vector<1x8x1xf32>
    %107 = vector.shape_cast %106 : vector<1x8x1xf32> to vector<8x1xf32>
    %108 = vector.broadcast %107 : vector<8x1xf32> to vector<8x256xf32>
    %109 = arith.mulf %105, %108 : vector<8x256xf32>
    %110 = arith.addf %104, %109 : vector<8x256xf32>
    %c2_64 = arith.constant 2 : index
    %c0_65 = arith.constant 0 : index
    %c0_66 = arith.constant 0 : index
    %111 = vector.load %arg3[%c2_64, %c0_65, %c0_66] : memref<5x1x256xf32, #tpu.memory_space<vmem>>, vector<1x1x256xf32>
    %112 = vector.shape_cast %111 : vector<1x1x256xf32> to vector<1x256xf32>
    %113 = vector.broadcast %112 : vector<1x256xf32> to vector<8x256xf32>
    %114 = arith.mulf %110, %113 : vector<8x256xf32>
    %115 = arith.addf %79, %114 : vector<8x256xf32>
    %cst_67 = arith.constant 0.000000e+00 : f32
    %116 = vector.broadcast %cst_67 : f32 to vector<8x256xf32>
    %c0_68 = arith.constant 0 : index
    %c97 = arith.constant 97 : index
    %117 = vector.load %arg9[%c0_68, %c97] : memref<8x512xf32, #tpu.memory_space<vmem>>, vector<8x256xf32>
    %c3 = arith.constant 3 : index
    %c0_69 = arith.constant 0 : index
    %c0_70 = arith.constant 0 : index
    %118 = vector.load %arg2[%c3, %c0_69, %c0_70] : memref<25x8x1xf32, #tpu.memory_space<vmem>>, vector<1x8x1xf32>
    %119 = vector.shape_cast %118 : vector<1x8x1xf32> to vector<8x1xf32>
    %120 = vector.broadcast %119 : vector<8x1xf32> to vector<8x256xf32>
    %121 = arith.mulf %117, %120 : vector<8x256xf32>
    %122 = arith.addf %116, %121 : vector<8x256xf32>
    %c0_71 = arith.constant 0 : index
    %c113 = arith.constant 113 : index
    %123 = vector.load %arg9[%c0_71, %c113] : memref<8x512xf32, #tpu.memory_space<vmem>>, vector<8x256xf32>
    %c8 = arith.constant 8 : index
    %c0_72 = arith.constant 0 : index
    %c0_73 = arith.constant 0 : index
    %124 = vector.load %arg2[%c8, %c0_72, %c0_73] : memref<25x8x1xf32, #tpu.memory_space<vmem>>, vector<1x8x1xf32>
    %125 = vector.shape_cast %124 : vector<1x8x1xf32> to vector<8x1xf32>
    %126 = vector.broadcast %125 : vector<8x1xf32> to vector<8x256xf32>
    %127 = arith.mulf %123, %126 : vector<8x256xf32>
    %128 = arith.addf %122, %127 : vector<8x256xf32>
    %c0_74 = arith.constant 0 : index
    %c129 = arith.constant 129 : index
    %129 = vector.load %arg9[%c0_74, %c129] : memref<8x512xf32, #tpu.memory_space<vmem>>, vector<8x256xf32>
    %c13 = arith.constant 13 : index
    %c0_75 = arith.constant 0 : index
    %c0_76 = arith.constant 0 : index
    %130 = vector.load %arg2[%c13, %c0_75, %c0_76] : memref<25x8x1xf32, #tpu.memory_space<vmem>>, vector<1x8x1xf32>
    %131 = vector.shape_cast %130 : vector<1x8x1xf32> to vector<8x1xf32>
    %132 = vector.broadcast %131 : vector<8x1xf32> to vector<8x256xf32>
    %133 = arith.mulf %129, %132 : vector<8x256xf32>
    %134 = arith.addf %128, %133 : vector<8x256xf32>
    %c0_77 = arith.constant 0 : index
    %c145 = arith.constant 145 : index
    %135 = vector.load %arg9[%c0_77, %c145] : memref<8x512xf32, #tpu.memory_space<vmem>>, vector<8x256xf32>
    %c18 = arith.constant 18 : index
    %c0_78 = arith.constant 0 : index
    %c0_79 = arith.constant 0 : index
    %136 = vector.load %arg2[%c18, %c0_78, %c0_79] : memref<25x8x1xf32, #tpu.memory_space<vmem>>, vector<1x8x1xf32>
    %137 = vector.shape_cast %136 : vector<1x8x1xf32> to vector<8x1xf32>
    %138 = vector.broadcast %137 : vector<8x1xf32> to vector<8x256xf32>
    %139 = arith.mulf %135, %138 : vector<8x256xf32>
    %140 = arith.addf %134, %139 : vector<8x256xf32>
    %c0_80 = arith.constant 0 : index
    %c161 = arith.constant 161 : index
    %141 = vector.load %arg9[%c0_80, %c161] : memref<8x512xf32, #tpu.memory_space<vmem>>, vector<8x256xf32>
    %c23 = arith.constant 23 : index
    %c0_81 = arith.constant 0 : index
    %c0_82 = arith.constant 0 : index
    %142 = vector.load %arg2[%c23, %c0_81, %c0_82] : memref<25x8x1xf32, #tpu.memory_space<vmem>>, vector<1x8x1xf32>
    %143 = vector.shape_cast %142 : vector<1x8x1xf32> to vector<8x1xf32>
    %144 = vector.broadcast %143 : vector<8x1xf32> to vector<8x256xf32>
    %145 = arith.mulf %141, %144 : vector<8x256xf32>
    %146 = arith.addf %140, %145 : vector<8x256xf32>
    %c3_83 = arith.constant 3 : index
    %c0_84 = arith.constant 0 : index
    %c0_85 = arith.constant 0 : index
    %147 = vector.load %arg3[%c3_83, %c0_84, %c0_85] : memref<5x1x256xf32, #tpu.memory_space<vmem>>, vector<1x1x256xf32>
    %148 = vector.shape_cast %147 : vector<1x1x256xf32> to vector<1x256xf32>
    %149 = vector.broadcast %148 : vector<1x256xf32> to vector<8x256xf32>
    %150 = arith.mulf %146, %149 : vector<8x256xf32>
    %151 = arith.addf %115, %150 : vector<8x256xf32>
    %cst_86 = arith.constant 0.000000e+00 : f32
    %152 = vector.broadcast %cst_86 : f32 to vector<8x256xf32>
    %c0_87 = arith.constant 0 : index
    %c98 = arith.constant 98 : index
    %153 = vector.load %arg9[%c0_87, %c98] : memref<8x512xf32, #tpu.memory_space<vmem>>, vector<8x256xf32>
    %c4 = arith.constant 4 : index
    %c0_88 = arith.constant 0 : index
    %c0_89 = arith.constant 0 : index
    %154 = vector.load %arg2[%c4, %c0_88, %c0_89] : memref<25x8x1xf32, #tpu.memory_space<vmem>>, vector<1x8x1xf32>
    %155 = vector.shape_cast %154 : vector<1x8x1xf32> to vector<8x1xf32>
    %156 = vector.broadcast %155 : vector<8x1xf32> to vector<8x256xf32>
    %157 = arith.mulf %153, %156 : vector<8x256xf32>
    %158 = arith.addf %152, %157 : vector<8x256xf32>
    %c0_90 = arith.constant 0 : index
    %c114 = arith.constant 114 : index
    %159 = vector.load %arg9[%c0_90, %c114] : memref<8x512xf32, #tpu.memory_space<vmem>>, vector<8x256xf32>
    %c9 = arith.constant 9 : index
    %c0_91 = arith.constant 0 : index
    %c0_92 = arith.constant 0 : index
    %160 = vector.load %arg2[%c9, %c0_91, %c0_92] : memref<25x8x1xf32, #tpu.memory_space<vmem>>, vector<1x8x1xf32>
    %161 = vector.shape_cast %160 : vector<1x8x1xf32> to vector<8x1xf32>
    %162 = vector.broadcast %161 : vector<8x1xf32> to vector<8x256xf32>
    %163 = arith.mulf %159, %162 : vector<8x256xf32>
    %164 = arith.addf %158, %163 : vector<8x256xf32>
    %c0_93 = arith.constant 0 : index
    %c130 = arith.constant 130 : index
    %165 = vector.load %arg9[%c0_93, %c130] : memref<8x512xf32, #tpu.memory_space<vmem>>, vector<8x256xf32>
    %c14 = arith.constant 14 : index
    %c0_94 = arith.constant 0 : index
    %c0_95 = arith.constant 0 : index
    %166 = vector.load %arg2[%c14, %c0_94, %c0_95] : memref<25x8x1xf32, #tpu.memory_space<vmem>>, vector<1x8x1xf32>
    %167 = vector.shape_cast %166 : vector<1x8x1xf32> to vector<8x1xf32>
    %168 = vector.broadcast %167 : vector<8x1xf32> to vector<8x256xf32>
    %169 = arith.mulf %165, %168 : vector<8x256xf32>
    %170 = arith.addf %164, %169 : vector<8x256xf32>
    %c0_96 = arith.constant 0 : index
    %c146 = arith.constant 146 : index
    %171 = vector.load %arg9[%c0_96, %c146] : memref<8x512xf32, #tpu.memory_space<vmem>>, vector<8x256xf32>
    %c19 = arith.constant 19 : index
    %c0_97 = arith.constant 0 : index
    %c0_98 = arith.constant 0 : index
    %172 = vector.load %arg2[%c19, %c0_97, %c0_98] : memref<25x8x1xf32, #tpu.memory_space<vmem>>, vector<1x8x1xf32>
    %173 = vector.shape_cast %172 : vector<1x8x1xf32> to vector<8x1xf32>
    %174 = vector.broadcast %173 : vector<8x1xf32> to vector<8x256xf32>
    %175 = arith.mulf %171, %174 : vector<8x256xf32>
    %176 = arith.addf %170, %175 : vector<8x256xf32>
    %c0_99 = arith.constant 0 : index
    %c162 = arith.constant 162 : index
    %177 = vector.load %arg9[%c0_99, %c162] : memref<8x512xf32, #tpu.memory_space<vmem>>, vector<8x256xf32>
    %c24 = arith.constant 24 : index
    %c0_100 = arith.constant 0 : index
    %c0_101 = arith.constant 0 : index
    %178 = vector.load %arg2[%c24, %c0_100, %c0_101] : memref<25x8x1xf32, #tpu.memory_space<vmem>>, vector<1x8x1xf32>
    %179 = vector.shape_cast %178 : vector<1x8x1xf32> to vector<8x1xf32>
    %180 = vector.broadcast %179 : vector<8x1xf32> to vector<8x256xf32>
    %181 = arith.mulf %177, %180 : vector<8x256xf32>
    %182 = arith.addf %176, %181 : vector<8x256xf32>
    %c4_102 = arith.constant 4 : index
    %c0_103 = arith.constant 0 : index
    %c0_104 = arith.constant 0 : index
    %183 = vector.load %arg3[%c4_102, %c0_103, %c0_104] : memref<5x1x256xf32, #tpu.memory_space<vmem>>, vector<1x1x256xf32>
    %184 = vector.shape_cast %183 : vector<1x1x256xf32> to vector<1x256xf32>
    %185 = vector.broadcast %184 : vector<1x256xf32> to vector<8x256xf32>
    %186 = arith.mulf %182, %185 : vector<8x256xf32>
    %187 = arith.addf %151, %186 : vector<8x256xf32>
    %cst_105 = arith.constant 0.000000e+00 : f32
    %188 = vector.broadcast %cst_105 : f32 to vector<8x256xf32>
    %c0_106 = arith.constant 0 : index
    %c0_107 = arith.constant 0 : index
    %189 = vector.load %arg10[%c0_106, %c0_107] : memref<8x768xf32, #tpu.memory_space<vmem>>, vector<8x256xf32>
    tpu.vector_store %arg10[%c0_106, %c0_107], %188 {strides = array<i32>} : memref<8x768xf32, #tpu.memory_space<vmem>>, vector<8x256xf32>,
    %cst_108 = arith.constant 0.000000e+00 : f32
    %190 = vector.broadcast %cst_108 : f32 to vector<8x256xf32>
    %c0_109 = arith.constant 0 : index
    %c512 = arith.constant 512 : index
    %191 = vector.load %arg10[%c0_109, %c512] : memref<8x768xf32, #tpu.memory_space<vmem>>, vector<8x256xf32>
    tpu.vector_store %arg10[%c0_109, %c512], %190 {strides = array<i32>} : memref<8x768xf32, #tpu.memory_space<vmem>>, vector<8x256xf32>,
    %c0_110 = arith.constant 0 : index
    %c256 = arith.constant 256 : index
    %192 = vector.load %arg10[%c0_110, %c256] : memref<8x768xf32, #tpu.memory_space<vmem>>, vector<8x256xf32>
    tpu.vector_store %arg10[%c0_110, %c256], %187 {strides = array<i32>} : memref<8x768xf32, #tpu.memory_space<vmem>>, vector<8x256xf32>,
    %cst_111 = arith.constant 0.000000e+00 : f32
    %193 = vector.broadcast %cst_111 : f32 to vector<8x256xf32>
    %cst_112 = arith.constant 0.000000e+00 : f32
    %194 = vector.broadcast %cst_112 : f32 to vector<8x256xf32>
    %c0_113 = arith.constant 0 : index
    %c103 = arith.constant 103 : index
    %195 = vector.load %arg10[%c0_113, %c103] : memref<8x768xf32, #tpu.memory_space<vmem>>, vector<8x256xf32>
    %c0_114 = arith.constant 0 : index
    %c0_115 = arith.constant 0 : index
    %c0_116 = arith.constant 0 : index
    %196 = vector.load %arg4[%c0_114, %c0_115, %c0_116] : memref<49x8x1xf32, #tpu.memory_space<vmem>>, vector<1x8x1xf32>
    %197 = vector.shape_cast %196 : vector<1x8x1xf32> to vector<8x1xf32>
    %198 = vector.broadcast %197 : vector<8x1xf32> to vector<8x256xf32>
    %199 = arith.mulf %195, %198 : vector<8x256xf32>
    %200 = arith.addf %194, %199 : vector<8x256xf32>
    %c0_117 = arith.constant 0 : index
    %c151 = arith.constant 151 : index
    %201 = vector.load %arg10[%c0_117, %c151] : memref<8x768xf32, #tpu.memory_space<vmem>>, vector<8x256xf32>
    %c7_118 = arith.constant 7 : index
    %c0_119 = arith.constant 0 : index
    %c0_120 = arith.constant 0 : index
    %202 = vector.load %arg4[%c7_118, %c0_119, %c0_120] : memref<49x8x1xf32, #tpu.memory_space<vmem>>, vector<1x8x1xf32>
    %203 = vector.shape_cast %202 : vector<1x8x1xf32> to vector<8x1xf32>
    %204 = vector.broadcast %203 : vector<8x1xf32> to vector<8x256xf32>
    %205 = arith.mulf %201, %204 : vector<8x256xf32>
    %206 = arith.addf %200, %205 : vector<8x256xf32>
    %c0_121 = arith.constant 0 : index
    %c199 = arith.constant 199 : index
    %207 = vector.load %arg10[%c0_121, %c199] : memref<8x768xf32, #tpu.memory_space<vmem>>, vector<8x256xf32>
    %c14_122 = arith.constant 14 : index
    %c0_123 = arith.constant 0 : index
    %c0_124 = arith.constant 0 : index
    %208 = vector.load %arg4[%c14_122, %c0_123, %c0_124] : memref<49x8x1xf32, #tpu.memory_space<vmem>>, vector<1x8x1xf32>
    %209 = vector.shape_cast %208 : vector<1x8x1xf32> to vector<8x1xf32>
    %210 = vector.broadcast %209 : vector<8x1xf32> to vector<8x256xf32>
    %211 = arith.mulf %207, %210 : vector<8x256xf32>
    %212 = arith.addf %206, %211 : vector<8x256xf32>
    %c0_125 = arith.constant 0 : index
    %c247 = arith.constant 247 : index
    %213 = vector.load %arg10[%c0_125, %c247] : memref<8x768xf32, #tpu.memory_space<vmem>>, vector<8x256xf32>
    %c21_126 = arith.constant 21 : index
    %c0_127 = arith.constant 0 : index
    %c0_128 = arith.constant 0 : index
    %214 = vector.load %arg4[%c21_126, %c0_127, %c0_128] : memref<49x8x1xf32, #tpu.memory_space<vmem>>, vector<1x8x1xf32>
    %215 = vector.shape_cast %214 : vector<1x8x1xf32> to vector<8x1xf32>
    %216 = vector.broadcast %215 : vector<8x1xf32> to vector<8x256xf32>
    %217 = arith.mulf %213, %216 : vector<8x256xf32>
    %218 = arith.addf %212, %217 : vector<8x256xf32>
    %c0_129 = arith.constant 0 : index
    %c295 = arith.constant 295 : index
    %219 = vector.load %arg10[%c0_129, %c295] : memref<8x768xf32, #tpu.memory_space<vmem>>, vector<8x256xf32>
    %c28 = arith.constant 28 : index
    %c0_130 = arith.constant 0 : index
    %c0_131 = arith.constant 0 : index
    %220 = vector.load %arg4[%c28, %c0_130, %c0_131] : memref<49x8x1xf32, #tpu.memory_space<vmem>>, vector<1x8x1xf32>
    %221 = vector.shape_cast %220 : vector<1x8x1xf32> to vector<8x1xf32>
    %222 = vector.broadcast %221 : vector<8x1xf32> to vector<8x256xf32>
    %223 = arith.mulf %219, %222 : vector<8x256xf32>
    %224 = arith.addf %218, %223 : vector<8x256xf32>
    %c0_132 = arith.constant 0 : index
    %c343 = arith.constant 343 : index
    %225 = vector.load %arg10[%c0_132, %c343] : memref<8x768xf32, #tpu.memory_space<vmem>>, vector<8x256xf32>
    %c35 = arith.constant 35 : index
    %c0_133 = arith.constant 0 : index
    %c0_134 = arith.constant 0 : index
    %226 = vector.load %arg4[%c35, %c0_133, %c0_134] : memref<49x8x1xf32, #tpu.memory_space<vmem>>, vector<1x8x1xf32>
    %227 = vector.shape_cast %226 : vector<1x8x1xf32> to vector<8x1xf32>
    %228 = vector.broadcast %227 : vector<8x1xf32> to vector<8x256xf32>
    %229 = arith.mulf %225, %228 : vector<8x256xf32>
    %230 = arith.addf %224, %229 : vector<8x256xf32>
    %c0_135 = arith.constant 0 : index
    %c391 = arith.constant 391 : index
    %231 = vector.load %arg10[%c0_135, %c391] : memref<8x768xf32, #tpu.memory_space<vmem>>, vector<8x256xf32>
    %c42 = arith.constant 42 : index
    %c0_136 = arith.constant 0 : index
    %c0_137 = arith.constant 0 : index
    %232 = vector.load %arg4[%c42, %c0_136, %c0_137] : memref<49x8x1xf32, #tpu.memory_space<vmem>>, vector<1x8x1xf32>
    %233 = vector.shape_cast %232 : vector<1x8x1xf32> to vector<8x1xf32>
    %234 = vector.broadcast %233 : vector<8x1xf32> to vector<8x256xf32>
    %235 = arith.mulf %231, %234 : vector<8x256xf32>
    %236 = arith.addf %230, %235 : vector<8x256xf32>
    %c0_138 = arith.constant 0 : index
    %c0_139 = arith.constant 0 : index
    %c0_140 = arith.constant 0 : index
    %237 = vector.load %arg5[%c0_138, %c0_139, %c0_140] : memref<7x1x256xf32, #tpu.memory_space<vmem>>, vector<1x1x256xf32>
    %238 = vector.shape_cast %237 : vector<1x1x256xf32> to vector<1x256xf32>
    %239 = vector.broadcast %238 : vector<1x256xf32> to vector<8x256xf32>
    %240 = arith.mulf %236, %239 : vector<8x256xf32>
    %241 = arith.addf %193, %240 : vector<8x256xf32>
    %cst_141 = arith.constant 0.000000e+00 : f32
    %242 = vector.broadcast %cst_141 : f32 to vector<8x256xf32>
    %c0_142 = arith.constant 0 : index
    %c106 = arith.constant 106 : index
    %243 = vector.load %arg10[%c0_142, %c106] : memref<8x768xf32, #tpu.memory_space<vmem>>, vector<8x256xf32>
    %c1_143 = arith.constant 1 : index
    %c0_144 = arith.constant 0 : index
    %c0_145 = arith.constant 0 : index
    %244 = vector.load %arg4[%c1_143, %c0_144, %c0_145] : memref<49x8x1xf32, #tpu.memory_space<vmem>>, vector<1x8x1xf32>
    %245 = vector.shape_cast %244 : vector<1x8x1xf32> to vector<8x1xf32>
    %246 = vector.broadcast %245 : vector<8x1xf32> to vector<8x256xf32>
    %247 = arith.mulf %243, %246 : vector<8x256xf32>
    %248 = arith.addf %242, %247 : vector<8x256xf32>
    %c0_146 = arith.constant 0 : index
    %c154 = arith.constant 154 : index
    %249 = vector.load %arg10[%c0_146, %c154] : memref<8x768xf32, #tpu.memory_space<vmem>>, vector<8x256xf32>
    %c8_147 = arith.constant 8 : index
    %c0_148 = arith.constant 0 : index
    %c0_149 = arith.constant 0 : index
    %250 = vector.load %arg4[%c8_147, %c0_148, %c0_149] : memref<49x8x1xf32, #tpu.memory_space<vmem>>, vector<1x8x1xf32>
    %251 = vector.shape_cast %250 : vector<1x8x1xf32> to vector<8x1xf32>
    %252 = vector.broadcast %251 : vector<8x1xf32> to vector<8x256xf32>
    %253 = arith.mulf %249, %252 : vector<8x256xf32>
    %254 = arith.addf %248, %253 : vector<8x256xf32>
    %c0_150 = arith.constant 0 : index
    %c202 = arith.constant 202 : index
    %255 = vector.load %arg10[%c0_150, %c202] : memref<8x768xf32, #tpu.memory_space<vmem>>, vector<8x256xf32>
    %c15_151 = arith.constant 15 : index
    %c0_152 = arith.constant 0 : index
    %c0_153 = arith.constant 0 : index
    %256 = vector.load %arg4[%c15_151, %c0_152, %c0_153] : memref<49x8x1xf32, #tpu.memory_space<vmem>>, vector<1x8x1xf32>
    %257 = vector.shape_cast %256 : vector<1x8x1xf32> to vector<8x1xf32>
    %258 = vector.broadcast %257 : vector<8x1xf32> to vector<8x256xf32>
    %259 = arith.mulf %255, %258 : vector<8x256xf32>
    %260 = arith.addf %254, %259 : vector<8x256xf32>
    %c0_154 = arith.constant 0 : index
    %c250 = arith.constant 250 : index
    %261 = vector.load %arg10[%c0_154, %c250] : memref<8x768xf32, #tpu.memory_space<vmem>>, vector<8x256xf32>
    %c22_155 = arith.constant 22 : index
    %c0_156 = arith.constant 0 : index
    %c0_157 = arith.constant 0 : index
    %262 = vector.load %arg4[%c22_155, %c0_156, %c0_157] : memref<49x8x1xf32, #tpu.memory_space<vmem>>, vector<1x8x1xf32>
    %263 = vector.shape_cast %262 : vector<1x8x1xf32> to vector<8x1xf32>
    %264 = vector.broadcast %263 : vector<8x1xf32> to vector<8x256xf32>
    %265 = arith.mulf %261, %264 : vector<8x256xf32>
    %266 = arith.addf %260, %265 : vector<8x256xf32>
    %c0_158 = arith.constant 0 : index
    %c298 = arith.constant 298 : index
    %267 = vector.load %arg10[%c0_158, %c298] : memref<8x768xf32, #tpu.memory_space<vmem>>, vector<8x256xf32>
    %c29 = arith.constant 29 : index
    %c0_159 = arith.constant 0 : index
    %c0_160 = arith.constant 0 : index
    %268 = vector.load %arg4[%c29, %c0_159, %c0_160] : memref<49x8x1xf32, #tpu.memory_space<vmem>>, vector<1x8x1xf32>
    %269 = vector.shape_cast %268 : vector<1x8x1xf32> to vector<8x1xf32>
    %270 = vector.broadcast %269 : vector<8x1xf32> to vector<8x256xf32>
    %271 = arith.mulf %267, %270 : vector<8x256xf32>
    %272 = arith.addf %266, %271 : vector<8x256xf32>
    %c0_161 = arith.constant 0 : index
    %c346 = arith.constant 346 : index
    %273 = vector.load %arg10[%c0_161, %c346] : memref<8x768xf32, #tpu.memory_space<vmem>>, vector<8x256xf32>
    %c36 = arith.constant 36 : index
    %c0_162 = arith.constant 0 : index
    %c0_163 = arith.constant 0 : index
    %274 = vector.load %arg4[%c36, %c0_162, %c0_163] : memref<49x8x1xf32, #tpu.memory_space<vmem>>, vector<1x8x1xf32>
    %275 = vector.shape_cast %274 : vector<1x8x1xf32> to vector<8x1xf32>
    %276 = vector.broadcast %275 : vector<8x1xf32> to vector<8x256xf32>
    %277 = arith.mulf %273, %276 : vector<8x256xf32>
    %278 = arith.addf %272, %277 : vector<8x256xf32>
    %c0_164 = arith.constant 0 : index
    %c394 = arith.constant 394 : index
    %279 = vector.load %arg10[%c0_164, %c394] : memref<8x768xf32, #tpu.memory_space<vmem>>, vector<8x256xf32>
    %c43 = arith.constant 43 : index
    %c0_165 = arith.constant 0 : index
    %c0_166 = arith.constant 0 : index
    %280 = vector.load %arg4[%c43, %c0_165, %c0_166] : memref<49x8x1xf32, #tpu.memory_space<vmem>>, vector<1x8x1xf32>
    %281 = vector.shape_cast %280 : vector<1x8x1xf32> to vector<8x1xf32>
    %282 = vector.broadcast %281 : vector<8x1xf32> to vector<8x256xf32>
    %283 = arith.mulf %279, %282 : vector<8x256xf32>
    %284 = arith.addf %278, %283 : vector<8x256xf32>
    %c1_167 = arith.constant 1 : index
    %c0_168 = arith.constant 0 : index
    %c0_169 = arith.constant 0 : index
    %285 = vector.load %arg5[%c1_167, %c0_168, %c0_169] : memref<7x1x256xf32, #tpu.memory_space<vmem>>, vector<1x1x256xf32>
    %286 = vector.shape_cast %285 : vector<1x1x256xf32> to vector<1x256xf32>
    %287 = vector.broadcast %286 : vector<1x256xf32> to vector<8x256xf32>
    %288 = arith.mulf %284, %287 : vector<8x256xf32>
    %289 = arith.addf %241, %288 : vector<8x256xf32>
    %cst_170 = arith.constant 0.000000e+00 : f32
    %290 = vector.broadcast %cst_170 : f32 to vector<8x256xf32>
    %c0_171 = arith.constant 0 : index
    %c109 = arith.constant 109 : index
    %291 = vector.load %arg10[%c0_171, %c109] : memref<8x768xf32, #tpu.memory_space<vmem>>, vector<8x256xf32>
    %c2_172 = arith.constant 2 : index
    %c0_173 = arith.constant 0 : index
    %c0_174 = arith.constant 0 : index
    %292 = vector.load %arg4[%c2_172, %c0_173, %c0_174] : memref<49x8x1xf32, #tpu.memory_space<vmem>>, vector<1x8x1xf32>
    %293 = vector.shape_cast %292 : vector<1x8x1xf32> to vector<8x1xf32>
    %294 = vector.broadcast %293 : vector<8x1xf32> to vector<8x256xf32>
    %295 = arith.mulf %291, %294 : vector<8x256xf32>
    %296 = arith.addf %290, %295 : vector<8x256xf32>
    %c0_175 = arith.constant 0 : index
    %c157 = arith.constant 157 : index
    %297 = vector.load %arg10[%c0_175, %c157] : memref<8x768xf32, #tpu.memory_space<vmem>>, vector<8x256xf32>
    %c9_176 = arith.constant 9 : index
    %c0_177 = arith.constant 0 : index
    %c0_178 = arith.constant 0 : index
    %298 = vector.load %arg4[%c9_176, %c0_177, %c0_178] : memref<49x8x1xf32, #tpu.memory_space<vmem>>, vector<1x8x1xf32>
    %299 = vector.shape_cast %298 : vector<1x8x1xf32> to vector<8x1xf32>
    %300 = vector.broadcast %299 : vector<8x1xf32> to vector<8x256xf32>
    %301 = arith.mulf %297, %300 : vector<8x256xf32>
    %302 = arith.addf %296, %301 : vector<8x256xf32>
    %c0_179 = arith.constant 0 : index
    %c205 = arith.constant 205 : index
    %303 = vector.load %arg10[%c0_179, %c205] : memref<8x768xf32, #tpu.memory_space<vmem>>, vector<8x256xf32>
    %c16_180 = arith.constant 16 : index
    %c0_181 = arith.constant 0 : index
    %c0_182 = arith.constant 0 : index
    %304 = vector.load %arg4[%c16_180, %c0_181, %c0_182] : memref<49x8x1xf32, #tpu.memory_space<vmem>>, vector<1x8x1xf32>
    %305 = vector.shape_cast %304 : vector<1x8x1xf32> to vector<8x1xf32>
    %306 = vector.broadcast %305 : vector<8x1xf32> to vector<8x256xf32>
    %307 = arith.mulf %303, %306 : vector<8x256xf32>
    %308 = arith.addf %302, %307 : vector<8x256xf32>
    %c0_183 = arith.constant 0 : index
    %c253 = arith.constant 253 : index
    %309 = vector.load %arg10[%c0_183, %c253] : memref<8x768xf32, #tpu.memory_space<vmem>>, vector<8x256xf32>
    %c23_184 = arith.constant 23 : index
    %c0_185 = arith.constant 0 : index
    %c0_186 = arith.constant 0 : index
    %310 = vector.load %arg4[%c23_184, %c0_185, %c0_186] : memref<49x8x1xf32, #tpu.memory_space<vmem>>, vector<1x8x1xf32>
    %311 = vector.shape_cast %310 : vector<1x8x1xf32> to vector<8x1xf32>
    %312 = vector.broadcast %311 : vector<8x1xf32> to vector<8x256xf32>
    %313 = arith.mulf %309, %312 : vector<8x256xf32>
    %314 = arith.addf %308, %313 : vector<8x256xf32>
    %c0_187 = arith.constant 0 : index
    %c301 = arith.constant 301 : index
    %315 = vector.load %arg10[%c0_187, %c301] : memref<8x768xf32, #tpu.memory_space<vmem>>, vector<8x256xf32>
    %c30 = arith.constant 30 : index
    %c0_188 = arith.constant 0 : index
    %c0_189 = arith.constant 0 : index
    %316 = vector.load %arg4[%c30, %c0_188, %c0_189] : memref<49x8x1xf32, #tpu.memory_space<vmem>>, vector<1x8x1xf32>
    %317 = vector.shape_cast %316 : vector<1x8x1xf32> to vector<8x1xf32>
    %318 = vector.broadcast %317 : vector<8x1xf32> to vector<8x256xf32>
    %319 = arith.mulf %315, %318 : vector<8x256xf32>
    %320 = arith.addf %314, %319 : vector<8x256xf32>
    %c0_190 = arith.constant 0 : index
    %c349 = arith.constant 349 : index
    %321 = vector.load %arg10[%c0_190, %c349] : memref<8x768xf32, #tpu.memory_space<vmem>>, vector<8x256xf32>
    %c37 = arith.constant 37 : index
    %c0_191 = arith.constant 0 : index
    %c0_192 = arith.constant 0 : index
    %322 = vector.load %arg4[%c37, %c0_191, %c0_192] : memref<49x8x1xf32, #tpu.memory_space<vmem>>, vector<1x8x1xf32>
    %323 = vector.shape_cast %322 : vector<1x8x1xf32> to vector<8x1xf32>
    %324 = vector.broadcast %323 : vector<8x1xf32> to vector<8x256xf32>
    %325 = arith.mulf %321, %324 : vector<8x256xf32>
    %326 = arith.addf %320, %325 : vector<8x256xf32>
    %c0_193 = arith.constant 0 : index
    %c397 = arith.constant 397 : index
    %327 = vector.load %arg10[%c0_193, %c397] : memref<8x768xf32, #tpu.memory_space<vmem>>, vector<8x256xf32>
    %c44 = arith.constant 44 : index
    %c0_194 = arith.constant 0 : index
    %c0_195 = arith.constant 0 : index
    %328 = vector.load %arg4[%c44, %c0_194, %c0_195] : memref<49x8x1xf32, #tpu.memory_space<vmem>>, vector<1x8x1xf32>
    %329 = vector.shape_cast %328 : vector<1x8x1xf32> to vector<8x1xf32>
    %330 = vector.broadcast %329 : vector<8x1xf32> to vector<8x256xf32>
    %331 = arith.mulf %327, %330 : vector<8x256xf32>
    %332 = arith.addf %326, %331 : vector<8x256xf32>
    %c2_196 = arith.constant 2 : index
    %c0_197 = arith.constant 0 : index
    %c0_198 = arith.constant 0 : index
    %333 = vector.load %arg5[%c2_196, %c0_197, %c0_198] : memref<7x1x256xf32, #tpu.memory_space<vmem>>, vector<1x1x256xf32>
    %334 = vector.shape_cast %333 : vector<1x1x256xf32> to vector<1x256xf32>
    %335 = vector.broadcast %334 : vector<1x256xf32> to vector<8x256xf32>
    %336 = arith.mulf %332, %335 : vector<8x256xf32>
    %337 = arith.addf %289, %336 : vector<8x256xf32>
    %cst_199 = arith.constant 0.000000e+00 : f32
    %338 = vector.broadcast %cst_199 : f32 to vector<8x256xf32>
    %c0_200 = arith.constant 0 : index
    %c112_201 = arith.constant 112 : index
    %339 = vector.load %arg10[%c0_200, %c112_201] : memref<8x768xf32, #tpu.memory_space<vmem>>, vector<8x256xf32>
    %c3_202 = arith.constant 3 : index
    %c0_203 = arith.constant 0 : index
    %c0_204 = arith.constant 0 : index
    %340 = vector.load %arg4[%c3_202, %c0_203, %c0_204] : memref<49x8x1xf32, #tpu.memory_space<vmem>>, vector<1x8x1xf32>
    %341 = vector.shape_cast %340 : vector<1x8x1xf32> to vector<8x1xf32>
    %342 = vector.broadcast %341 : vector<8x1xf32> to vector<8x256xf32>
    %343 = arith.mulf %339, %342 : vector<8x256xf32>
    %344 = arith.addf %338, %343 : vector<8x256xf32>
    %c0_205 = arith.constant 0 : index
    %c160_206 = arith.constant 160 : index
    %345 = vector.load %arg10[%c0_205, %c160_206] : memref<8x768xf32, #tpu.memory_space<vmem>>, vector<8x256xf32>
    %c10_207 = arith.constant 10 : index
    %c0_208 = arith.constant 0 : index
    %c0_209 = arith.constant 0 : index
    %346 = vector.load %arg4[%c10_207, %c0_208, %c0_209] : memref<49x8x1xf32, #tpu.memory_space<vmem>>, vector<1x8x1xf32>
    %347 = vector.shape_cast %346 : vector<1x8x1xf32> to vector<8x1xf32>
    %348 = vector.broadcast %347 : vector<8x1xf32> to vector<8x256xf32>
    %349 = arith.mulf %345, %348 : vector<8x256xf32>
    %350 = arith.addf %344, %349 : vector<8x256xf32>
    %c0_210 = arith.constant 0 : index
    %c208 = arith.constant 208 : index
    %351 = vector.load %arg10[%c0_210, %c208] : memref<8x768xf32, #tpu.memory_space<vmem>>, vector<8x256xf32>
    %c17_211 = arith.constant 17 : index
    %c0_212 = arith.constant 0 : index
    %c0_213 = arith.constant 0 : index
    %352 = vector.load %arg4[%c17_211, %c0_212, %c0_213] : memref<49x8x1xf32, #tpu.memory_space<vmem>>, vector<1x8x1xf32>
    %353 = vector.shape_cast %352 : vector<1x8x1xf32> to vector<8x1xf32>
    %354 = vector.broadcast %353 : vector<8x1xf32> to vector<8x256xf32>
    %355 = arith.mulf %351, %354 : vector<8x256xf32>
    %356 = arith.addf %350, %355 : vector<8x256xf32>
    %c0_214 = arith.constant 0 : index
    %c256_215 = arith.constant 256 : index
    %357 = vector.load %arg10[%c0_214, %c256_215] : memref<8x768xf32, #tpu.memory_space<vmem>>, vector<8x256xf32>
    %c24_216 = arith.constant 24 : index
    %c0_217 = arith.constant 0 : index
    %c0_218 = arith.constant 0 : index
    %358 = vector.load %arg4[%c24_216, %c0_217, %c0_218] : memref<49x8x1xf32, #tpu.memory_space<vmem>>, vector<1x8x1xf32>
    %359 = vector.shape_cast %358 : vector<1x8x1xf32> to vector<8x1xf32>
    %360 = vector.broadcast %359 : vector<8x1xf32> to vector<8x256xf32>
    %361 = arith.mulf %357, %360 : vector<8x256xf32>
    %362 = arith.addf %356, %361 : vector<8x256xf32>
    %c0_219 = arith.constant 0 : index
    %c304 = arith.constant 304 : index
    %363 = vector.load %arg10[%c0_219, %c304] : memref<8x768xf32, #tpu.memory_space<vmem>>, vector<8x256xf32>
    %c31 = arith.constant 31 : index
    %c0_220 = arith.constant 0 : index
    %c0_221 = arith.constant 0 : index
    %364 = vector.load %arg4[%c31, %c0_220, %c0_221] : memref<49x8x1xf32, #tpu.memory_space<vmem>>, vector<1x8x1xf32>
    %365 = vector.shape_cast %364 : vector<1x8x1xf32> to vector<8x1xf32>
    %366 = vector.broadcast %365 : vector<8x1xf32> to vector<8x256xf32>
    %367 = arith.mulf %363, %366 : vector<8x256xf32>
    %368 = arith.addf %362, %367 : vector<8x256xf32>
    %c0_222 = arith.constant 0 : index
    %c352 = arith.constant 352 : index
    %369 = vector.load %arg10[%c0_222, %c352] : memref<8x768xf32, #tpu.memory_space<vmem>>, vector<8x256xf32>
    %c38 = arith.constant 38 : index
    %c0_223 = arith.constant 0 : index
    %c0_224 = arith.constant 0 : index
    %370 = vector.load %arg4[%c38, %c0_223, %c0_224] : memref<49x8x1xf32, #tpu.memory_space<vmem>>, vector<1x8x1xf32>
    %371 = vector.shape_cast %370 : vector<1x8x1xf32> to vector<8x1xf32>
    %372 = vector.broadcast %371 : vector<8x1xf32> to vector<8x256xf32>
    %373 = arith.mulf %369, %372 : vector<8x256xf32>
    %374 = arith.addf %368, %373 : vector<8x256xf32>
    %c0_225 = arith.constant 0 : index
    %c400 = arith.constant 400 : index
    %375 = vector.load %arg10[%c0_225, %c400] : memref<8x768xf32, #tpu.memory_space<vmem>>, vector<8x256xf32>
    %c45 = arith.constant 45 : index
    %c0_226 = arith.constant 0 : index
    %c0_227 = arith.constant 0 : index
    %376 = vector.load %arg4[%c45, %c0_226, %c0_227] : memref<49x8x1xf32, #tpu.memory_space<vmem>>, vector<1x8x1xf32>
    %377 = vector.shape_cast %376 : vector<1x8x1xf32> to vector<8x1xf32>
    %378 = vector.broadcast %377 : vector<8x1xf32> to vector<8x256xf32>
    %379 = arith.mulf %375, %378 : vector<8x256xf32>
    %380 = arith.addf %374, %379 : vector<8x256xf32>
    %c3_228 = arith.constant 3 : index
    %c0_229 = arith.constant 0 : index
    %c0_230 = arith.constant 0 : index
    %381 = vector.load %arg5[%c3_228, %c0_229, %c0_230] : memref<7x1x256xf32, #tpu.memory_space<vmem>>, vector<1x1x256xf32>
    %382 = vector.shape_cast %381 : vector<1x1x256xf32> to vector<1x256xf32>
    %383 = vector.broadcast %382 : vector<1x256xf32> to vector<8x256xf32>
    %384 = arith.mulf %380, %383 : vector<8x256xf32>
    %385 = arith.addf %337, %384 : vector<8x256xf32>
    %cst_231 = arith.constant 0.000000e+00 : f32
    %386 = vector.broadcast %cst_231 : f32 to vector<8x256xf32>
    %c0_232 = arith.constant 0 : index
    %c115 = arith.constant 115 : index
    %387 = vector.load %arg10[%c0_232, %c115] : memref<8x768xf32, #tpu.memory_space<vmem>>, vector<8x256xf32>
    %c4_233 = arith.constant 4 : index
    %c0_234 = arith.constant 0 : index
    %c0_235 = arith.constant 0 : index
    %388 = vector.load %arg4[%c4_233, %c0_234, %c0_235] : memref<49x8x1xf32, #tpu.memory_space<vmem>>, vector<1x8x1xf32>
    %389 = vector.shape_cast %388 : vector<1x8x1xf32> to vector<8x1xf32>
    %390 = vector.broadcast %389 : vector<8x1xf32> to vector<8x256xf32>
    %391 = arith.mulf %387, %390 : vector<8x256xf32>
    %392 = arith.addf %386, %391 : vector<8x256xf32>
    %c0_236 = arith.constant 0 : index
    %c163 = arith.constant 163 : index
    %393 = vector.load %arg10[%c0_236, %c163] : memref<8x768xf32, #tpu.memory_space<vmem>>, vector<8x256xf32>
    %c11_237 = arith.constant 11 : index
    %c0_238 = arith.constant 0 : index
    %c0_239 = arith.constant 0 : index
    %394 = vector.load %arg4[%c11_237, %c0_238, %c0_239] : memref<49x8x1xf32, #tpu.memory_space<vmem>>, vector<1x8x1xf32>
    %395 = vector.shape_cast %394 : vector<1x8x1xf32> to vector<8x1xf32>
    %396 = vector.broadcast %395 : vector<8x1xf32> to vector<8x256xf32>
    %397 = arith.mulf %393, %396 : vector<8x256xf32>
    %398 = arith.addf %392, %397 : vector<8x256xf32>
    %c0_240 = arith.constant 0 : index
    %c211 = arith.constant 211 : index
    %399 = vector.load %arg10[%c0_240, %c211] : memref<8x768xf32, #tpu.memory_space<vmem>>, vector<8x256xf32>
    %c18_241 = arith.constant 18 : index
    %c0_242 = arith.constant 0 : index
    %c0_243 = arith.constant 0 : index
    %400 = vector.load %arg4[%c18_241, %c0_242, %c0_243] : memref<49x8x1xf32, #tpu.memory_space<vmem>>, vector<1x8x1xf32>
    %401 = vector.shape_cast %400 : vector<1x8x1xf32> to vector<8x1xf32>
    %402 = vector.broadcast %401 : vector<8x1xf32> to vector<8x256xf32>
    %403 = arith.mulf %399, %402 : vector<8x256xf32>
    %404 = arith.addf %398, %403 : vector<8x256xf32>
    %c0_244 = arith.constant 0 : index
    %c259 = arith.constant 259 : index
    %405 = vector.load %arg10[%c0_244, %c259] : memref<8x768xf32, #tpu.memory_space<vmem>>, vector<8x256xf32>
    %c25 = arith.constant 25 : index
    %c0_245 = arith.constant 0 : index
    %c0_246 = arith.constant 0 : index
    %406 = vector.load %arg4[%c25, %c0_245, %c0_246] : memref<49x8x1xf32, #tpu.memory_space<vmem>>, vector<1x8x1xf32>
    %407 = vector.shape_cast %406 : vector<1x8x1xf32> to vector<8x1xf32>
    %408 = vector.broadcast %407 : vector<8x1xf32> to vector<8x256xf32>
    %409 = arith.mulf %405, %408 : vector<8x256xf32>
    %410 = arith.addf %404, %409 : vector<8x256xf32>
    %c0_247 = arith.constant 0 : index
    %c307 = arith.constant 307 : index
    %411 = vector.load %arg10[%c0_247, %c307] : memref<8x768xf32, #tpu.memory_space<vmem>>, vector<8x256xf32>
    %c32 = arith.constant 32 : index
    %c0_248 = arith.constant 0 : index
    %c0_249 = arith.constant 0 : index
    %412 = vector.load %arg4[%c32, %c0_248, %c0_249] : memref<49x8x1xf32, #tpu.memory_space<vmem>>, vector<1x8x1xf32>
    %413 = vector.shape_cast %412 : vector<1x8x1xf32> to vector<8x1xf32>
    %414 = vector.broadcast %413 : vector<8x1xf32> to vector<8x256xf32>
    %415 = arith.mulf %411, %414 : vector<8x256xf32>
    %416 = arith.addf %410, %415 : vector<8x256xf32>
    %c0_250 = arith.constant 0 : index
    %c355 = arith.constant 355 : index
    %417 = vector.load %arg10[%c0_250, %c355] : memref<8x768xf32, #tpu.memory_space<vmem>>, vector<8x256xf32>
    %c39 = arith.constant 39 : index
    %c0_251 = arith.constant 0 : index
    %c0_252 = arith.constant 0 : index
    %418 = vector.load %arg4[%c39, %c0_251, %c0_252] : memref<49x8x1xf32, #tpu.memory_space<vmem>>, vector<1x8x1xf32>
    %419 = vector.shape_cast %418 : vector<1x8x1xf32> to vector<8x1xf32>
    %420 = vector.broadcast %419 : vector<8x1xf32> to vector<8x256xf32>
    %421 = arith.mulf %417, %420 : vector<8x256xf32>
    %422 = arith.addf %416, %421 : vector<8x256xf32>
    %c0_253 = arith.constant 0 : index
    %c403 = arith.constant 403 : index
    %423 = vector.load %arg10[%c0_253, %c403] : memref<8x768xf32, #tpu.memory_space<vmem>>, vector<8x256xf32>
    %c46 = arith.constant 46 : index
    %c0_254 = arith.constant 0 : index
    %c0_255 = arith.constant 0 : index
    %424 = vector.load %arg4[%c46, %c0_254, %c0_255] : memref<49x8x1xf32, #tpu.memory_space<vmem>>, vector<1x8x1xf32>
    %425 = vector.shape_cast %424 : vector<1x8x1xf32> to vector<8x1xf32>
    %426 = vector.broadcast %425 : vector<8x1xf32> to vector<8x256xf32>
    %427 = arith.mulf %423, %426 : vector<8x256xf32>
    %428 = arith.addf %422, %427 : vector<8x256xf32>
    %c4_256 = arith.constant 4 : index
    %c0_257 = arith.constant 0 : index
    %c0_258 = arith.constant 0 : index
    %429 = vector.load %arg5[%c4_256, %c0_257, %c0_258] : memref<7x1x256xf32, #tpu.memory_space<vmem>>, vector<1x1x256xf32>
    %430 = vector.shape_cast %429 : vector<1x1x256xf32> to vector<1x256xf32>
    %431 = vector.broadcast %430 : vector<1x256xf32> to vector<8x256xf32>
    %432 = arith.mulf %428, %431 : vector<8x256xf32>
    %433 = arith.addf %385, %432 : vector<8x256xf32>
    %cst_259 = arith.constant 0.000000e+00 : f32
    %434 = vector.broadcast %cst_259 : f32 to vector<8x256xf32>
    %c0_260 = arith.constant 0 : index
    %c118 = arith.constant 118 : index
    %435 = vector.load %arg10[%c0_260, %c118] : memref<8x768xf32, #tpu.memory_space<vmem>>, vector<8x256xf32>
    %c5_261 = arith.constant 5 : index
    %c0_262 = arith.constant 0 : index
    %c0_263 = arith.constant 0 : index
    %436 = vector.load %arg4[%c5_261, %c0_262, %c0_263] : memref<49x8x1xf32, #tpu.memory_space<vmem>>, vector<1x8x1xf32>
    %437 = vector.shape_cast %436 : vector<1x8x1xf32> to vector<8x1xf32>
    %438 = vector.broadcast %437 : vector<8x1xf32> to vector<8x256xf32>
    %439 = arith.mulf %435, %438 : vector<8x256xf32>
    %440 = arith.addf %434, %439 : vector<8x256xf32>
    %c0_264 = arith.constant 0 : index
    %c166 = arith.constant 166 : index
    %441 = vector.load %arg10[%c0_264, %c166] : memref<8x768xf32, #tpu.memory_space<vmem>>, vector<8x256xf32>
    %c12_265 = arith.constant 12 : index
    %c0_266 = arith.constant 0 : index
    %c0_267 = arith.constant 0 : index
    %442 = vector.load %arg4[%c12_265, %c0_266, %c0_267] : memref<49x8x1xf32, #tpu.memory_space<vmem>>, vector<1x8x1xf32>
    %443 = vector.shape_cast %442 : vector<1x8x1xf32> to vector<8x1xf32>
    %444 = vector.broadcast %443 : vector<8x1xf32> to vector<8x256xf32>
    %445 = arith.mulf %441, %444 : vector<8x256xf32>
    %446 = arith.addf %440, %445 : vector<8x256xf32>
    %c0_268 = arith.constant 0 : index
    %c214 = arith.constant 214 : index
    %447 = vector.load %arg10[%c0_268, %c214] : memref<8x768xf32, #tpu.memory_space<vmem>>, vector<8x256xf32>
    %c19_269 = arith.constant 19 : index
    %c0_270 = arith.constant 0 : index
    %c0_271 = arith.constant 0 : index
    %448 = vector.load %arg4[%c19_269, %c0_270, %c0_271] : memref<49x8x1xf32, #tpu.memory_space<vmem>>, vector<1x8x1xf32>
    %449 = vector.shape_cast %448 : vector<1x8x1xf32> to vector<8x1xf32>
    %450 = vector.broadcast %449 : vector<8x1xf32> to vector<8x256xf32>
    %451 = arith.mulf %447, %450 : vector<8x256xf32>
    %452 = arith.addf %446, %451 : vector<8x256xf32>
    %c0_272 = arith.constant 0 : index
    %c262 = arith.constant 262 : index
    %453 = vector.load %arg10[%c0_272, %c262] : memref<8x768xf32, #tpu.memory_space<vmem>>, vector<8x256xf32>
    %c26 = arith.constant 26 : index
    %c0_273 = arith.constant 0 : index
    %c0_274 = arith.constant 0 : index
    %454 = vector.load %arg4[%c26, %c0_273, %c0_274] : memref<49x8x1xf32, #tpu.memory_space<vmem>>, vector<1x8x1xf32>
    %455 = vector.shape_cast %454 : vector<1x8x1xf32> to vector<8x1xf32>
    %456 = vector.broadcast %455 : vector<8x1xf32> to vector<8x256xf32>
    %457 = arith.mulf %453, %456 : vector<8x256xf32>
    %458 = arith.addf %452, %457 : vector<8x256xf32>
    %c0_275 = arith.constant 0 : index
    %c310 = arith.constant 310 : index
    %459 = vector.load %arg10[%c0_275, %c310] : memref<8x768xf32, #tpu.memory_space<vmem>>, vector<8x256xf32>
    %c33 = arith.constant 33 : index
    %c0_276 = arith.constant 0 : index
    %c0_277 = arith.constant 0 : index
    %460 = vector.load %arg4[%c33, %c0_276, %c0_277] : memref<49x8x1xf32, #tpu.memory_space<vmem>>, vector<1x8x1xf32>
    %461 = vector.shape_cast %460 : vector<1x8x1xf32> to vector<8x1xf32>
    %462 = vector.broadcast %461 : vector<8x1xf32> to vector<8x256xf32>
    %463 = arith.mulf %459, %462 : vector<8x256xf32>
    %464 = arith.addf %458, %463 : vector<8x256xf32>
    %c0_278 = arith.constant 0 : index
    %c358 = arith.constant 358 : index
    %465 = vector.load %arg10[%c0_278, %c358] : memref<8x768xf32, #tpu.memory_space<vmem>>, vector<8x256xf32>
    %c40 = arith.constant 40 : index
    %c0_279 = arith.constant 0 : index
    %c0_280 = arith.constant 0 : index
    %466 = vector.load %arg4[%c40, %c0_279, %c0_280] : memref<49x8x1xf32, #tpu.memory_space<vmem>>, vector<1x8x1xf32>
    %467 = vector.shape_cast %466 : vector<1x8x1xf32> to vector<8x1xf32>
    %468 = vector.broadcast %467 : vector<8x1xf32> to vector<8x256xf32>
    %469 = arith.mulf %465, %468 : vector<8x256xf32>
    %470 = arith.addf %464, %469 : vector<8x256xf32>
    %c0_281 = arith.constant 0 : index
    %c406 = arith.constant 406 : index
    %471 = vector.load %arg10[%c0_281, %c406] : memref<8x768xf32, #tpu.memory_space<vmem>>, vector<8x256xf32>
    %c47 = arith.constant 47 : index
    %c0_282 = arith.constant 0 : index
    %c0_283 = arith.constant 0 : index
    %472 = vector.load %arg4[%c47, %c0_282, %c0_283] : memref<49x8x1xf32, #tpu.memory_space<vmem>>, vector<1x8x1xf32>
    %473 = vector.shape_cast %472 : vector<1x8x1xf32> to vector<8x1xf32>
    %474 = vector.broadcast %473 : vector<8x1xf32> to vector<8x256xf32>
    %475 = arith.mulf %471, %474 : vector<8x256xf32>
    %476 = arith.addf %470, %475 : vector<8x256xf32>
    %c5_284 = arith.constant 5 : index
    %c0_285 = arith.constant 0 : index
    %c0_286 = arith.constant 0 : index
    %477 = vector.load %arg5[%c5_284, %c0_285, %c0_286] : memref<7x1x256xf32, #tpu.memory_space<vmem>>, vector<1x1x256xf32>
    %478 = vector.shape_cast %477 : vector<1x1x256xf32> to vector<1x256xf32>
    %479 = vector.broadcast %478 : vector<1x256xf32> to vector<8x256xf32>
    %480 = arith.mulf %476, %479 : vector<8x256xf32>
    %481 = arith.addf %433, %480 : vector<8x256xf32>
    %cst_287 = arith.constant 0.000000e+00 : f32
    %482 = vector.broadcast %cst_287 : f32 to vector<8x256xf32>
    %c0_288 = arith.constant 0 : index
    %c121 = arith.constant 121 : index
    %483 = vector.load %arg10[%c0_288, %c121] : memref<8x768xf32, #tpu.memory_space<vmem>>, vector<8x256xf32>
    %c6_289 = arith.constant 6 : index
    %c0_290 = arith.constant 0 : index
    %c0_291 = arith.constant 0 : index
    %484 = vector.load %arg4[%c6_289, %c0_290, %c0_291] : memref<49x8x1xf32, #tpu.memory_space<vmem>>, vector<1x8x1xf32>
    %485 = vector.shape_cast %484 : vector<1x8x1xf32> to vector<8x1xf32>
    %486 = vector.broadcast %485 : vector<8x1xf32> to vector<8x256xf32>
    %487 = arith.mulf %483, %486 : vector<8x256xf32>
    %488 = arith.addf %482, %487 : vector<8x256xf32>
    %c0_292 = arith.constant 0 : index
    %c169 = arith.constant 169 : index
    %489 = vector.load %arg10[%c0_292, %c169] : memref<8x768xf32, #tpu.memory_space<vmem>>, vector<8x256xf32>
    %c13_293 = arith.constant 13 : index
    %c0_294 = arith.constant 0 : index
    %c0_295 = arith.constant 0 : index
    %490 = vector.load %arg4[%c13_293, %c0_294, %c0_295] : memref<49x8x1xf32, #tpu.memory_space<vmem>>, vector<1x8x1xf32>
    %491 = vector.shape_cast %490 : vector<1x8x1xf32> to vector<8x1xf32>
    %492 = vector.broadcast %491 : vector<8x1xf32> to vector<8x256xf32>
    %493 = arith.mulf %489, %492 : vector<8x256xf32>
    %494 = arith.addf %488, %493 : vector<8x256xf32>
    %c0_296 = arith.constant 0 : index
    %c217 = arith.constant 217 : index
    %495 = vector.load %arg10[%c0_296, %c217] : memref<8x768xf32, #tpu.memory_space<vmem>>, vector<8x256xf32>
    %c20_297 = arith.constant 20 : index
    %c0_298 = arith.constant 0 : index
    %c0_299 = arith.constant 0 : index
    %496 = vector.load %arg4[%c20_297, %c0_298, %c0_299] : memref<49x8x1xf32, #tpu.memory_space<vmem>>, vector<1x8x1xf32>
    %497 = vector.shape_cast %496 : vector<1x8x1xf32> to vector<8x1xf32>
    %498 = vector.broadcast %497 : vector<8x1xf32> to vector<8x256xf32>
    %499 = arith.mulf %495, %498 : vector<8x256xf32>
    %500 = arith.addf %494, %499 : vector<8x256xf32>
    %c0_300 = arith.constant 0 : index
    %c265 = arith.constant 265 : index
    %501 = vector.load %arg10[%c0_300, %c265] : memref<8x768xf32, #tpu.memory_space<vmem>>, vector<8x256xf32>
    %c27 = arith.constant 27 : index
    %c0_301 = arith.constant 0 : index
    %c0_302 = arith.constant 0 : index
    %502 = vector.load %arg4[%c27, %c0_301, %c0_302] : memref<49x8x1xf32, #tpu.memory_space<vmem>>, vector<1x8x1xf32>
    %503 = vector.shape_cast %502 : vector<1x8x1xf32> to vector<8x1xf32>
    %504 = vector.broadcast %503 : vector<8x1xf32> to vector<8x256xf32>
    %505 = arith.mulf %501, %504 : vector<8x256xf32>
    %506 = arith.addf %500, %505 : vector<8x256xf32>
    %c0_303 = arith.constant 0 : index
    %c313 = arith.constant 313 : index
    %507 = vector.load %arg10[%c0_303, %c313] : memref<8x768xf32, #tpu.memory_space<vmem>>, vector<8x256xf32>
    %c34 = arith.constant 34 : index
    %c0_304 = arith.constant 0 : index
    %c0_305 = arith.constant 0 : index
    %508 = vector.load %arg4[%c34, %c0_304, %c0_305] : memref<49x8x1xf32, #tpu.memory_space<vmem>>, vector<1x8x1xf32>
    %509 = vector.shape_cast %508 : vector<1x8x1xf32> to vector<8x1xf32>
    %510 = vector.broadcast %509 : vector<8x1xf32> to vector<8x256xf32>
    %511 = arith.mulf %507, %510 : vector<8x256xf32>
    %512 = arith.addf %506, %511 : vector<8x256xf32>
    %c0_306 = arith.constant 0 : index
    %c361 = arith.constant 361 : index
    %513 = vector.load %arg10[%c0_306, %c361] : memref<8x768xf32, #tpu.memory_space<vmem>>, vector<8x256xf32>
    %c41 = arith.constant 41 : index
    %c0_307 = arith.constant 0 : index
    %c0_308 = arith.constant 0 : index
    %514 = vector.load %arg4[%c41, %c0_307, %c0_308] : memref<49x8x1xf32, #tpu.memory_space<vmem>>, vector<1x8x1xf32>
    %515 = vector.shape_cast %514 : vector<1x8x1xf32> to vector<8x1xf32>
    %516 = vector.broadcast %515 : vector<8x1xf32> to vector<8x256xf32>
    %517 = arith.mulf %513, %516 : vector<8x256xf32>
    %518 = arith.addf %512, %517 : vector<8x256xf32>
    %c0_309 = arith.constant 0 : index
    %c409 = arith.constant 409 : index
    %519 = vector.load %arg10[%c0_309, %c409] : memref<8x768xf32, #tpu.memory_space<vmem>>, vector<8x256xf32>
    %c48 = arith.constant 48 : index
    %c0_310 = arith.constant 0 : index
    %c0_311 = arith.constant 0 : index
    %520 = vector.load %arg4[%c48, %c0_310, %c0_311] : memref<49x8x1xf32, #tpu.memory_space<vmem>>, vector<1x8x1xf32>
    %521 = vector.shape_cast %520 : vector<1x8x1xf32> to vector<8x1xf32>
    %522 = vector.broadcast %521 : vector<8x1xf32> to vector<8x256xf32>
    %523 = arith.mulf %519, %522 : vector<8x256xf32>
    %524 = arith.addf %518, %523 : vector<8x256xf32>
    %c6_312 = arith.constant 6 : index
    %c0_313 = arith.constant 0 : index
    %c0_314 = arith.constant 0 : index
    %525 = vector.load %arg5[%c6_312, %c0_313, %c0_314] : memref<7x1x256xf32, #tpu.memory_space<vmem>>, vector<1x1x256xf32>
    %526 = vector.shape_cast %525 : vector<1x1x256xf32> to vector<1x256xf32>
    %527 = vector.broadcast %526 : vector<1x256xf32> to vector<8x256xf32>
    %528 = arith.mulf %524, %527 : vector<8x256xf32>
    %529 = arith.addf %481, %528 : vector<8x256xf32>
    %cst_315 = arith.constant 0.000000e+00 : f32
    %530 = vector.broadcast %cst_315 : f32 to vector<8x256xf32>
    %c0_316 = arith.constant 0 : index
    %c0_317 = arith.constant 0 : index
    %c0_318 = arith.constant 0 : index
    %531 = vector.load %arg6[%c0_316, %c0_317, %c0_318] : memref<8x8x1xf32, #tpu.memory_space<vmem>>, vector<1x8x1xf32>
    %532 = vector.shape_cast %531 : vector<1x8x1xf32> to vector<8x1xf32>
    %533 = vector.extract_strided_slice %529 {offsets = [0, 0], sizes = [1, 256], strides = [1, 1]} : vector<8x256xf32> to vector<1x256xf32>
    %534 = vector.broadcast %532 : vector<8x1xf32> to vector<8x256xf32>
    %535 = vector.broadcast %533 : vector<1x256xf32> to vector<8x256xf32>
    %536 = arith.mulf %534, %535 : vector<8x256xf32>
    %537 = arith.addf %530, %536 : vector<8x256xf32>
    %c1_319 = arith.constant 1 : index
    %c0_320 = arith.constant 0 : index
    %c0_321 = arith.constant 0 : index
    %538 = vector.load %arg6[%c1_319, %c0_320, %c0_321] : memref<8x8x1xf32, #tpu.memory_space<vmem>>, vector<1x8x1xf32>
    %539 = vector.shape_cast %538 : vector<1x8x1xf32> to vector<8x1xf32>
    %540 = vector.extract_strided_slice %529 {offsets = [1, 0], sizes = [1, 256], strides = [1, 1]} : vector<8x256xf32> to vector<1x256xf32>
    %541 = vector.broadcast %539 : vector<8x1xf32> to vector<8x256xf32>
    %542 = vector.broadcast %540 : vector<1x256xf32> to vector<8x256xf32>
    %543 = arith.mulf %541, %542 : vector<8x256xf32>
    %544 = arith.addf %537, %543 : vector<8x256xf32>
    %c2_322 = arith.constant 2 : index
    %c0_323 = arith.constant 0 : index
    %c0_324 = arith.constant 0 : index
    %545 = vector.load %arg6[%c2_322, %c0_323, %c0_324] : memref<8x8x1xf32, #tpu.memory_space<vmem>>, vector<1x8x1xf32>
    %546 = vector.shape_cast %545 : vector<1x8x1xf32> to vector<8x1xf32>
    %547 = vector.extract_strided_slice %529 {offsets = [2, 0], sizes = [1, 256], strides = [1, 1]} : vector<8x256xf32> to vector<1x256xf32>
    %548 = vector.broadcast %546 : vector<8x1xf32> to vector<8x256xf32>
    %549 = vector.broadcast %547 : vector<1x256xf32> to vector<8x256xf32>
    %550 = arith.mulf %548, %549 : vector<8x256xf32>
    %551 = arith.addf %544, %550 : vector<8x256xf32>
    %c3_325 = arith.constant 3 : index
    %c0_326 = arith.constant 0 : index
    %c0_327 = arith.constant 0 : index
    %552 = vector.load %arg6[%c3_325, %c0_326, %c0_327] : memref<8x8x1xf32, #tpu.memory_space<vmem>>, vector<1x8x1xf32>
    %553 = vector.shape_cast %552 : vector<1x8x1xf32> to vector<8x1xf32>
    %554 = vector.extract_strided_slice %529 {offsets = [3, 0], sizes = [1, 256], strides = [1, 1]} : vector<8x256xf32> to vector<1x256xf32>
    %555 = vector.broadcast %553 : vector<8x1xf32> to vector<8x256xf32>
    %556 = vector.broadcast %554 : vector<1x256xf32> to vector<8x256xf32>
    %557 = arith.mulf %555, %556 : vector<8x256xf32>
    %558 = arith.addf %551, %557 : vector<8x256xf32>
    %c4_328 = arith.constant 4 : index
    %c0_329 = arith.constant 0 : index
    %c0_330 = arith.constant 0 : index
    %559 = vector.load %arg6[%c4_328, %c0_329, %c0_330] : memref<8x8x1xf32, #tpu.memory_space<vmem>>, vector<1x8x1xf32>
    %560 = vector.shape_cast %559 : vector<1x8x1xf32> to vector<8x1xf32>
    %561 = vector.extract_strided_slice %529 {offsets = [4, 0], sizes = [1, 256], strides = [1, 1]} : vector<8x256xf32> to vector<1x256xf32>
    %562 = vector.broadcast %560 : vector<8x1xf32> to vector<8x256xf32>
    %563 = vector.broadcast %561 : vector<1x256xf32> to vector<8x256xf32>
    %564 = arith.mulf %562, %563 : vector<8x256xf32>
    %565 = arith.addf %558, %564 : vector<8x256xf32>
    %c5_331 = arith.constant 5 : index
    %c0_332 = arith.constant 0 : index
    %c0_333 = arith.constant 0 : index
    %566 = vector.load %arg6[%c5_331, %c0_332, %c0_333] : memref<8x8x1xf32, #tpu.memory_space<vmem>>, vector<1x8x1xf32>
    %567 = vector.shape_cast %566 : vector<1x8x1xf32> to vector<8x1xf32>
    %568 = vector.extract_strided_slice %529 {offsets = [5, 0], sizes = [1, 256], strides = [1, 1]} : vector<8x256xf32> to vector<1x256xf32>
    %569 = vector.broadcast %567 : vector<8x1xf32> to vector<8x256xf32>
    %570 = vector.broadcast %568 : vector<1x256xf32> to vector<8x256xf32>
    %571 = arith.mulf %569, %570 : vector<8x256xf32>
    %572 = arith.addf %565, %571 : vector<8x256xf32>
    %c6_334 = arith.constant 6 : index
    %c0_335 = arith.constant 0 : index
    %c0_336 = arith.constant 0 : index
    %573 = vector.load %arg6[%c6_334, %c0_335, %c0_336] : memref<8x8x1xf32, #tpu.memory_space<vmem>>, vector<1x8x1xf32>
    %574 = vector.shape_cast %573 : vector<1x8x1xf32> to vector<8x1xf32>
    %575 = vector.extract_strided_slice %529 {offsets = [6, 0], sizes = [1, 256], strides = [1, 1]} : vector<8x256xf32> to vector<1x256xf32>
    %576 = vector.broadcast %574 : vector<8x1xf32> to vector<8x256xf32>
    %577 = vector.broadcast %575 : vector<1x256xf32> to vector<8x256xf32>
    %578 = arith.mulf %576, %577 : vector<8x256xf32>
    %579 = arith.addf %572, %578 : vector<8x256xf32>
    %c7_337 = arith.constant 7 : index
    %c0_338 = arith.constant 0 : index
    %c0_339 = arith.constant 0 : index
    %580 = vector.load %arg6[%c7_337, %c0_338, %c0_339] : memref<8x8x1xf32, #tpu.memory_space<vmem>>, vector<1x8x1xf32>
    %581 = vector.shape_cast %580 : vector<1x8x1xf32> to vector<8x1xf32>
    %582 = vector.extract_strided_slice %529 {offsets = [7, 0], sizes = [1, 256], strides = [1, 1]} : vector<8x256xf32> to vector<1x256xf32>
    %583 = vector.broadcast %581 : vector<8x1xf32> to vector<8x256xf32>
    %584 = vector.broadcast %582 : vector<1x256xf32> to vector<8x256xf32>
    %585 = arith.mulf %583, %584 : vector<8x256xf32>
    %586 = arith.addf %579, %585 : vector<8x256xf32>
    %c0_340 = arith.constant 0 : index
    %c0_341 = arith.constant 0 : index
    %587 = vector.load %arg7[%c0_340, %c0_341] : memref<8x1xf32, #tpu.memory_space<vmem>>, vector<8x1xf32>
    %588 = vector.broadcast %587 : vector<8x1xf32> to vector<8x256xf32>
    %589 = arith.addf %586, %588 : vector<8x256xf32>
    %590 = arith.mulf %1, %589 : vector<8x256xf32>
    %c0_342 = arith.constant 0 : index
    %c0_343 = arith.constant 0 : index
    %c0_344 = arith.constant 0 : index
    %591 = vector.load %arg8[%c0_342, %c0_343, %c0_344] : memref<1x8x256xf32, #tpu.memory_space<vmem>>, vector<1x8x256xf32>
    %592 = vector.shape_cast %591 : vector<1x8x256xf32> to vector<8x256xf32>
    %593 = vector.shape_cast %590 : vector<8x256xf32> to vector<1x8x256xf32>
    tpu.vector_store %arg8[%c0_342, %c0_343, %c0_344], %593 {strides = array<i32>} : memref<1x8x256xf32, #tpu.memory_space<vmem>>, vector<1x8x256xf32>,
    return
  }
  func.func @transform_0(%arg0: i32) -> (i32, i32, i32) {
    %c0_i32 = arith.constant 0 : i32
    %c0_i32_0 = arith.constant 0 : i32
    %c0_i32_1 = arith.constant 0 : i32
    return %arg0, %c0_i32, %c0_i32_0 : i32, i32, i32
  }
  func.func @transform_1(%arg0: i32) -> (i32, i32, i32) {
    %c0_i32 = arith.constant 0 : i32
    %c0_i32_0 = arith.constant 0 : i32
    %c0_i32_1 = arith.constant 0 : i32
    %c0_i32_2 = arith.constant 0 : i32
    return %c0_i32, %c0_i32_0, %c0_i32_1 : i32, i32, i32
  }
  func.func @transform_2(%arg0: i32) -> (i32, i32, i32) {
    %c0_i32 = arith.constant 0 : i32
    %c0_i32_0 = arith.constant 0 : i32
    %c0_i32_1 = arith.constant 0 : i32
    %c0_i32_2 = arith.constant 0 : i32
    return %c0_i32, %c0_i32_0, %c0_i32_1 : i32, i32, i32
  }
  func.func @transform_3(%arg0: i32) -> (i32, i32, i32) {
    %c0_i32 = arith.constant 0 : i32
    %c0_i32_0 = arith.constant 0 : i32
    %c0_i32_1 = arith.constant 0 : i32
    %c0_i32_2 = arith.constant 0 : i32
    return %c0_i32, %c0_i32_0, %c0_i32_1 : i32, i32, i32
  }
  func.func @transform_4(%arg0: i32) -> (i32, i32, i32) {
    %c0_i32 = arith.constant 0 : i32
    %c0_i32_0 = arith.constant 0 : i32
    %c0_i32_1 = arith.constant 0 : i32
    %c0_i32_2 = arith.constant 0 : i32
    return %c0_i32, %c0_i32_0, %c0_i32_1 : i32, i32, i32
  }
  func.func @transform_5(%arg0: i32) -> (i32, i32, i32) {
    %c0_i32 = arith.constant 0 : i32
    %c0_i32_0 = arith.constant 0 : i32
    %c0_i32_1 = arith.constant 0 : i32
    %c0_i32_2 = arith.constant 0 : i32
    return %c0_i32, %c0_i32_0, %c0_i32_1 : i32, i32, i32
  }
  func.func @transform_6(%arg0: i32) -> (i32, i32) {
    %c0_i32 = arith.constant 0 : i32
    %c0_i32_0 = arith.constant 0 : i32
    %c0_i32_1 = arith.constant 0 : i32
    return %c0_i32, %c0_i32_0 : i32, i32
  }
  func.func @transform_7(%arg0: i32) -> (i32, i32, i32) {
    %c0_i32 = arith.constant 0 : i32
    %c0_i32_0 = arith.constant 0 : i32
    %c0_i32_1 = arith.constant 0 : i32
    return %arg0, %c0_i32, %c0_i32_0 : i32, i32, i32
  }
}

</mosaic_0001>

<llo_original>
// kernel: tpu_custom_call.1
$region0: #{tpu_custom_call.1}
  #allocation0 [shape = 'u32[]', space=smem, size = 0x4, offset = 0x4, fixed_abs, tag = 'smem constant byte address 0x4 - core index']
  #allocation1 [shape = 'u32[144,128]{1,0:T(1,128)}', space=vmem, size = 0x12000, scoped, tag = 'internal scratch']
  #allocation2 [shape = 'f32[8,512]{1,0:T(8,128)}', space=vmem, size = 0x4000, scoped, tag = 'scratch operand']
  #allocation3 [shape = 'f32[8,768]{1,0:T(8,128)}', space=vmem, size = 0x6000, scoped, tag = 'scratch operand']
  %s0 = inlined_call_operand.vmem [shape: f32[2,8,256], index: 0, kind: input, shape index: {}]
  %s1 = inlined_call_operand.vmem [shape: f32[25,8,1], index: 1, kind: input, shape index: {}]
  %s2 = inlined_call_operand.vmem [shape: f32[5,1,256], index: 2, kind: input, shape index: {}]
  %s3 = inlined_call_operand.vmem [shape: f32[49,8,1], index: 3, kind: input, shape index: {}]
  %s4 = inlined_call_operand.vmem [shape: f32[7,1,256], index: 4, kind: input, shape index: {}]
  %s5 = inlined_call_operand.vmem [shape: f32[8,8,1], index: 5, kind: input, shape index: {}]
  %s6 = inlined_call_operand.vmem [shape: f32[8,1], index: 6, kind: input, shape index: {}]
  %s7 = inlined_call_operand.hbm [shape: f32[2,8,256], index: 7, kind: output, shape index: {}]
  %s8 = sld [smem:[#allocation0]]
  $region61: #{tpu_custom_call.1} parent=0
    _
  %s10 = ssub.s32 1, %s8
  %s11 = scalar_select 0, %s10, %s8
  $region1: #{tpu_custom_call.1} parent=0
    #allocation4 [shape = 'u8[16384]{0}', space=vmem, size = 0x4000, scoped, tag = 'output window, operand 0']
    #allocation5 [shape = 's32[2]{0}', space=sflag, size = 0x8, scoped, tag = 'scoped memory for tpu_custom_call.1']
    %12 = vsyncpa [#allocation5], 0
    %s13 = scalar_lea.sflag [#allocation5], 1
    %14 = vsyncpa %s13, 0
    loop: start=0, step=1, limit=4
    $region2: #{tpu_custom_call.1} parent=1 // loop_pre_header
      _
    $region3: #{tpu_custom_call.1} parent=1 // loop_header
      %s16 = sphi 0, %s20
      %p17 = scmp.ge.s32.totalorder %s16, 4
      %s26 = sphi 0, %s28
      %s29 = sphi 0, %s26
      %s30 = sphi 0, %s29
      %s46 = sphi 0, %s30
      %s50 = sphi 0, %s50
      %s52 = sphi 0, %s50
      %s53 = sphi 0, %s52
      %s67 = sphi 0, %s53
      %s71 = sphi 0, %s71
      %s73 = sphi 0, %s71
      %s74 = sphi 0, %s73
      %s88 = sphi 0, %s74
      %s92 = sphi 0, %s92
      %s94 = sphi 0, %s92
      %s95 = sphi 0, %s94
      %s109 = sphi 0, %s95
      %s113 = sphi 0, %s113
      %s115 = sphi 0, %s113
      %s116 = sphi 0, %s115
      %s130 = sphi 0, %s116
      %s134 = sphi 0, %s134
      %s136 = sphi 0, %s134
      %s137 = sphi 0, %s136
      %s151 = sphi 0, %s137
      %s155 = sphi 0, %s155
      %s157 = sphi 0, %s155
      %s158 = sphi 0, %s157
      %s172 = sphi 0, %s158
      %s178 = sphi 0, %s180
      %s181 = sphi 0, %s178
      %s182 = sphi 0, %s181
      %s198 = sphi 0, %s182
    $region4: #{tpu_custom_call.1} parent=1 // loop_header_branch
      %19 = sbr.rel (%p17) target = $region8
    $region5: #{tpu_custom_call.1} parent=1 // loop_body
      %s21 = ssub.s32 %s16, 1
      %s22 = ssub.s32 %s16, 2
      %s23 = sadd.s32 %s16, 1
      %s24 = ssub.s32 %s16, %s23
      %p25 = scmp.eq.s32.totalorder %s24, 0
      %s27 = sadd.s32 %s26, 1
      %s28 = scalar_select %p25, %s26, %s27
      %p31 = pneg %p25
      %p32 = scmp.eq.s32.totalorder %s16, 1
      %p33 = por %p31, %p32
      %p34 = scmp.ne.s32.totalorder %s26, %s29
      %p35 = scmp.eq.s32.totalorder %s16, 0
      %p36 = por %p34, %p35
      %p37 = scmp.ne.s32.totalorder %s26, %s29
      %p38 = scmp.eq.s32.totalorder %s21, 1
      %p39 = por %p37, %p38
      %p40 = scmp.ne.s32.totalorder %s29, %s30
      %p41 = scmp.eq.s32.totalorder %s21, 0
      %p42 = por %p40, %p41
      %p43 = scmp.ne.s32.totalorder %s29, %s30
      %p44 = scmp.eq.s32.totalorder %s22, 1
      %p45 = por %p43, %p44
      %p47 = scmp.ne.s32.totalorder %s30, %s46
      %p48 = scmp.eq.s32.totalorder %s22, 0
      %p49 = por %p47, %p48
      %s51 = sadd.s32 %s50, 1
      %p54 = scmp.eq.s32.totalorder %s16, 1
      %p55 = scmp.ne.s32.totalorder %s50, %s52
      %p56 = scmp.eq.s32.totalorder %s16, 0
      %p57 = por %p55, %p56
      %p58 = scmp.ne.s32.totalorder %s50, %s52
      %p59 = scmp.eq.s32.totalorder %s21, 1
      %p60 = por %p58, %p59
      %p61 = scmp.ne.s32.totalorder %s52, %s53
      %p62 = scmp.eq.s32.totalorder %s21, 0
      %p63 = por %p61, %p62
      %p64 = scmp.ne.s32.totalorder %s52, %s53
      %p65 = scmp.eq.s32.totalorder %s22, 1
      %p66 = por %p64, %p65
      %p68 = scmp.ne.s32.totalorder %s53, %s67
      %p69 = scmp.eq.s32.totalorder %s22, 0
      %p70 = por %p68, %p69
      %s72 = sadd.s32 %s71, 1
      %p75 = scmp.eq.s32.totalorder %s16, 1
      %p76 = scmp.ne.s32.totalorder %s71, %s73
      %p77 = scmp.eq.s32.totalorder %s16, 0
      %p78 = por %p76, %p77
      %p79 = scmp.ne.s32.totalorder %s71, %s73
      %p80 = scmp.eq.s32.totalorder %s21, 1
      %p81 = por %p79, %p80
      %p82 = scmp.ne.s32.totalorder %s73, %s74
      %p83 = scmp.eq.s32.totalorder %s21, 0
      %p84 = por %p82, %p83
      %p85 = scmp.ne.s32.totalorder %s73, %s74
      %p86 = scmp.eq.s32.totalorder %s22, 1
      %p87 = por %p85, %p86
      %p89 = scmp.ne.s32.totalorder %s74, %s88
      %p90 = scmp.eq.s32.totalorder %s22, 0
      %p91 = por %p89, %p90
      %s93 = sadd.s32 %s92, 1
      %p96 = scmp.eq.s32.totalorder %s16, 1
      %p97 = scmp.ne.s32.totalorder %s92, %s94
      %p98 = scmp.eq.s32.totalorder %s16, 0
      %p99 = por %p97, %p98
      %p100 = scmp.ne.s32.totalorder %s92, %s94
      %p101 = scmp.eq.s32.totalorder %s21, 1
      %p102 = por %p100, %p101
      %p103 = scmp.ne.s32.totalorder %s94, %s95
      %p104 = scmp.eq.s32.totalorder %s21, 0
      %p105 = por %p103, %p104
      %p106 = scmp.ne.s32.totalorder %s94, %s95
      %p107 = scmp.eq.s32.totalorder %s22, 1
      %p108 = por %p106, %p107
      %p110 = scmp.ne.s32.totalorder %s95, %s109
      %p111 = scmp.eq.s32.totalorder %s22, 0
      %p112 = por %p110, %p111
      %s114 = sadd.s32 %s113, 1
      %p117 = scmp.eq.s32.totalorder %s16, 1
      %p118 = scmp.ne.s32.totalorder %s113, %s115
      %p119 = scmp.eq.s32.totalorder %s16, 0
      %p120 = por %p118, %p119
      %p121 = scmp.ne.s32.totalorder %s113, %s115
      %p122 = scmp.eq.s32.totalorder %s21, 1
      %p123 = por %p121, %p122
      %p124 = scmp.ne.s32.totalorder %s115, %s116
      %p125 = scmp.eq.s32.totalorder %s21, 0
      %p126 = por %p124, %p125
      %p127 = scmp.ne.s32.totalorder %s115, %s116
      %p128 = scmp.eq.s32.totalorder %s22, 1
      %p129 = por %p127, %p128
      %p131 = scmp.ne.s32.totalorder %s116, %s130
      %p132 = scmp.eq.s32.totalorder %s22, 0
      %p133 = por %p131, %p132
      %s135 = sadd.s32 %s134, 1
      %p138 = scmp.eq.s32.totalorder %s16, 1
      %p139 = scmp.ne.s32.totalorder %s134, %s136
      %p140 = scmp.eq.s32.totalorder %s16, 0
      %p141 = por %p139, %p140
      %p142 = scmp.ne.s32.totalorder %s134, %s136
      %p143 = scmp.eq.s32.totalorder %s21, 1
      %p144 = por %p142, %p143
      %p145 = scmp.ne.s32.totalorder %s136, %s137
      %p146 = scmp.eq.s32.totalorder %s21, 0
      %p147 = por %p145, %p146
      %p148 = scmp.ne.s32.totalorder %s136, %s137
      %p149 = scmp.eq.s32.totalorder %s22, 1
      %p150 = por %p148, %p149
      %p152 = scmp.ne.s32.totalorder %s137, %s151
      %p153 = scmp.eq.s32.totalorder %s22, 0
      %p154 = por %p152, %p153
      %s156 = sadd.s32 %s155, 1
      %p159 = scmp.eq.s32.totalorder %s16, 1
      %p160 = scmp.ne.s32.totalorder %s155, %s157
      %p161 = scmp.eq.s32.totalorder %s16, 0
      %p162 = por %p160, %p161
      %p163 = scmp.ne.s32.totalorder %s155, %s157
      %p164 = scmp.eq.s32.totalorder %s21, 1
      %p165 = por %p163, %p164
      %p166 = scmp.ne.s32.totalorder %s157, %s158
      %p167 = scmp.eq.s32.totalorder %s21, 0
      %p168 = por %p166, %p167
      %p169 = scmp.ne.s32.totalorder %s157, %s158
      %p170 = scmp.eq.s32.totalorder %s22, 1
      %p171 = por %p169, %p170
      %p173 = scmp.ne.s32.totalorder %s158, %s172
      %p174 = scmp.eq.s32.totalorder %s22, 0
      %p175 = por %p173, %p174
      %s176 = ssub.s32 %s16, %s23
      %p177 = scmp.eq.s32.totalorder %s176, 0
      %s179 = sadd.s32 %s178, 1
      %s180 = scalar_select %p177, %s178, %s179
      %p183 = pneg %p177
      %p184 = scmp.eq.s32.totalorder %s16, 1
      %p185 = por %p183, %p184
      %p186 = scmp.ne.s32.totalorder %s178, %s181
      %p187 = scmp.eq.s32.totalorder %s16, 0
      %p188 = por %p186, %p187
      %p189 = scmp.ne.s32.totalorder %s178, %s181
      %p190 = scmp.eq.s32.totalorder %s21, 1
      %p191 = por %p189, %p190
      %p192 = scmp.ne.s32.totalorder %s181, %s182
      %p193 = scmp.eq.s32.totalorder %s21, 0
      %p194 = por %p192, %p193
      %p195 = scmp.ne.s32.totalorder %s181, %s182
      %p196 = scmp.eq.s32.totalorder %s22, 1
      %p197 = por %p195, %p196
      %p199 = scmp.ne.s32.totalorder %s182, %s198
      %p200 = scmp.eq.s32.totalorder %s22, 0
      %p201 = por %p199, %p200
      %p202 = scmp.le.s32.totalorder 1, %s16
      %p203 = scmp.lt.s32.totalorder %s16, 3
      %p204 = pnand %p202, %p203
      %p205 = pneg %p204
      // Predicated region
      $region9: #{tpu_custom_call.1} parent=5 // pred_check
        _
      $region10: #{tpu_custom_call.1} parent=5 // pred_check_branch
        %207 = sbr.rel (%p204) target = $region12
      $region11: #{tpu_custom_call.1} parent=5 // pred_region
        %s208 = ssub.s32 %s16, 1
        // Predicated region
        $region13: #{tpu_custom_call.1} parent=11 // pred_check
          %p209 = pneg %p63
        $region14: #{tpu_custom_call.1} parent=11 // pred_check_branch
          %211 = sbr.rel (%p209) target = $region16
        $region15: #{tpu_custom_call.1} parent=11 // pred_region
          _
        $region16: #{tpu_custom_call.1} parent=11 // pred_fallthru
          _
        // Predicated region
        $region17: #{tpu_custom_call.1} parent=11 // pred_check
          %p212 = pneg %p84
        $region18: #{tpu_custom_call.1} parent=11 // pred_check_branch
          %214 = sbr.rel (%p212) target = $region20
        $region19: #{tpu_custom_call.1} parent=11 // pred_region
          _
        $region20: #{tpu_custom_call.1} parent=11 // pred_fallthru
          _
        // Predicated region
        $region21: #{tpu_custom_call.1} parent=11 // pred_check
          %p215 = pneg %p105
        $region22: #{tpu_custom_call.1} parent=11 // pred_check_branch
          %217 = sbr.rel (%p215) target = $region24
        $region23: #{tpu_custom_call.1} parent=11 // pred_region
          _
        $region24: #{tpu_custom_call.1} parent=11 // pred_fallthru
          _
        // Predicated region
        $region25: #{tpu_custom_call.1} parent=11 // pred_check
          %p218 = pneg %p126
        $region26: #{tpu_custom_call.1} parent=11 // pred_check_branch
          %220 = sbr.rel (%p218) target = $region28
        $region27: #{tpu_custom_call.1} parent=11 // pred_region
          _
        $region28: #{tpu_custom_call.1} parent=11 // pred_fallthru
          _
        // Predicated region
        $region29: #{tpu_custom_call.1} parent=11 // pred_check
          %p221 = pneg %p147
        $region30: #{tpu_custom_call.1} parent=11 // pred_check_branch
          %223 = sbr.rel (%p221) target = $region32
        $region31: #{tpu_custom_call.1} parent=11 // pred_region
          _
        $region32: #{tpu_custom_call.1} parent=11 // pred_fallthru
          _
        // Predicated region
        $region33: #{tpu_custom_call.1} parent=11 // pred_check
          %p224 = pneg %p168
        $region34: #{tpu_custom_call.1} parent=11 // pred_check_branch
          %226 = sbr.rel (%p224) target = $region36
        $region35: #{tpu_custom_call.1} parent=11 // pred_region
          _
        $region36: #{tpu_custom_call.1} parent=11 // pred_fallthru
          _
      $region12: #{tpu_custom_call.1} parent=5 // pred_fallthru
        _
      %p227 = scmp.lt.s32.totalorder %s16, 2
      // Predicated region
      $region37: #{tpu_custom_call.1} parent=5 // pred_check
        %p228 = pneg %p227
      $region38: #{tpu_custom_call.1} parent=5 // pred_check_branch
        %230 = sbr.rel (%p228) target = $region40
      $region39: #{tpu_custom_call.1} parent=5 // pred_region
        // Predicated region
        $region41: #{tpu_custom_call.1} parent=39 // pred_check
          %p231 = pneg %p36
        $region42: #{tpu_custom_call.1} parent=39 // pred_check_branch
          %233 = sbr.rel (%p231) target = $region44
        $region43: #{tpu_custom_call.1} parent=39 // pred_region
          %p234 = scmp.lt.s32.totalorder %s16, 1
          %s235 = scalar_select %p234, %s16, 1
          %s236 = smul.addr %s235, 2
          %s237 = smul.addr %s236, 8
          %s238 = scalar_lea.vmem %s0, %s237
        $region44: #{tpu_custom_call.1} parent=39 // pred_fallthru
          _
      $region40: #{tpu_custom_call.1} parent=5 // pred_fallthru
        _
      %p239 = scmp.le.s32.totalorder 1, %s16
      %p240 = scmp.lt.s32.totalorder %s16, 3
      %p241 = pnand %p239, %p240
      %p242 = pneg %p241
      // Predicated region
      $region45: #{tpu_custom_call.1} parent=5 // pred_check
        _
      $region46: #{tpu_custom_call.1} parent=5 // pred_check_branch
        %244 = sbr.rel (%p241) target = $region48
      $region47: #{tpu_custom_call.1} parent=5 // pred_region
        %s245 = ssub.s32 %s16, 1
        %p246 = scmp.lt.s32.totalorder %s21, 1
        %s247 = scalar_select %p246, %s21, 1
        %s248 = smul.addr %s247, 2
        %s249 = smul.addr %s248, 8
        %s250 = scalar_lea.vmem %s0, %s249
        %p251 = pneg %p42
        %p252 = pneg %p39
        %p253 = pneg %p63
        %p254 = pneg %p60
        %p255 = pneg %p84
        %p256 = pneg %p81
        %p257 = pneg %p105
        %p258 = pneg %p102
        %p259 = pneg %p126
        %p260 = pneg %p123
        %p261 = pneg %p147
        %p262 = pneg %p144
        %p263 = pneg %p168
        %p264 = pneg %p165
        %p265 = pneg %p194
        %p266 = pneg %p191
        %s267 = sand.u32 %s181, 1
        %s268 = scalar_lea.sflag [#allocation5], %s267
        %s269 = sand.u32 %s181, 1
        %s270 = smul.addr %s269, 16
        %s271 = scalar_lea.vmem [#allocation4], %s270
        %p272 = scmp.lt.s32.totalorder %s21, 1
        %s273 = scalar_select %p272, %s21, 1
        %s274 = smul.addr %s273, 2
        %s275 = smul.addr %s274, 8
        %s276 = scalar_lea.vmem %s0, %s275
        %v277 = vld [vmem:[%s276] sm:$0xff]
        %v278 = vld [vmem:[%s276 + $0x8] sm:$0xff]
        %279 = vst [vmem:[#allocation2] sm:$0xff] 0.0
        %280 = vst [vmem:[#allocation2 + $0x18] sm:$0xff] 0.0
        %281 = vst [vmem:[#allocation2 + $0x8] sm:$0xff] %v277
        %282 = vst [vmem:[#allocation2 + $0x10] sm:$0xff] %v278
        %v283 = vld [vmem:[#allocation2] sm:$0xff]
        %v284 = vld [vmem:[#allocation2 + $0x8] sm:$0xff]
        %v285 = vld [vmem:[#allocation2 + $0x10] sm:$0xff]
        %v286 = vld [vmem:[%s1] sm:$0xff]
        %288 = vset.pattern.permute.xlu0 0
        %289 = vperm.xlu0 %288, %v286
        %v290 = vpop.permute.xlu0 %289
        %v292 = vmul.f32 %v283, %v290
        %v293 = vmul.f32 %v284, %v290
        %v294 = vmul.f32 %v285, %v290
        %v295 = vadd.f32 %v292, 0.0
        %v296 = vadd.f32 %v293, 0.0
        %v297 = vadd.f32 %v294, 0.0
        %s298 = scalar_lea.vmem %s1, 40
        %v299 = vld [vmem:[%s298] sm:$0xff]
        %301 = vset.pattern.permute.xlu0 0
        %302 = vperm.xlu0 %301, %v299
        %v303 = vpop.permute.xlu0 %302
        %v305 = vmul.f32 %v283, %v303
        %v306 = vmul.f32 %v284, %v303
        %v307 = vmul.f32 %v285, %v303
        %311 = vrot.lane.b32.xlu0 %v305, 112
        %v312 = vpop.permute.xlu0 %311
        %313 = vrot.lane.b32.xlu0 %v306, 112
        %v314 = vpop.permute.xlu0 %313
        %315 = vrot.lane.b32.xlu0 %v307, 112
        %v316 = vpop.permute.xlu0 %315
        %vm317 = vcmask 916480
        %v318 = vsel %vm317, %v312, %v314
        %v319 = vsel %vm317, %v314, %v316
        %v323 = vadd.f32 %v295, %v318
        %v324 = vadd.f32 %v296, %v319
        %v325 = vadd.f32 %v297, %v316
        %s326 = scalar_lea.vmem %s1, 80
        %v327 = vld [vmem:[%s326] sm:$0xff]
        %329 = vset.pattern.permute.xlu0 0
        %330 = vperm.xlu0 %329, %v327
        %v331 = vpop.permute.xlu0 %330
        %v333 = vmul.f32 %v283, %v331
        %v334 = vmul.f32 %v284, %v331
        %v335 = vmul.f32 %v285, %v331
        %339 = vrot.lane.b32.xlu0 %v333, 96
        %v340 = vpop.permute.xlu0 %339
        %341 = vrot.lane.b32.xlu0 %v334, 96
        %v342 = vpop.permute.xlu0 %341
        %343 = vrot.lane.b32.xlu0 %v335, 96
        %v344 = vpop.permute.xlu0 %343
        %vm345 = vcmask 785408
        %v346 = vsel %vm345, %v340, %v342
        %v347 = vsel %vm345, %v342, %v344
        %v351 = vadd.f32 %v323, %v346
        %v352 = vadd.f32 %v324, %v347
        %v353 = vadd.f32 %v325, %v344
        %v354 = vld [vmem:[#allocation2 + $0x8] sm:$0xff]
        %v355 = vld [vmem:[#allocation2 + $0x10] sm:$0xff]
        %v356 = vld [vmem:[#allocation2 + $0x18] sm:$0xff]
        %s357 = scalar_lea.vmem %s1, 120
        %v358 = vld [vmem:[%s357] sm:$0xff]
        %360 = vset.pattern.permute.xlu0 0
        %361 = vperm.xlu0 %360, %v358
        %v362 = vpop.permute.xlu0 %361
        %v364 = vmul.f32 %v354, %v362
        %v365 = vmul.f32 %v355, %v362
        %v366 = vmul.f32 %v356, %v362
        %370 = vrot.lane.b32.xlu0 %v364, 80
        %v371 = vpop.permute.xlu0 %370
        %372 = vrot.lane.b32.xlu0 %v365, 80
        %v373 = vpop.permute.xlu0 %372
        %374 = vrot.lane.b32.xlu0 %v366, 80
        %v375 = vpop.permute.xlu0 %374
        %vm376 = vcmask 654336
        %v377 = vsel %vm376, %v371, %v373
        %v378 = vsel %vm376, %v373, %v375
        %v382 = vadd.f32 %v351, %v371
        %v383 = vadd.f32 %v352, %v377
        %v384 = vadd.f32 %v353, %v378
        %s385 = scalar_lea.vmem %s1, 160
        %v386 = vld [vmem:[%s385] sm:$0xff]
        %388 = vset.pattern.permute.xlu0 0
        %389 = vperm.xlu0 %388, %v386
        %v390 = vpop.permute.xlu0 %389
        %v392 = vmul.f32 %v354, %v390
        %v393 = vmul.f32 %v355, %v390
        %v394 = vmul.f32 %v356, %v390
        %398 = vrot.lane.b32.xlu0 %v392, 64
        %v399 = vpop.permute.xlu0 %398
        %400 = vrot.lane.b32.xlu0 %v393, 64
        %v401 = vpop.permute.xlu0 %400
        %402 = vrot.lane.b32.xlu0 %v394, 64
        %v403 = vpop.permute.xlu0 %402
        %vm404 = vcmask 523264
        %v405 = vsel %vm404, %v399, %v401
        %v406 = vsel %vm404, %v401, %v403
        %v410 = vadd.f32 %v382, %v399
        %v411 = vadd.f32 %v383, %v405
        %v412 = vadd.f32 %v384, %v406
        %v413 = vld [vmem:[%s2] sm:$0x3]
        %v415 = vlaneseq
        %v416 = vshrl.u32 %v415, 7
        %v417 = vsub.s32 0, %v416
        %v418 = vrot.slane %v413, %v417
        %v419 = vlaneseq
        %v420 = vshrl.u32 %v419, 7
        %v421 = vsub.s32 1, %v420
        %v422 = vrot.slane %v413, %v421
        %423 = vrot.lane.b32.xlu0 %v418, 94
        %v424 = vpop.permute.xlu0 %423
        %425 = vrot.lane.b32.xlu0 %v422, 94
        %v426 = vpop.permute.xlu0 %425
        %vm427 = vcmask 769024
        %v428 = vsel %vm427, %v424, %v426
        %v432 = vmul.f32 %v410, %v424
        %v433 = vmul.f32 %v411, %v428
        %v434 = vmul.f32 %v412, %v426
        %v435 = vadd.f32 %v432, 0.0
        %v436 = vadd.f32 %v433, 0.0
        %v437 = vadd.f32 %v434, 0.0
        %s438 = scalar_lea.vmem %s1, 8
        %v439 = vld [vmem:[%s438] sm:$0xff]
        %441 = vset.pattern.permute.xlu0 0
        %442 = vperm.xlu0 %441, %v439
        %v443 = vpop.permute.xlu0 %442
        %v445 = vmul.f32 %v283, %v443
        %v446 = vmul.f32 %v284, %v443
        %v447 = vmul.f32 %v285, %v443
        %v448 = vadd.f32 %v445, 0.0
        %v449 = vadd.f32 %v446, 0.0
        %v450 = vadd.f32 %v447, 0.0
        %s451 = scalar_lea.vmem %s1, 48
        %v452 = vld [vmem:[%s451] sm:$0xff]
        %454 = vset.pattern.permute.xlu0 0
        %455 = vperm.xlu0 %454, %v452
        %v456 = vpop.permute.xlu0 %455
        %v458 = vmul.f32 %v283, %v456
        %v459 = vmul.f32 %v284, %v456
        %v460 = vmul.f32 %v285, %v456
        %464 = vrot.lane.b32.xlu0 %v458, 112
        %v465 = vpop.permute.xlu0 %464
        %466 = vrot.lane.b32.xlu0 %v459, 112
        %v467 = vpop.permute.xlu0 %466
        %468 = vrot.lane.b32.xlu0 %v460, 112
        %v469 = vpop.permute.xlu0 %468
        %v470 = vsel %vm317, %v465, %v467
        %v471 = vsel %vm317, %v467, %v469
        %v475 = vadd.f32 %v448, %v470
        %v476 = vadd.f32 %v449, %v471
        %v477 = vadd.f32 %v450, %v469
        %s478 = scalar_lea.vmem %s1, 88
        %v479 = vld [vmem:[%s478] sm:$0xff]
        %481 = vset.pattern.permute.xlu0 0
        %482 = vperm.xlu0 %481, %v479
        %v483 = vpop.permute.xlu0 %482
        %v485 = vmul.f32 %v283, %v483
        %v486 = vmul.f32 %v284, %v483
        %v487 = vmul.f32 %v285, %v483
        %491 = vrot.lane.b32.xlu0 %v485, 96
        %v492 = vpop.permute.xlu0 %491
        %493 = vrot.lane.b32.xlu0 %v486, 96
        %v494 = vpop.permute.xlu0 %493
        %495 = vrot.lane.b32.xlu0 %v487, 96
        %v496 = vpop.permute.xlu0 %495
        %v497 = vsel %vm345, %v492, %v494
        %v498 = vsel %vm345, %v494, %v496
        %v502 = vadd.f32 %v475, %v497
        %v503 = vadd.f32 %v476, %v498
        %v504 = vadd.f32 %v477, %v496
        %s505 = scalar_lea.vmem %s1, 128
        %v506 = vld [vmem:[%s505] sm:$0xff]
        %508 = vset.pattern.permute.xlu0 0
        %509 = vperm.xlu0 %508, %v506
        %v510 = vpop.permute.xlu0 %509
        %v512 = vmul.f32 %v354, %v510
        %v513 = vmul.f32 %v355, %v510
        %v514 = vmul.f32 %v356, %v510
        %518 = vrot.lane.b32.xlu0 %v512, 80
        %v519 = vpop.permute.xlu0 %518
        %520 = vrot.lane.b32.xlu0 %v513, 80
        %v521 = vpop.permute.xlu0 %520
        %522 = vrot.lane.b32.xlu0 %v514, 80
        %v523 = vpop.permute.xlu0 %522
        %v524 = vsel %vm376, %v519, %v521
        %v525 = vsel %vm376, %v521, %v523
        %v529 = vadd.f32 %v502, %v519
        %v530 = vadd.f32 %v503, %v524
        %v531 = vadd.f32 %v504, %v525
        %s532 = scalar_lea.vmem %s1, 168
        %v533 = vld [vmem:[%s532] sm:$0xff]
        %535 = vset.pattern.permute.xlu0 0
        %536 = vperm.xlu0 %535, %v533
        %v537 = vpop.permute.xlu0 %536
        %v539 = vmul.f32 %v354, %v537
        %v540 = vmul.f32 %v355, %v537
        %v541 = vmul.f32 %v356, %v537
        %545 = vrot.lane.b32.xlu0 %v539, 64
        %v546 = vpop.permute.xlu0 %545
        %547 = vrot.lane.b32.xlu0 %v540, 64
        %v548 = vpop.permute.xlu0 %547
        %549 = vrot.lane.b32.xlu0 %v541, 64
        %v550 = vpop.permute.xlu0 %549
        %v551 = vsel %vm404, %v546, %v548
        %v552 = vsel %vm404, %v548, %v550
        %v556 = vadd.f32 %v529, %v546
        %v557 = vadd.f32 %v530, %v551
        %v558 = vadd.f32 %v531, %v552
        %s559 = scalar_lea.vmem %s2, 2
        %v560 = vld [vmem:[%s559] sm:$0x3]
        %v562 = vlaneseq
        %v563 = vshrl.u32 %v562, 7
        %v564 = vsub.s32 0, %v563
        %v565 = vrot.slane %v560, %v564
        %v566 = vlaneseq
        %v567 = vshrl.u32 %v566, 7
        %v568 = vsub.s32 1, %v567
        %v569 = vrot.slane %v560, %v568
        %570 = vrot.lane.b32.xlu0 %v565, 95
        %v571 = vpop.permute.xlu0 %570
        %572 = vrot.lane.b32.xlu0 %v569, 95
        %v573 = vpop.permute.xlu0 %572
        %vm574 = vcmask 777216
        %v575 = vsel %vm574, %v571, %v573
        %v579 = vmul.f32 %v556, %v571
        %v580 = vmul.f32 %v557, %v575
        %v581 = vmul.f32 %v558, %v573
        %585 = vrot.lane.b32.xlu0 %v579, 127
        %v586 = vpop.permute.xlu0 %585
        %587 = vrot.lane.b32.xlu0 %v580, 127
        %v588 = vpop.permute.xlu0 %587
        %589 = vrot.lane.b32.xlu0 %v581, 127
        %v590 = vpop.permute.xlu0 %589
        %vm591 = vcmask 1039360
        %v592 = vsel %vm591, %v586, %v588
        %v593 = vsel %vm591, %v588, %v590
        %v597 = vadd.f32 %v435, %v592
        %v598 = vadd.f32 %v436, %v593
        %v599 = vadd.f32 %v437, %v590
        %s600 = scalar_lea.vmem %s1, 16
        %v601 = vld [vmem:[%s600] sm:$0xff]
        %603 = vset.pattern.permute.xlu0 0
        %604 = vperm.xlu0 %603, %v601
        %v605 = vpop.permute.xlu0 %604
        %v607 = vmul.f32 %v283, %v605
        %v608 = vmul.f32 %v284, %v605
        %v609 = vmul.f32 %v285, %v605
        %v610 = vadd.f32 %v607, 0.0
        %v611 = vadd.f32 %v608, 0.0
        %v612 = vadd.f32 %v609, 0.0
        %s613 = scalar_lea.vmem %s1, 56
        %v614 = vld [vmem:[%s613] sm:$0xff]
        %616 = vset.pattern.permute.xlu0 0
        %617 = vperm.xlu0 %616, %v614
        %v618 = vpop.permute.xlu0 %617
        %v620 = vmul.f32 %v283, %v618
        %v621 = vmul.f32 %v284, %v618
        %v622 = vmul.f32 %v285, %v618
        %626 = vrot.lane.b32.xlu0 %v620, 112
        %v627 = vpop.permute.xlu0 %626
        %628 = vrot.lane.b32.xlu0 %v621, 112
        %v629 = vpop.permute.xlu0 %628
        %630 = vrot.lane.b32.xlu0 %v622, 112
        %v631 = vpop.permute.xlu0 %630
        %v632 = vsel %vm317, %v627, %v629
        %v633 = vsel %vm317, %v629, %v631
        %v637 = vadd.f32 %v610, %v632
        %v638 = vadd.f32 %v611, %v633
        %v639 = vadd.f32 %v612, %v631
        %s640 = scalar_lea.vmem %s1, 96
        %v641 = vld [vmem:[%s640] sm:$0xff]
        %643 = vset.pattern.permute.xlu0 0
        %644 = vperm.xlu0 %643, %v641
        %v645 = vpop.permute.xlu0 %644
        %v647 = vmul.f32 %v284, %v645
        %v648 = vmul.f32 %v285, %v645
        %651 = vrot.lane.b32.xlu0 %v647, 96
        %v652 = vpop.permute.xlu0 %651
        %653 = vrot.lane.b32.xlu0 %v648, 96
        %v654 = vpop.permute.xlu0 %653
        %v655 = vsel %vm345, %v652, %v654
        %v659 = vadd.f32 %v637, %v652
        %v660 = vadd.f32 %v638, %v655
        %v661 = vadd.f32 %v639, %v654
        %s662 = scalar_lea.vmem %s1, 136
        %v663 = vld [vmem:[%s662] sm:$0xff]
        %665 = vset.pattern.permute.xlu0 0
        %666 = vperm.xlu0 %665, %v663
        %v667 = vpop.permute.xlu0 %666
        %v669 = vmul.f32 %v354, %v667
        %v670 = vmul.f32 %v355, %v667
        %v671 = vmul.f32 %v356, %v667
        %675 = vrot.lane.b32.xlu0 %v669, 80
        %v676 = vpop.permute.xlu0 %675
        %677 = vrot.lane.b32.xlu0 %v670, 80
        %v678 = vpop.permute.xlu0 %677
        %679 = vrot.lane.b32.xlu0 %v671, 80
        %v680 = vpop.permute.xlu0 %679
        %v681 = vsel %vm376, %v676, %v678
        %v682 = vsel %vm376, %v678, %v680
        %v686 = vadd.f32 %v659, %v676
        %v687 = vadd.f32 %v660, %v681
        %v688 = vadd.f32 %v661, %v682
        %s689 = scalar_lea.vmem %s1, 176
        %v690 = vld [vmem:[%s689] sm:$0xff]
        %692 = vset.pattern.permute.xlu0 0
        %693 = vperm.xlu0 %692, %v690
        %v694 = vpop.permute.xlu0 %693
        %v696 = vmul.f32 %v354, %v694
        %v697 = vmul.f32 %v355, %v694
        %v698 = vmul.f32 %v356, %v694
        %702 = vrot.lane.b32.xlu0 %v696, 64
        %v703 = vpop.permute.xlu0 %702
        %704 = vrot.lane.b32.xlu0 %v697, 64
        %v705 = vpop.permute.xlu0 %704
        %706 = vrot.lane.b32.xlu0 %v698, 64
        %v707 = vpop.permute.xlu0 %706
        %v708 = vsel %vm404, %v703, %v705
        %v709 = vsel %vm404, %v705, %v707
        %v713 = vadd.f32 %v686, %v703
        %v714 = vadd.f32 %v687, %v708
        %v715 = vadd.f32 %v688, %v709
        %s716 = scalar_lea.vmem %s2, 4
        %v717 = vld [vmem:[%s716] sm:$0x3]
        %v719 = vlaneseq
        %v720 = vshrl.u32 %v719, 7
        %v721 = vsub.s32 0, %v720
        %v722 = vrot.slane %v717, %v721
        %v723 = vlaneseq
        %v724 = vshrl.u32 %v723, 7
        %v725 = vsub.s32 1, %v724
        %v726 = vrot.slane %v717, %v725
        %727 = vrot.lane.b32.xlu0 %v722, 96
        %v728 = vpop.permute.xlu0 %727
        %729 = vrot.lane.b32.xlu0 %v726, 96
        %v730 = vpop.permute.xlu0 %729
        %v731 = vsel %vm345, %v728, %v730
        %v735 = vmul.f32 %v713, %v728
        %v736 = vmul.f32 %v714, %v731
        %v737 = vmul.f32 %v715, %v730
        %741 = vrot.lane.b32.xlu0 %v735, 126
        %v742 = vpop.permute.xlu0 %741
        %743 = vrot.lane.b32.xlu0 %v736, 126
        %v744 = vpop.permute.xlu0 %743
        %745 = vrot.lane.b32.xlu0 %v737, 126
        %v746 = vpop.permute.xlu0 %745
        %vm747 = vcmask 1031168
        %v748 = vsel %vm747, %v742, %v744
        %v749 = vsel %vm747, %v744, %v746
        %v753 = vadd.f32 %v597, %v748
        %v754 = vadd.f32 %v598, %v749
        %v755 = vadd.f32 %v599, %v746
        %s756 = scalar_lea.vmem %s1, 24
        %v757 = vld [vmem:[%s756] sm:$0xff]
        %759 = vset.pattern.permute.xlu0 0
        %760 = vperm.xlu0 %759, %v757
        %v761 = vpop.permute.xlu0 %760
        %v763 = vmul.f32 %v283, %v761
        %v764 = vmul.f32 %v284, %v761
        %v765 = vmul.f32 %v285, %v761
        %v766 = vadd.f32 %v763, 0.0
        %v767 = vadd.f32 %v764, 0.0
        %v768 = vadd.f32 %v765, 0.0
        %s769 = scalar_lea.vmem %s1, 64
        %v770 = vld [vmem:[%s769] sm:$0xff]
        %772 = vset.pattern.permute.xlu0 0
        %773 = vperm.xlu0 %772, %v770
        %v774 = vpop.permute.xlu0 %773
        %v776 = vmul.f32 %v283, %v774
        %v777 = vmul.f32 %v284, %v774
        %v778 = vmul.f32 %v285, %v774
        %782 = vrot.lane.b32.xlu0 %v776, 112
        %v783 = vpop.permute.xlu0 %782
        %784 = vrot.lane.b32.xlu0 %v777, 112
        %v785 = vpop.permute.xlu0 %784
        %786 = vrot.lane.b32.xlu0 %v778, 112
        %v787 = vpop.permute.xlu0 %786
        %v788 = vsel %vm317, %v783, %v785
        %v789 = vsel %vm317, %v785, %v787
        %v793 = vadd.f32 %v766, %v788
        %v794 = vadd.f32 %v767, %v789
        %v795 = vadd.f32 %v768, %v787
        %s796 = scalar_lea.vmem %s1, 104
        %v797 = vld [vmem:[%s796] sm:$0xff]
        %799 = vset.pattern.permute.xlu0 0
        %800 = vperm.xlu0 %799, %v797
        %v801 = vpop.permute.xlu0 %800
        %v803 = vmul.f32 %v354, %v801
        %v804 = vmul.f32 %v355, %v801
        %v805 = vmul.f32 %v356, %v801
        %809 = vrot.lane.b32.xlu0 %v803, 96
        %v810 = vpop.permute.xlu0 %809
        %811 = vrot.lane.b32.xlu0 %v804, 96
        %v812 = vpop.permute.xlu0 %811
        %813 = vrot.lane.b32.xlu0 %v805, 96
        %v814 = vpop.permute.xlu0 %813
        %v815 = vsel %vm345, %v810, %v812
        %v816 = vsel %vm345, %v812, %v814
        %v820 = vadd.f32 %v793, %v810
        %v821 = vadd.f32 %v794, %v815
        %v822 = vadd.f32 %v795, %v816
        %s823 = scalar_lea.vmem %s1, 144
        %v824 = vld [vmem:[%s823] sm:$0xff]
        %826 = vset.pattern.permute.xlu0 0
        %827 = vperm.xlu0 %826, %v824
        %v828 = vpop.permute.xlu0 %827
        %v830 = vmul.f32 %v354, %v828
        %v831 = vmul.f32 %v355, %v828
        %v832 = vmul.f32 %v356, %v828
        %836 = vrot.lane.b32.xlu0 %v830, 80
        %v837 = vpop.permute.xlu0 %836
        %838 = vrot.lane.b32.xlu0 %v831, 80
        %v839 = vpop.permute.xlu0 %838
        %840 = vrot.lane.b32.xlu0 %v832, 80
        %v841 = vpop.permute.xlu0 %840
        %v842 = vsel %vm376, %v837, %v839
        %v843 = vsel %vm376, %v839, %v841
        %v847 = vadd.f32 %v820, %v837
        %v848 = vadd.f32 %v821, %v842
        %v849 = vadd.f32 %v822, %v843
        %s850 = scalar_lea.vmem %s1, 184
        %v851 = vld [vmem:[%s850] sm:$0xff]
        %853 = vset.pattern.permute.xlu0 0
        %854 = vperm.xlu0 %853, %v851
        %v855 = vpop.permute.xlu0 %854
        %v857 = vmul.f32 %v354, %v855
        %v858 = vmul.f32 %v355, %v855
        %v859 = vmul.f32 %v356, %v855
        %863 = vrot.lane.b32.xlu0 %v857, 64
        %v864 = vpop.permute.xlu0 %863
        %865 = vrot.lane.b32.xlu0 %v858, 64
        %v866 = vpop.permute.xlu0 %865
        %867 = vrot.lane.b32.xlu0 %v859, 64
        %v868 = vpop.permute.xlu0 %867
        %v869 = vsel %vm404, %v864, %v866
        %v870 = vsel %vm404, %v866, %v868
        %v874 = vadd.f32 %v847, %v864
        %v875 = vadd.f32 %v848, %v869
        %v876 = vadd.f32 %v849, %v870
        %s877 = scalar_lea.vmem %s2, 6
        %v878 = vld [vmem:[%s877] sm:$0x3]
        %v880 = vlaneseq
        %v881 = vshrl.u32 %v880, 7
        %v882 = vsub.s32 0, %v881
        %v883 = vrot.slane %v878, %v882
        %v884 = vlaneseq
        %v885 = vshrl.u32 %v884, 7
        %v886 = vsub.s32 1, %v885
        %v887 = vrot.slane %v878, %v886
        %888 = vrot.lane.b32.xlu0 %v883, 97
        %v889 = vpop.permute.xlu0 %888
        %890 = vrot.lane.b32.xlu0 %v887, 97
        %v891 = vpop.permute.xlu0 %890
        %vm892 = vcmask 793600
        %v893 = vsel %vm892, %v889, %v891
        %v897 = vmul.f32 %v874, %v889
        %v898 = vmul.f32 %v875, %v893
        %v899 = vmul.f32 %v876, %v891
        %903 = vrot.lane.b32.xlu0 %v897, 125
        %v904 = vpop.permute.xlu0 %903
        %905 = vrot.lane.b32.xlu0 %v898, 125
        %v906 = vpop.permute.xlu0 %905
        %907 = vrot.lane.b32.xlu0 %v899, 125
        %v908 = vpop.permute.xlu0 %907
        %vm909 = vcmask 1022976
        %v910 = vsel %vm909, %v904, %v906
        %v911 = vsel %vm909, %v906, %v908
        %v915 = vadd.f32 %v753, %v910
        %v916 = vadd.f32 %v754, %v911
        %v917 = vadd.f32 %v755, %v908
        %s918 = scalar_lea.vmem %s1, 32
        %v919 = vld [vmem:[%s918] sm:$0xff]
        %921 = vset.pattern.permute.xlu0 0
        %922 = vperm.xlu0 %921, %v919
        %v923 = vpop.permute.xlu0 %922
        %v925 = vmul.f32 %v283, %v923
        %v926 = vmul.f32 %v284, %v923
        %v927 = vmul.f32 %v285, %v923
        %v928 = vadd.f32 %v925, 0.0
        %v929 = vadd.f32 %v926, 0.0
        %v930 = vadd.f32 %v927, 0.0
        %s931 = scalar_lea.vmem %s1, 72
        %v932 = vld [vmem:[%s931] sm:$0xff]
        %934 = vset.pattern.permute.xlu0 0
        %935 = vperm.xlu0 %934, %v932
        %v936 = vpop.permute.xlu0 %935
        %v938 = vmul.f32 %v283, %v936
        %v939 = vmul.f32 %v284, %v936
        %v940 = vmul.f32 %v285, %v936
        %944 = vrot.lane.b32.xlu0 %v938, 112
        %v945 = vpop.permute.xlu0 %944
        %946 = vrot.lane.b32.xlu0 %v939, 112
        %v947 = vpop.permute.xlu0 %946
        %948 = vrot.lane.b32.xlu0 %v940, 112
        %v949 = vpop.permute.xlu0 %948
        %v950 = vsel %vm317, %v945, %v947
        %v951 = vsel %vm317, %v947, %v949
        %v955 = vadd.f32 %v928, %v950
        %v956 = vadd.f32 %v929, %v951
        %v957 = vadd.f32 %v930, %v949
        %s958 = scalar_lea.vmem %s1, 112
        %v959 = vld [vmem:[%s958] sm:$0xff]
        %961 = vset.pattern.permute.xlu0 0
        %962 = vperm.xlu0 %961, %v959
        %v963 = vpop.permute.xlu0 %962
        %v965 = vmul.f32 %v354, %v963
        %v966 = vmul.f32 %v355, %v963
        %v967 = vmul.f32 %v356, %v963
        %971 = vrot.lane.b32.xlu0 %v965, 96
        %v972 = vpop.permute.xlu0 %971
        %973 = vrot.lane.b32.xlu0 %v966, 96
        %v974 = vpop.permute.xlu0 %973
        %975 = vrot.lane.b32.xlu0 %v967, 96
        %v976 = vpop.permute.xlu0 %975
        %v977 = vsel %vm345, %v972, %v974
        %v978 = vsel %vm345, %v974, %v976
        %v982 = vadd.f32 %v955, %v972
        %v983 = vadd.f32 %v956, %v977
        %v984 = vadd.f32 %v957, %v978
        %s985 = scalar_lea.vmem %s1, 152
        %v986 = vld [vmem:[%s985] sm:$0xff]
        %988 = vset.pattern.permute.xlu0 0
        %989 = vperm.xlu0 %988, %v986
        %v990 = vpop.permute.xlu0 %989
        %v992 = vmul.f32 %v354, %v990
        %v993 = vmul.f32 %v355, %v990
        %v994 = vmul.f32 %v356, %v990
        %998 = vrot.lane.b32.xlu0 %v992, 80
        %v999 = vpop.permute.xlu0 %998
        %1000 = vrot.lane.b32.xlu0 %v993, 80
        %v1001 = vpop.permute.xlu0 %1000
        %1002 = vrot.lane.b32.xlu0 %v994, 80
        %v1003 = vpop.permute.xlu0 %1002
        %v1004 = vsel %vm376, %v999, %v1001
        %v1005 = vsel %vm376, %v1001, %v1003
        %v1009 = vadd.f32 %v982, %v999
        %v1010 = vadd.f32 %v983, %v1004
        %v1011 = vadd.f32 %v984, %v1005
        %s1012 = scalar_lea.vmem %s1, 192
        %v1013 = vld [vmem:[%s1012] sm:$0xff]
        %1015 = vset.pattern.permute.xlu0 0
        %1016 = vperm.xlu0 %1015, %v1013
        %v1017 = vpop.permute.xlu0 %1016
        %v1019 = vmul.f32 %v354, %v1017
        %v1020 = vmul.f32 %v355, %v1017
        %v1021 = vmul.f32 %v356, %v1017
        %1025 = vrot.lane.b32.xlu0 %v1019, 64
        %v1026 = vpop.permute.xlu0 %1025
        %1027 = vrot.lane.b32.xlu0 %v1020, 64
        %v1028 = vpop.permute.xlu0 %1027
        %1029 = vrot.lane.b32.xlu0 %v1021, 64
        %v1030 = vpop.permute.xlu0 %1029
        %v1031 = vsel %vm404, %v1026, %v1028
        %v1032 = vsel %vm404, %v1028, %v1030
        %v1036 = vadd.f32 %v1009, %v1026
        %v1037 = vadd.f32 %v1010, %v1031
        %v1038 = vadd.f32 %v1011, %v1032
        %s1039 = scalar_lea.vmem %s2, 8
        %v1040 = vld [vmem:[%s1039] sm:$0x3]
        %v1042 = vlaneseq
        %v1043 = vshrl.u32 %v1042, 7
        %v1044 = vsub.s32 0, %v1043
        %v1045 = vrot.slane %v1040, %v1044
        %v1046 = vlaneseq
        %v1047 = vshrl.u32 %v1046, 7
        %v1048 = vsub.s32 1, %v1047
        %v1049 = vrot.slane %v1040, %v1048
        %1050 = vrot.lane.b32.xlu0 %v1045, 98
        %v1051 = vpop.permute.xlu0 %1050
        %1052 = vrot.lane.b32.xlu0 %v1049, 98
        %v1053 = vpop.permute.xlu0 %1052
        %vm1054 = vcmask 801792
        %v1055 = vsel %vm1054, %v1051, %v1053
        %v1059 = vmul.f32 %v1036, %v1051
        %v1060 = vmul.f32 %v1037, %v1055
        %v1061 = vmul.f32 %v1038, %v1053
        %1065 = vrot.lane.b32.xlu0 %v1059, 124
        %v1066 = vpop.permute.xlu0 %1065
        %1067 = vrot.lane.b32.xlu0 %v1060, 124
        %v1068 = vpop.permute.xlu0 %1067
        %1069 = vrot.lane.b32.xlu0 %v1061, 124
        %v1070 = vpop.permute.xlu0 %1069
        %vm1071 = vcmask 1014784
        %v1072 = vsel %vm1071, %v1066, %v1068
        %v1073 = vsel %vm1071, %v1068, %v1070
        %v1077 = vadd.f32 %v915, %v1072
        %v1078 = vadd.f32 %v916, %v1073
        %v1079 = vadd.f32 %v917, %v1070
        %1080 = vst [vmem:[#allocation3] sm:$0xff] 0.0
        %1081 = vst [vmem:[#allocation3 + $0x8] sm:$0xff] 0.0
        %1082 = vst [vmem:[#allocation3 + $0x20] sm:$0xff] 0.0
        %1083 = vst [vmem:[#allocation3 + $0x28] sm:$0xff] 0.0
        %1087 = vrot.lane.b32.xlu0 %v1077, 34
        %v1088 = vpop.permute.xlu0 %1087
        %1089 = vrot.lane.b32.xlu0 %v1078, 34
        %v1090 = vpop.permute.xlu0 %1089
        %1091 = vrot.lane.b32.xlu0 %v1079, 34
        %v1092 = vpop.permute.xlu0 %1091
        %vm1093 = vcmask 277504
        %v1094 = vsel %vm1093, %v1088, %v1090
        %v1095 = vsel %vm1093, %v1090, %v1092
        %1098 = vst [vmem:[#allocation3 + $0x10] sm:$0xff] %v1094
        %1099 = vst [vmem:[#allocation3 + $0x18] sm:$0xff] %v1095
        %v1100 = vld [vmem:[#allocation3] sm:$0xff]
        %v1101 = vld [vmem:[#allocation3 + $0x8] sm:$0xff]
        %v1102 = vld [vmem:[#allocation3 + $0x10] sm:$0xff]
        %v1103 = vld [vmem:[%s3] sm:$0xff]
        %1105 = vset.pattern.permute.xlu0 0
        %1106 = vperm.xlu0 %1105, %v1103
        %v1107 = vpop.permute.xlu0 %1106
        %v1109 = vmul.f32 %v1100, %v1107
        %v1110 = vmul.f32 %v1101, %v1107
        %v1111 = vmul.f32 %v1102, %v1107
        %v1112 = vadd.f32 %v1109, 0.0
        %v1113 = vadd.f32 %v1110, 0.0
        %v1114 = vadd.f32 %v1111, 0.0
        %v1115 = vld [vmem:[#allocation3 + $0x8] sm:$0xff]
        %v1116 = vld [vmem:[#allocation3 + $0x10] sm:$0xff]
        %v1117 = vld [vmem:[#allocation3 + $0x18] sm:$0xff]
        %s1118 = scalar_lea.vmem %s3, 56
        %v1119 = vld [vmem:[%s1118] sm:$0xff]
        %1121 = vset.pattern.permute.xlu0 0
        %1122 = vperm.xlu0 %1121, %v1119
        %v1123 = vpop.permute.xlu0 %1122
        %v1125 = vmul.f32 %v1115, %v1123
        %v1126 = vmul.f32 %v1116, %v1123
        %v1127 = vmul.f32 %v1117, %v1123
        %1131 = vrot.lane.b32.xlu0 %v1125, 80
        %v1132 = vpop.permute.xlu0 %1131
        %1133 = vrot.lane.b32.xlu0 %v1126, 80
        %v1134 = vpop.permute.xlu0 %1133
        %1135 = vrot.lane.b32.xlu0 %v1127, 80
        %v1136 = vpop.permute.xlu0 %1135
        %v1137 = vsel %vm376, %v1132, %v1134
        %v1138 = vsel %vm376, %v1134, %v1136
        %v1142 = vadd.f32 %v1112, %v1132
        %v1143 = vadd.f32 %v1113, %v1137
        %v1144 = vadd.f32 %v1114, %v1138
        %s1145 = scalar_lea.vmem %s3, 112
        %v1146 = vld [vmem:[%s1145] sm:$0xff]
        %1148 = vset.pattern.permute.xlu0 0
        %1149 = vperm.xlu0 %1148, %v1146
        %v1150 = vpop.permute.xlu0 %1149
        %v1152 = vmul.f32 %v1115, %v1150
        %v1153 = vmul.f32 %v1116, %v1150
        %v1154 = vmul.f32 %v1117, %v1150
        %1158 = vrot.lane.b32.xlu0 %v1152, 32
        %v1159 = vpop.permute.xlu0 %1158
        %1160 = vrot.lane.b32.xlu0 %v1153, 32
        %v1161 = vpop.permute.xlu0 %1160
        %1162 = vrot.lane.b32.xlu0 %v1154, 32
        %v1163 = vpop.permute.xlu0 %1162
        %vm1164 = vcmask 261120
        %v1165 = vsel %vm1164, %v1159, %v1161
        %v1166 = vsel %vm1164, %v1161, %v1163
        %v1170 = vadd.f32 %v1142, %v1159
        %v1171 = vadd.f32 %v1143, %v1165
        %v1172 = vadd.f32 %v1144, %v1166
        %s1173 = scalar_lea.vmem %s3, 168
        %v1174 = vld [vmem:[%s1173] sm:$0xff]
        %1176 = vset.pattern.permute.xlu0 0
        %1177 = vperm.xlu0 %1176, %v1174
        %v1178 = vpop.permute.xlu0 %1177
        %v1180 = vmul.f32 %v1115, %v1178
        %v1181 = vmul.f32 %v1116, %v1178
        %v1182 = vmul.f32 %v1117, %v1178
        %1186 = vrot.lane.b32.xlu0 %v1180, 112
        %v1187 = vpop.permute.xlu0 %1186
        %1188 = vrot.lane.b32.xlu0 %v1181, 112
        %v1189 = vpop.permute.xlu0 %1188
        %1190 = vrot.lane.b32.xlu0 %v1182, 112
        %v1191 = vpop.permute.xlu0 %1190
        %v1192 = vsel %vm317, %v1187, %v1189
        %v1193 = vsel %vm317, %v1189, %v1191
        %v1197 = vadd.f32 %v1170, %v1192
        %v1198 = vadd.f32 %v1171, %v1193
        %v1199 = vadd.f32 %v1172, %v1191
        %v1200 = vld [vmem:[#allocation3 + $0x10] sm:$0xff]
        %v1201 = vld [vmem:[#allocation3 + $0x18] sm:$0xff]
        %v1202 = vld [vmem:[#allocation3 + $0x20] sm:$0xff]
        %s1203 = scalar_lea.vmem %s3, 224
        %v1204 = vld [vmem:[%s1203] sm:$0xff]
        %1206 = vset.pattern.permute.xlu0 0
        %1207 = vperm.xlu0 %1206, %v1204
        %v1208 = vpop.permute.xlu0 %1207
        %v1210 = vmul.f32 %v1200, %v1208
        %v1211 = vmul.f32 %v1201, %v1208
        %v1212 = vmul.f32 %v1202, %v1208
        %1216 = vrot.lane.b32.xlu0 %v1210, 64
        %v1217 = vpop.permute.xlu0 %1216
        %1218 = vrot.lane.b32.xlu0 %v1211, 64
        %v1219 = vpop.permute.xlu0 %1218
        %1220 = vrot.lane.b32.xlu0 %v1212, 64
        %v1221 = vpop.permute.xlu0 %1220
        %v1222 = vsel %vm404, %v1217, %v1219
        %v1223 = vsel %vm404, %v1219, %v1221
        %v1227 = vadd.f32 %v1197, %v1217
        %v1228 = vadd.f32 %v1198, %v1222
        %v1229 = vadd.f32 %v1199, %v1223
        %s1230 = scalar_lea.vmem %s3, 280
        %v1231 = vld [vmem:[%s1230] sm:$0xff]
        %1233 = vset.pattern.permute.xlu0 0
        %1234 = vperm.xlu0 %1233, %v1231
        %v1235 = vpop.permute.xlu0 %1234
        %v1237 = vmul.f32 %v1200, %v1235
        %v1238 = vmul.f32 %v1201, %v1235
        %v1239 = vmul.f32 %v1202, %v1235
        %1243 = vrot.lane.b32.xlu0 %v1237, 16
        %v1244 = vpop.permute.xlu0 %1243
        %1245 = vrot.lane.b32.xlu0 %v1238, 16
        %v1246 = vpop.permute.xlu0 %1245
        %1247 = vrot.lane.b32.xlu0 %v1239, 16
        %v1248 = vpop.permute.xlu0 %1247
        %vm1249 = vcmask 130048
        %v1250 = vsel %vm1249, %v1244, %v1246
        %v1251 = vsel %vm1249, %v1246, %v1248
        %v1255 = vadd.f32 %v1227, %v1244
        %v1256 = vadd.f32 %v1228, %v1250
        %v1257 = vadd.f32 %v1229, %v1251
        %v1258 = vld [vmem:[#allocation3 + $0x18] sm:$0xff]
        %v1259 = vld [vmem:[#allocation3 + $0x20] sm:$0xff]
        %v1260 = vld [vmem:[#allocation3 + $0x28] sm:$0xff]
        %s1261 = scalar_lea.vmem %s3, 336
        %v1262 = vld [vmem:[%s1261] sm:$0xff]
        %1264 = vset.pattern.permute.xlu0 0
        %1265 = vperm.xlu0 %1264, %v1262
        %v1266 = vpop.permute.xlu0 %1265
        %v1268 = vmul.f32 %v1258, %v1266
        %v1269 = vmul.f32 %v1259, %v1266
        %v1270 = vmul.f32 %v1260, %v1266
        %1274 = vrot.lane.b32.xlu0 %v1268, 96
        %v1275 = vpop.permute.xlu0 %1274
        %1276 = vrot.lane.b32.xlu0 %v1269, 96
        %v1277 = vpop.permute.xlu0 %1276
        %1278 = vrot.lane.b32.xlu0 %v1270, 96
        %v1279 = vpop.permute.xlu0 %1278
        %v1280 = vsel %vm345, %v1275, %v1277
        %v1281 = vsel %vm345, %v1277, %v1279
        %v1285 = vadd.f32 %v1255, %v1275
        %v1286 = vadd.f32 %v1256, %v1280
        %v1287 = vadd.f32 %v1257, %v1281
        %v1288 = vld [vmem:[%s4] sm:$0x3]
        %v1290 = vlaneseq
        %v1291 = vshrl.u32 %v1290, 7
        %v1292 = vsub.s32 0, %v1291
        %v1293 = vrot.slane %v1288, %v1292
        %v1294 = vlaneseq
        %v1295 = vshrl.u32 %v1294, 7
        %v1296 = vsub.s32 1, %v1295
        %v1297 = vrot.slane %v1288, %v1296
        %1298 = vrot.lane.b32.xlu0 %v1293, 103
        %v1299 = vpop.permute.xlu0 %1298
        %1300 = vrot.lane.b32.xlu0 %v1297, 103
        %v1301 = vpop.permute.xlu0 %1300
        %vm1302 = vcmask 842752
        %v1303 = vsel %vm1302, %v1299, %v1301
        %v1307 = vmul.f32 %v1285, %v1299
        %v1308 = vmul.f32 %v1286, %v1303
        %v1309 = vmul.f32 %v1287, %v1301
        %v1310 = vadd.f32 %v1307, 0.0
        %v1311 = vadd.f32 %v1308, 0.0
        %v1312 = vadd.f32 %v1309, 0.0
        %s1313 = scalar_lea.vmem %s3, 8
        %v1314 = vld [vmem:[%s1313] sm:$0xff]
        %1316 = vset.pattern.permute.xlu0 0
        %1317 = vperm.xlu0 %1316, %v1314
        %v1318 = vpop.permute.xlu0 %1317
        %v1320 = vmul.f32 %v1100, %v1318
        %v1321 = vmul.f32 %v1101, %v1318
        %v1322 = vmul.f32 %v1102, %v1318
        %v1323 = vadd.f32 %v1320, 0.0
        %v1324 = vadd.f32 %v1321, 0.0
        %v1325 = vadd.f32 %v1322, 0.0
        %s1326 = scalar_lea.vmem %s3, 64
        %v1327 = vld [vmem:[%s1326] sm:$0xff]
        %1329 = vset.pattern.permute.xlu0 0
        %1330 = vperm.xlu0 %1329, %v1327
        %v1331 = vpop.permute.xlu0 %1330
        %v1333 = vmul.f32 %v1115, %v1331
        %v1334 = vmul.f32 %v1116, %v1331
        %v1335 = vmul.f32 %v1117, %v1331
        %1339 = vrot.lane.b32.xlu0 %v1333, 80
        %v1340 = vpop.permute.xlu0 %1339
        %1341 = vrot.lane.b32.xlu0 %v1334, 80
        %v1342 = vpop.permute.xlu0 %1341
        %1343 = vrot.lane.b32.xlu0 %v1335, 80
        %v1344 = vpop.permute.xlu0 %1343
        %v1345 = vsel %vm376, %v1340, %v1342
        %v1346 = vsel %vm376, %v1342, %v1344
        %v1350 = vadd.f32 %v1323, %v1340
        %v1351 = vadd.f32 %v1324, %v1345
        %v1352 = vadd.f32 %v1325, %v1346
        %s1353 = scalar_lea.vmem %s3, 120
        %v1354 = vld [vmem:[%s1353] sm:$0xff]
        %1356 = vset.pattern.permute.xlu0 0
        %1357 = vperm.xlu0 %1356, %v1354
        %v1358 = vpop.permute.xlu0 %1357
        %v1360 = vmul.f32 %v1115, %v1358
        %v1361 = vmul.f32 %v1116, %v1358
        %v1362 = vmul.f32 %v1117, %v1358
        %1366 = vrot.lane.b32.xlu0 %v1360, 32
        %v1367 = vpop.permute.xlu0 %1366
        %1368 = vrot.lane.b32.xlu0 %v1361, 32
        %v1369 = vpop.permute.xlu0 %1368
        %1370 = vrot.lane.b32.xlu0 %v1362, 32
        %v1371 = vpop.permute.xlu0 %1370
        %v1372 = vsel %vm1164, %v1367, %v1369
        %v1373 = vsel %vm1164, %v1369, %v1371
        %v1377 = vadd.f32 %v1350, %v1367
        %v1378 = vadd.f32 %v1351, %v1372
        %v1379 = vadd.f32 %v1352, %v1373
        %s1380 = scalar_lea.vmem %s3, 176
        %v1381 = vld [vmem:[%s1380] sm:$0xff]
        %1383 = vset.pattern.permute.xlu0 0
        %1384 = vperm.xlu0 %1383, %v1381
        %v1385 = vpop.permute.xlu0 %1384
        %v1387 = vmul.f32 %v1115, %v1385
        %v1388 = vmul.f32 %v1116, %v1385
        %v1389 = vmul.f32 %v1117, %v1385
        %1393 = vrot.lane.b32.xlu0 %v1387, 112
        %v1394 = vpop.permute.xlu0 %1393
        %1395 = vrot.lane.b32.xlu0 %v1388, 112
        %v1396 = vpop.permute.xlu0 %1395
        %1397 = vrot.lane.b32.xlu0 %v1389, 112
        %v1398 = vpop.permute.xlu0 %1397
        %v1399 = vsel %vm317, %v1394, %v1396
        %v1400 = vsel %vm317, %v1396, %v1398
        %v1404 = vadd.f32 %v1377, %v1399
        %v1405 = vadd.f32 %v1378, %v1400
        %v1406 = vadd.f32 %v1379, %v1398
        %s1407 = scalar_lea.vmem %s3, 232
        %v1408 = vld [vmem:[%s1407] sm:$0xff]
        %1410 = vset.pattern.permute.xlu0 0
        %1411 = vperm.xlu0 %1410, %v1408
        %v1412 = vpop.permute.xlu0 %1411
        %v1414 = vmul.f32 %v1200, %v1412
        %v1415 = vmul.f32 %v1201, %v1412
        %v1416 = vmul.f32 %v1202, %v1412
        %1420 = vrot.lane.b32.xlu0 %v1414, 64
        %v1421 = vpop.permute.xlu0 %1420
        %1422 = vrot.lane.b32.xlu0 %v1415, 64
        %v1423 = vpop.permute.xlu0 %1422
        %1424 = vrot.lane.b32.xlu0 %v1416, 64
        %v1425 = vpop.permute.xlu0 %1424
        %v1426 = vsel %vm404, %v1421, %v1423
        %v1427 = vsel %vm404, %v1423, %v1425
        %v1431 = vadd.f32 %v1404, %v1421
        %v1432 = vadd.f32 %v1405, %v1426
        %v1433 = vadd.f32 %v1406, %v1427
        %s1434 = scalar_lea.vmem %s3, 288
        %v1435 = vld [vmem:[%s1434] sm:$0xff]
        %1437 = vset.pattern.permute.xlu0 0
        %1438 = vperm.xlu0 %1437, %v1435
        %v1439 = vpop.permute.xlu0 %1438
        %v1441 = vmul.f32 %v1200, %v1439
        %v1442 = vmul.f32 %v1201, %v1439
        %v1443 = vmul.f32 %v1202, %v1439
        %1447 = vrot.lane.b32.xlu0 %v1441, 16
        %v1448 = vpop.permute.xlu0 %1447
        %1449 = vrot.lane.b32.xlu0 %v1442, 16
        %v1450 = vpop.permute.xlu0 %1449
        %1451 = vrot.lane.b32.xlu0 %v1443, 16
        %v1452 = vpop.permute.xlu0 %1451
        %v1453 = vsel %vm1249, %v1448, %v1450
        %v1454 = vsel %vm1249, %v1450, %v1452
        %v1458 = vadd.f32 %v1431, %v1448
        %v1459 = vadd.f32 %v1432, %v1453
        %v1460 = vadd.f32 %v1433, %v1454
        %s1461 = scalar_lea.vmem %s3, 344
        %v1462 = vld [vmem:[%s1461] sm:$0xff]
        %1464 = vset.pattern.permute.xlu0 0
        %1465 = vperm.xlu0 %1464, %v1462
        %v1466 = vpop.permute.xlu0 %1465
        %v1468 = vmul.f32 %v1258, %v1466
        %v1469 = vmul.f32 %v1259, %v1466
        %v1470 = vmul.f32 %v1260, %v1466
        %1474 = vrot.lane.b32.xlu0 %v1468, 96
        %v1475 = vpop.permute.xlu0 %1474
        %1476 = vrot.lane.b32.xlu0 %v1469, 96
        %v1477 = vpop.permute.xlu0 %1476
        %1478 = vrot.lane.b32.xlu0 %v1470, 96
        %v1479 = vpop.permute.xlu0 %1478
        %v1480 = vsel %vm345, %v1475, %v1477
        %v1481 = vsel %vm345, %v1477, %v1479
        %v1485 = vadd.f32 %v1458, %v1475
        %v1486 = vadd.f32 %v1459, %v1480
        %v1487 = vadd.f32 %v1460, %v1481
        %s1488 = scalar_lea.vmem %s4, 2
        %v1489 = vld [vmem:[%s1488] sm:$0x3]
        %v1491 = vlaneseq
        %v1492 = vshrl.u32 %v1491, 7
        %v1493 = vsub.s32 0, %v1492
        %v1494 = vrot.slane %v1489, %v1493
        %v1495 = vlaneseq
        %v1496 = vshrl.u32 %v1495, 7
        %v1497 = vsub.s32 1, %v1496
        %v1498 = vrot.slane %v1489, %v1497
        %1499 = vrot.lane.b32.xlu0 %v1494, 106
        %v1500 = vpop.permute.xlu0 %1499
        %1501 = vrot.lane.b32.xlu0 %v1498, 106
        %v1502 = vpop.permute.xlu0 %1501
        %vm1503 = vcmask 867328
        %v1504 = vsel %vm1503, %v1500, %v1502
        %v1508 = vmul.f32 %v1485, %v1500
        %v1509 = vmul.f32 %v1486, %v1504
        %v1510 = vmul.f32 %v1487, %v1502
        %1514 = vrot.lane.b32.xlu0 %v1508, 125
        %v1515 = vpop.permute.xlu0 %1514
        %1516 = vrot.lane.b32.xlu0 %v1509, 125
        %v1517 = vpop.permute.xlu0 %1516
        %1518 = vrot.lane.b32.xlu0 %v1510, 125
        %v1519 = vpop.permute.xlu0 %1518
        %v1520 = vsel %vm909, %v1515, %v1517
        %v1521 = vsel %vm909, %v1517, %v1519
        %v1525 = vadd.f32 %v1310, %v1520
        %v1526 = vadd.f32 %v1311, %v1521
        %v1527 = vadd.f32 %v1312, %v1519
        %s1528 = scalar_lea.vmem %s3, 16
        %v1529 = vld [vmem:[%s1528] sm:$0xff]
        %1531 = vset.pattern.permute.xlu0 0
        %1532 = vperm.xlu0 %1531, %v1529
        %v1533 = vpop.permute.xlu0 %1532
        %v1535 = vmul.f32 %v1100, %v1533
        %v1536 = vmul.f32 %v1101, %v1533
        %v1537 = vmul.f32 %v1102, %v1533
        %v1538 = vadd.f32 %v1535, 0.0
        %v1539 = vadd.f32 %v1536, 0.0
        %v1540 = vadd.f32 %v1537, 0.0
        %s1541 = scalar_lea.vmem %s3, 72
        %v1542 = vld [vmem:[%s1541] sm:$0xff]
        %1544 = vset.pattern.permute.xlu0 0
        %1545 = vperm.xlu0 %1544, %v1542
        %v1546 = vpop.permute.xlu0 %1545
        %v1548 = vmul.f32 %v1115, %v1546
        %v1549 = vmul.f32 %v1116, %v1546
        %v1550 = vmul.f32 %v1117, %v1546
        %1554 = vrot.lane.b32.xlu0 %v1548, 80
        %v1555 = vpop.permute.xlu0 %1554
        %1556 = vrot.lane.b32.xlu0 %v1549, 80
        %v1557 = vpop.permute.xlu0 %1556
        %1558 = vrot.lane.b32.xlu0 %v1550, 80
        %v1559 = vpop.permute.xlu0 %1558
        %v1560 = vsel %vm376, %v1555, %v1557
        %v1561 = vsel %vm376, %v1557, %v1559
        %v1565 = vadd.f32 %v1538, %v1555
        %v1566 = vadd.f32 %v1539, %v1560
        %v1567 = vadd.f32 %v1540, %v1561
        %s1568 = scalar_lea.vmem %s3, 128
        %v1569 = vld [vmem:[%s1568] sm:$0xff]
        %1571 = vset.pattern.permute.xlu0 0
        %1572 = vperm.xlu0 %1571, %v1569
        %v1573 = vpop.permute.xlu0 %1572
        %v1575 = vmul.f32 %v1115, %v1573
        %v1576 = vmul.f32 %v1116, %v1573
        %v1577 = vmul.f32 %v1117, %v1573
        %1581 = vrot.lane.b32.xlu0 %v1575, 32
        %v1582 = vpop.permute.xlu0 %1581
        %1583 = vrot.lane.b32.xlu0 %v1576, 32
        %v1584 = vpop.permute.xlu0 %1583
        %1585 = vrot.lane.b32.xlu0 %v1577, 32
        %v1586 = vpop.permute.xlu0 %1585
        %v1587 = vsel %vm1164, %v1582, %v1584
        %v1588 = vsel %vm1164, %v1584, %v1586
        %v1592 = vadd.f32 %v1565, %v1582
        %v1593 = vadd.f32 %v1566, %v1587
        %v1594 = vadd.f32 %v1567, %v1588
        %s1595 = scalar_lea.vmem %s3, 184
        %v1596 = vld [vmem:[%s1595] sm:$0xff]
        %1598 = vset.pattern.permute.xlu0 0
        %1599 = vperm.xlu0 %1598, %v1596
        %v1600 = vpop.permute.xlu0 %1599
        %v1602 = vmul.f32 %v1115, %v1600
        %v1603 = vmul.f32 %v1116, %v1600
        %v1604 = vmul.f32 %v1117, %v1600
        %1608 = vrot.lane.b32.xlu0 %v1602, 112
        %v1609 = vpop.permute.xlu0 %1608
        %1610 = vrot.lane.b32.xlu0 %v1603, 112
        %v1611 = vpop.permute.xlu0 %1610
        %1612 = vrot.lane.b32.xlu0 %v1604, 112
        %v1613 = vpop.permute.xlu0 %1612
        %v1614 = vsel %vm317, %v1609, %v1611
        %v1615 = vsel %vm317, %v1611, %v1613
        %v1619 = vadd.f32 %v1592, %v1614
        %v1620 = vadd.f32 %v1593, %v1615
        %v1621 = vadd.f32 %v1594, %v1613
        %s1622 = scalar_lea.vmem %s3, 240
        %v1623 = vld [vmem:[%s1622] sm:$0xff]
        %1625 = vset.pattern.permute.xlu0 0
        %1626 = vperm.xlu0 %1625, %v1623
        %v1627 = vpop.permute.xlu0 %1626
        %v1629 = vmul.f32 %v1200, %v1627
        %v1630 = vmul.f32 %v1201, %v1627
        %v1631 = vmul.f32 %v1202, %v1627
        %1635 = vrot.lane.b32.xlu0 %v1629, 64
        %v1636 = vpop.permute.xlu0 %1635
        %1637 = vrot.lane.b32.xlu0 %v1630, 64
        %v1638 = vpop.permute.xlu0 %1637
        %1639 = vrot.lane.b32.xlu0 %v1631, 64
        %v1640 = vpop.permute.xlu0 %1639
        %v1641 = vsel %vm404, %v1636, %v1638
        %v1642 = vsel %vm404, %v1638, %v1640
        %v1646 = vadd.f32 %v1619, %v1636
        %v1647 = vadd.f32 %v1620, %v1641
        %v1648 = vadd.f32 %v1621, %v1642
        %s1649 = scalar_lea.vmem %s3, 296
        %v1650 = vld [vmem:[%s1649] sm:$0xff]
        %1652 = vset.pattern.permute.xlu0 0
        %1653 = vperm.xlu0 %1652, %v1650
        %v1654 = vpop.permute.xlu0 %1653
        %v1656 = vmul.f32 %v1200, %v1654
        %v1657 = vmul.f32 %v1201, %v1654
        %v1658 = vmul.f32 %v1202, %v1654
        %1662 = vrot.lane.b32.xlu0 %v1656, 16
        %v1663 = vpop.permute.xlu0 %1662
        %1664 = vrot.lane.b32.xlu0 %v1657, 16
        %v1665 = vpop.permute.xlu0 %1664
        %1666 = vrot.lane.b32.xlu0 %v1658, 16
        %v1667 = vpop.permute.xlu0 %1666
        %v1668 = vsel %vm1249, %v1663, %v1665
        %v1669 = vsel %vm1249, %v1665, %v1667
        %v1673 = vadd.f32 %v1646, %v1663
        %v1674 = vadd.f32 %v1647, %v1668
        %v1675 = vadd.f32 %v1648, %v1669
        %s1676 = scalar_lea.vmem %s3, 352
        %v1677 = vld [vmem:[%s1676] sm:$0xff]
        %1679 = vset.pattern.permute.xlu0 0
        %1680 = vperm.xlu0 %1679, %v1677
        %v1681 = vpop.permute.xlu0 %1680
        %v1683 = vmul.f32 %v1258, %v1681
        %v1684 = vmul.f32 %v1259, %v1681
        %v1685 = vmul.f32 %v1260, %v1681
        %1689 = vrot.lane.b32.xlu0 %v1683, 96
        %v1690 = vpop.permute.xlu0 %1689
        %1691 = vrot.lane.b32.xlu0 %v1684, 96
        %v1692 = vpop.permute.xlu0 %1691
        %1693 = vrot.lane.b32.xlu0 %v1685, 96
        %v1694 = vpop.permute.xlu0 %1693
        %v1695 = vsel %vm345, %v1690, %v1692
        %v1696 = vsel %vm345, %v1692, %v1694
        %v1700 = vadd.f32 %v1673, %v1690
        %v1701 = vadd.f32 %v1674, %v1695
        %v1702 = vadd.f32 %v1675, %v1696
        %s1703 = scalar_lea.vmem %s4, 4
        %v1704 = vld [vmem:[%s1703] sm:$0x3]
        %v1706 = vlaneseq
        %v1707 = vshrl.u32 %v1706, 7
        %v1708 = vsub.s32 0, %v1707
        %v1709 = vrot.slane %v1704, %v1708
        %v1710 = vlaneseq
        %v1711 = vshrl.u32 %v1710, 7
        %v1712 = vsub.s32 1, %v1711
        %v1713 = vrot.slane %v1704, %v1712
        %1714 = vrot.lane.b32.xlu0 %v1709, 109
        %v1715 = vpop.permute.xlu0 %1714
        %1716 = vrot.lane.b32.xlu0 %v1713, 109
        %v1717 = vpop.permute.xlu0 %1716
        %vm1718 = vcmask 891904
        %v1719 = vsel %vm1718, %v1715, %v1717
        %v1723 = vmul.f32 %v1700, %v1715
        %v1724 = vmul.f32 %v1701, %v1719
        %v1725 = vmul.f32 %v1702, %v1717
        %1729 = vrot.lane.b32.xlu0 %v1723, 122
        %v1730 = vpop.permute.xlu0 %1729
        %1731 = vrot.lane.b32.xlu0 %v1724, 122
        %v1732 = vpop.permute.xlu0 %1731
        %1733 = vrot.lane.b32.xlu0 %v1725, 122
        %v1734 = vpop.permute.xlu0 %1733
        %vm1735 = vcmask 998400
        %v1736 = vsel %vm1735, %v1730, %v1732
        %v1737 = vsel %vm1735, %v1732, %v1734
        %v1741 = vadd.f32 %v1525, %v1736
        %v1742 = vadd.f32 %v1526, %v1737
        %v1743 = vadd.f32 %v1527, %v1734
        %s1744 = scalar_lea.vmem %s3, 24
        %v1745 = vld [vmem:[%s1744] sm:$0xff]
        %1747 = vset.pattern.permute.xlu0 0
        %1748 = vperm.xlu0 %1747, %v1745
        %v1749 = vpop.permute.xlu0 %1748
        %v1751 = vmul.f32 %v1100, %v1749
        %v1752 = vmul.f32 %v1101, %v1749
        %v1753 = vmul.f32 %v1102, %v1749
        %v1754 = vadd.f32 %v1751, 0.0
        %v1755 = vadd.f32 %v1752, 0.0
        %v1756 = vadd.f32 %v1753, 0.0
        %s1757 = scalar_lea.vmem %s3, 80
        %v1758 = vld [vmem:[%s1757] sm:$0xff]
        %1760 = vset.pattern.permute.xlu0 0
        %1761 = vperm.xlu0 %1760, %v1758
        %v1762 = vpop.permute.xlu0 %1761
        %v1764 = vmul.f32 %v1115, %v1762
        %v1765 = vmul.f32 %v1116, %v1762
        %v1766 = vmul.f32 %v1117, %v1762
        %1770 = vrot.lane.b32.xlu0 %v1764, 80
        %v1771 = vpop.permute.xlu0 %1770
        %1772 = vrot.lane.b32.xlu0 %v1765, 80
        %v1773 = vpop.permute.xlu0 %1772
        %1774 = vrot.lane.b32.xlu0 %v1766, 80
        %v1775 = vpop.permute.xlu0 %1774
        %v1776 = vsel %vm376, %v1771, %v1773
        %v1777 = vsel %vm376, %v1773, %v1775
        %v1781 = vadd.f32 %v1754, %v1771
        %v1782 = vadd.f32 %v1755, %v1776
        %v1783 = vadd.f32 %v1756, %v1777
        %s1784 = scalar_lea.vmem %s3, 136
        %v1785 = vld [vmem:[%s1784] sm:$0xff]
        %1787 = vset.pattern.permute.xlu0 0
        %1788 = vperm.xlu0 %1787, %v1785
        %v1789 = vpop.permute.xlu0 %1788
        %v1791 = vmul.f32 %v1115, %v1789
        %v1792 = vmul.f32 %v1116, %v1789
        %v1793 = vmul.f32 %v1117, %v1789
        %1797 = vrot.lane.b32.xlu0 %v1791, 32
        %v1798 = vpop.permute.xlu0 %1797
        %1799 = vrot.lane.b32.xlu0 %v1792, 32
        %v1800 = vpop.permute.xlu0 %1799
        %1801 = vrot.lane.b32.xlu0 %v1793, 32
        %v1802 = vpop.permute.xlu0 %1801
        %v1803 = vsel %vm1164, %v1798, %v1800
        %v1804 = vsel %vm1164, %v1800, %v1802
        %v1808 = vadd.f32 %v1781, %v1798
        %v1809 = vadd.f32 %v1782, %v1803
        %v1810 = vadd.f32 %v1783, %v1804
        %s1811 = scalar_lea.vmem %s3, 192
        %v1812 = vld [vmem:[%s1811] sm:$0xff]
        %1814 = vset.pattern.permute.xlu0 0
        %1815 = vperm.xlu0 %1814, %v1812
        %v1816 = vpop.permute.xlu0 %1815
        %v1818 = vmul.f32 %v1116, %v1816
        %v1819 = vmul.f32 %v1117, %v1816
        %1822 = vrot.lane.b32.xlu0 %v1818, 112
        %v1823 = vpop.permute.xlu0 %1822
        %1824 = vrot.lane.b32.xlu0 %v1819, 112
        %v1825 = vpop.permute.xlu0 %1824
        %v1826 = vsel %vm317, %v1823, %v1825
        %v1830 = vadd.f32 %v1808, %v1823
        %v1831 = vadd.f32 %v1809, %v1826
        %v1832 = vadd.f32 %v1810, %v1825
        %s1833 = scalar_lea.vmem %s3, 248
        %v1834 = vld [vmem:[%s1833] sm:$0xff]
        %1836 = vset.pattern.permute.xlu0 0
        %1837 = vperm.xlu0 %1836, %v1834
        %v1838 = vpop.permute.xlu0 %1837
        %v1840 = vmul.f32 %v1200, %v1838
        %v1841 = vmul.f32 %v1201, %v1838
        %v1842 = vmul.f32 %v1202, %v1838
        %1846 = vrot.lane.b32.xlu0 %v1840, 64
        %v1847 = vpop.permute.xlu0 %1846
        %1848 = vrot.lane.b32.xlu0 %v1841, 64
        %v1849 = vpop.permute.xlu0 %1848
        %1850 = vrot.lane.b32.xlu0 %v1842, 64
        %v1851 = vpop.permute.xlu0 %1850
        %v1852 = vsel %vm404, %v1847, %v1849
        %v1853 = vsel %vm404, %v1849, %v1851
        %v1857 = vadd.f32 %v1830, %v1847
        %v1858 = vadd.f32 %v1831, %v1852
        %v1859 = vadd.f32 %v1832, %v1853
        %s1860 = scalar_lea.vmem %s3, 304
        %v1861 = vld [vmem:[%s1860] sm:$0xff]
        %1863 = vset.pattern.permute.xlu0 0
        %1864 = vperm.xlu0 %1863, %v1861
        %v1865 = vpop.permute.xlu0 %1864
        %v1867 = vmul.f32 %v1200, %v1865
        %v1868 = vmul.f32 %v1201, %v1865
        %v1869 = vmul.f32 %v1202, %v1865
        %1873 = vrot.lane.b32.xlu0 %v1867, 16
        %v1874 = vpop.permute.xlu0 %1873
        %1875 = vrot.lane.b32.xlu0 %v1868, 16
        %v1876 = vpop.permute.xlu0 %1875
        %1877 = vrot.lane.b32.xlu0 %v1869, 16
        %v1878 = vpop.permute.xlu0 %1877
        %v1879 = vsel %vm1249, %v1874, %v1876
        %v1880 = vsel %vm1249, %v1876, %v1878
        %v1884 = vadd.f32 %v1857, %v1874
        %v1885 = vadd.f32 %v1858, %v1879
        %v1886 = vadd.f32 %v1859, %v1880
        %s1887 = scalar_lea.vmem %s3, 360
        %v1888 = vld [vmem:[%s1887] sm:$0xff]
        %1890 = vset.pattern.permute.xlu0 0
        %1891 = vperm.xlu0 %1890, %v1888
        %v1892 = vpop.permute.xlu0 %1891
        %v1894 = vmul.f32 %v1258, %v1892
        %v1895 = vmul.f32 %v1259, %v1892
        %v1896 = vmul.f32 %v1260, %v1892
        %1900 = vrot.lane.b32.xlu0 %v1894, 96
        %v1901 = vpop.permute.xlu0 %1900
        %1902 = vrot.lane.b32.xlu0 %v1895, 96
        %v1903 = vpop.permute.xlu0 %1902
        %1904 = vrot.lane.b32.xlu0 %v1896, 96
        %v1905 = vpop.permute.xlu0 %1904
        %v1906 = vsel %vm345, %v1901, %v1903
        %v1907 = vsel %vm345, %v1903, %v1905
        %v1911 = vadd.f32 %v1884, %v1901
        %v1912 = vadd.f32 %v1885, %v1906
        %v1913 = vadd.f32 %v1886, %v1907
        %s1914 = scalar_lea.vmem %s4, 6
        %v1915 = vld [vmem:[%s1914] sm:$0x3]
        %v1917 = vlaneseq
        %v1918 = vshrl.u32 %v1917, 7
        %v1919 = vsub.s32 0, %v1918
        %v1920 = vrot.slane %v1915, %v1919
        %v1921 = vlaneseq
        %v1922 = vshrl.u32 %v1921, 7
        %v1923 = vsub.s32 1, %v1922
        %v1924 = vrot.slane %v1915, %v1923
        %1925 = vrot.lane.b32.xlu0 %v1920, 112
        %v1926 = vpop.permute.xlu0 %1925
        %1927 = vrot.lane.b32.xlu0 %v1924, 112
        %v1928 = vpop.permute.xlu0 %1927
        %v1929 = vsel %vm317, %v1926, %v1928
        %v1933 = vmul.f32 %v1911, %v1926
        %v1934 = vmul.f32 %v1912, %v1929
        %v1935 = vmul.f32 %v1913, %v1928
        %1939 = vrot.lane.b32.xlu0 %v1933, 119
        %v1940 = vpop.permute.xlu0 %1939
        %1941 = vrot.lane.b32.xlu0 %v1934, 119
        %v1942 = vpop.permute.xlu0 %1941
        %1943 = vrot.lane.b32.xlu0 %v1935, 119
        %v1944 = vpop.permute.xlu0 %1943
        %vm1945 = vcmask 973824
        %v1946 = vsel %vm1945, %v1940, %v1942
        %v1947 = vsel %vm1945, %v1942, %v1944
        %v1951 = vadd.f32 %v1741, %v1946
        %v1952 = vadd.f32 %v1742, %v1947
        %v1953 = vadd.f32 %v1743, %v1944
        %s1954 = scalar_lea.vmem %s3, 32
        %v1955 = vld [vmem:[%s1954] sm:$0xff]
        %1957 = vset.pattern.permute.xlu0 0
        %1958 = vperm.xlu0 %1957, %v1955
        %v1959 = vpop.permute.xlu0 %1958
        %v1961 = vmul.f32 %v1100, %v1959
        %v1962 = vmul.f32 %v1101, %v1959
        %v1963 = vmul.f32 %v1102, %v1959
        %v1964 = vadd.f32 %v1961, 0.0
        %v1965 = vadd.f32 %v1962, 0.0
        %v1966 = vadd.f32 %v1963, 0.0
        %s1967 = scalar_lea.vmem %s3, 88
        %v1968 = vld [vmem:[%s1967] sm:$0xff]
        %1970 = vset.pattern.permute.xlu0 0
        %1971 = vperm.xlu0 %1970, %v1968
        %v1972 = vpop.permute.xlu0 %1971
        %v1974 = vmul.f32 %v1115, %v1972
        %v1975 = vmul.f32 %v1116, %v1972
        %v1976 = vmul.f32 %v1117, %v1972
        %1980 = vrot.lane.b32.xlu0 %v1974, 80
        %v1981 = vpop.permute.xlu0 %1980
        %1982 = vrot.lane.b32.xlu0 %v1975, 80
        %v1983 = vpop.permute.xlu0 %1982
        %1984 = vrot.lane.b32.xlu0 %v1976, 80
        %v1985 = vpop.permute.xlu0 %1984
        %v1986 = vsel %vm376, %v1981, %v1983
        %v1987 = vsel %vm376, %v1983, %v1985
        %v1991 = vadd.f32 %v1964, %v1981
        %v1992 = vadd.f32 %v1965, %v1986
        %v1993 = vadd.f32 %v1966, %v1987
        %s1994 = scalar_lea.vmem %s3, 144
        %v1995 = vld [vmem:[%s1994] sm:$0xff]
        %1997 = vset.pattern.permute.xlu0 0
        %1998 = vperm.xlu0 %1997, %v1995
        %v1999 = vpop.permute.xlu0 %1998
        %v2001 = vmul.f32 %v1115, %v1999
        %v2002 = vmul.f32 %v1116, %v1999
        %v2003 = vmul.f32 %v1117, %v1999
        %2007 = vrot.lane.b32.xlu0 %v2001, 32
        %v2008 = vpop.permute.xlu0 %2007
        %2009 = vrot.lane.b32.xlu0 %v2002, 32
        %v2010 = vpop.permute.xlu0 %2009
        %2011 = vrot.lane.b32.xlu0 %v2003, 32
        %v2012 = vpop.permute.xlu0 %2011
        %v2013 = vsel %vm1164, %v2008, %v2010
        %v2014 = vsel %vm1164, %v2010, %v2012
        %v2018 = vadd.f32 %v1991, %v2008
        %v2019 = vadd.f32 %v1992, %v2013
        %v2020 = vadd.f32 %v1993, %v2014
        %s2021 = scalar_lea.vmem %s3, 200
        %v2022 = vld [vmem:[%s2021] sm:$0xff]
        %2024 = vset.pattern.permute.xlu0 0
        %2025 = vperm.xlu0 %2024, %v2022
        %v2026 = vpop.permute.xlu0 %2025
        %v2028 = vmul.f32 %v1200, %v2026
        %v2029 = vmul.f32 %v1201, %v2026
        %v2030 = vmul.f32 %v1202, %v2026
        %2034 = vrot.lane.b32.xlu0 %v2028, 112
        %v2035 = vpop.permute.xlu0 %2034
        %2036 = vrot.lane.b32.xlu0 %v2029, 112
        %v2037 = vpop.permute.xlu0 %2036
        %2038 = vrot.lane.b32.xlu0 %v2030, 112
        %v2039 = vpop.permute.xlu0 %2038
        %v2040 = vsel %vm317, %v2035, %v2037
        %v2041 = vsel %vm317, %v2037, %v2039
        %v2045 = vadd.f32 %v2018, %v2035
        %v2046 = vadd.f32 %v2019, %v2040
        %v2047 = vadd.f32 %v2020, %v2041
        %s2048 = scalar_lea.vmem %s3, 256
        %v2049 = vld [vmem:[%s2048] sm:$0xff]
        %2051 = vset.pattern.permute.xlu0 0
        %2052 = vperm.xlu0 %2051, %v2049
        %v2053 = vpop.permute.xlu0 %2052
        %v2055 = vmul.f32 %v1200, %v2053
        %v2056 = vmul.f32 %v1201, %v2053
        %v2057 = vmul.f32 %v1202, %v2053
        %2061 = vrot.lane.b32.xlu0 %v2055, 64
        %v2062 = vpop.permute.xlu0 %2061
        %2063 = vrot.lane.b32.xlu0 %v2056, 64
        %v2064 = vpop.permute.xlu0 %2063
        %2065 = vrot.lane.b32.xlu0 %v2057, 64
        %v2066 = vpop.permute.xlu0 %2065
        %v2067 = vsel %vm404, %v2062, %v2064
        %v2068 = vsel %vm404, %v2064, %v2066
        %v2072 = vadd.f32 %v2045, %v2062
        %v2073 = vadd.f32 %v2046, %v2067
        %v2074 = vadd.f32 %v2047, %v2068
        %s2075 = scalar_lea.vmem %s3, 312
        %v2076 = vld [vmem:[%s2075] sm:$0xff]
        %2078 = vset.pattern.permute.xlu0 0
        %2079 = vperm.xlu0 %2078, %v2076
        %v2080 = vpop.permute.xlu0 %2079
        %v2082 = vmul.f32 %v1200, %v2080
        %v2083 = vmul.f32 %v1201, %v2080
        %v2084 = vmul.f32 %v1202, %v2080
        %2088 = vrot.lane.b32.xlu0 %v2082, 16
        %v2089 = vpop.permute.xlu0 %2088
        %2090 = vrot.lane.b32.xlu0 %v2083, 16
        %v2091 = vpop.permute.xlu0 %2090
        %2092 = vrot.lane.b32.xlu0 %v2084, 16
        %v2093 = vpop.permute.xlu0 %2092
        %v2094 = vsel %vm1249, %v2089, %v2091
        %v2095 = vsel %vm1249, %v2091, %v2093
        %v2099 = vadd.f32 %v2072, %v2089
        %v2100 = vadd.f32 %v2073, %v2094
        %v2101 = vadd.f32 %v2074, %v2095
        %s2102 = scalar_lea.vmem %s3, 368
        %v2103 = vld [vmem:[%s2102] sm:$0xff]
        %2105 = vset.pattern.permute.xlu0 0
        %2106 = vperm.xlu0 %2105, %v2103
        %v2107 = vpop.permute.xlu0 %2106
        %v2109 = vmul.f32 %v1258, %v2107
        %v2110 = vmul.f32 %v1259, %v2107
        %v2111 = vmul.f32 %v1260, %v2107
        %2115 = vrot.lane.b32.xlu0 %v2109, 96
        %v2116 = vpop.permute.xlu0 %2115
        %2117 = vrot.lane.b32.xlu0 %v2110, 96
        %v2118 = vpop.permute.xlu0 %2117
        %2119 = vrot.lane.b32.xlu0 %v2111, 96
        %v2120 = vpop.permute.xlu0 %2119
        %v2121 = vsel %vm345, %v2116, %v2118
        %v2122 = vsel %vm345, %v2118, %v2120
        %v2126 = vadd.f32 %v2099, %v2116
        %v2127 = vadd.f32 %v2100, %v2121
        %v2128 = vadd.f32 %v2101, %v2122
        %s2129 = scalar_lea.vmem %s4, 8
        %v2130 = vld [vmem:[%s2129] sm:$0x3]
        %v2132 = vlaneseq
        %v2133 = vshrl.u32 %v2132, 7
        %v2134 = vsub.s32 0, %v2133
        %v2135 = vrot.slane %v2130, %v2134
        %v2136 = vlaneseq
        %v2137 = vshrl.u32 %v2136, 7
        %v2138 = vsub.s32 1, %v2137
        %v2139 = vrot.slane %v2130, %v2138
        %2140 = vrot.lane.b32.xlu0 %v2135, 115
        %v2141 = vpop.permute.xlu0 %2140
        %2142 = vrot.lane.b32.xlu0 %v2139, 115
        %v2143 = vpop.permute.xlu0 %2142
        %vm2144 = vcmask 941056
        %v2145 = vsel %vm2144, %v2141, %v2143
        %v2149 = vmul.f32 %v2126, %v2141
        %v2150 = vmul.f32 %v2127, %v2145
        %v2151 = vmul.f32 %v2128, %v2143
        %2155 = vrot.lane.b32.xlu0 %v2149, 116
        %v2156 = vpop.permute.xlu0 %2155
        %2157 = vrot.lane.b32.xlu0 %v2150, 116
        %v2158 = vpop.permute.xlu0 %2157
        %2159 = vrot.lane.b32.xlu0 %v2151, 116
        %v2160 = vpop.permute.xlu0 %2159
        %vm2161 = vcmask 949248
        %v2162 = vsel %vm2161, %v2156, %v2158
        %v2163 = vsel %vm2161, %v2158, %v2160
        %v2167 = vadd.f32 %v1951, %v2162
        %v2168 = vadd.f32 %v1952, %v2163
        %v2169 = vadd.f32 %v1953, %v2160
        %s2170 = scalar_lea.vmem %s3, 40
        %v2171 = vld [vmem:[%s2170] sm:$0xff]
        %2173 = vset.pattern.permute.xlu0 0
        %2174 = vperm.xlu0 %2173, %v2171
        %v2175 = vpop.permute.xlu0 %2174
        %v2177 = vmul.f32 %v1100, %v2175
        %v2178 = vmul.f32 %v1101, %v2175
        %v2179 = vmul.f32 %v1102, %v2175
        %v2180 = vadd.f32 %v2177, 0.0
        %v2181 = vadd.f32 %v2178, 0.0
        %v2182 = vadd.f32 %v2179, 0.0
        %s2183 = scalar_lea.vmem %s3, 96
        %v2184 = vld [vmem:[%s2183] sm:$0xff]
        %2186 = vset.pattern.permute.xlu0 0
        %2187 = vperm.xlu0 %2186, %v2184
        %v2188 = vpop.permute.xlu0 %2187
        %v2190 = vmul.f32 %v1115, %v2188
        %v2191 = vmul.f32 %v1116, %v2188
        %v2192 = vmul.f32 %v1117, %v2188
        %2196 = vrot.lane.b32.xlu0 %v2190, 80
        %v2197 = vpop.permute.xlu0 %2196
        %2198 = vrot.lane.b32.xlu0 %v2191, 80
        %v2199 = vpop.permute.xlu0 %2198
        %2200 = vrot.lane.b32.xlu0 %v2192, 80
        %v2201 = vpop.permute.xlu0 %2200
        %v2202 = vsel %vm376, %v2197, %v2199
        %v2203 = vsel %vm376, %v2199, %v2201
        %v2207 = vadd.f32 %v2180, %v2197
        %v2208 = vadd.f32 %v2181, %v2202
        %v2209 = vadd.f32 %v2182, %v2203
        %s2210 = scalar_lea.vmem %s3, 152
        %v2211 = vld [vmem:[%s2210] sm:$0xff]
        %2213 = vset.pattern.permute.xlu0 0
        %2214 = vperm.xlu0 %2213, %v2211
        %v2215 = vpop.permute.xlu0 %2214
        %v2217 = vmul.f32 %v1115, %v2215
        %v2218 = vmul.f32 %v1116, %v2215
        %v2219 = vmul.f32 %v1117, %v2215
        %2223 = vrot.lane.b32.xlu0 %v2217, 32
        %v2224 = vpop.permute.xlu0 %2223
        %2225 = vrot.lane.b32.xlu0 %v2218, 32
        %v2226 = vpop.permute.xlu0 %2225
        %2227 = vrot.lane.b32.xlu0 %v2219, 32
        %v2228 = vpop.permute.xlu0 %2227
        %v2229 = vsel %vm1164, %v2224, %v2226
        %v2230 = vsel %vm1164, %v2226, %v2228
        %v2234 = vadd.f32 %v2207, %v2224
        %v2235 = vadd.f32 %v2208, %v2229
        %v2236 = vadd.f32 %v2209, %v2230
        %s2237 = scalar_lea.vmem %s3, 208
        %v2238 = vld [vmem:[%s2237] sm:$0xff]
        %2240 = vset.pattern.permute.xlu0 0
        %2241 = vperm.xlu0 %2240, %v2238
        %v2242 = vpop.permute.xlu0 %2241
        %v2244 = vmul.f32 %v1200, %v2242
        %v2245 = vmul.f32 %v1201, %v2242
        %v2246 = vmul.f32 %v1202, %v2242
        %2250 = vrot.lane.b32.xlu0 %v2244, 112
        %v2251 = vpop.permute.xlu0 %2250
        %2252 = vrot.lane.b32.xlu0 %v2245, 112
        %v2253 = vpop.permute.xlu0 %2252
        %2254 = vrot.lane.b32.xlu0 %v2246, 112
        %v2255 = vpop.permute.xlu0 %2254
        %v2256 = vsel %vm317, %v2251, %v2253
        %v2257 = vsel %vm317, %v2253, %v2255
        %v2261 = vadd.f32 %v2234, %v2251
        %v2262 = vadd.f32 %v2235, %v2256
        %v2263 = vadd.f32 %v2236, %v2257
        %s2264 = scalar_lea.vmem %s3, 264
        %v2265 = vld [vmem:[%s2264] sm:$0xff]
        %2267 = vset.pattern.permute.xlu0 0
        %2268 = vperm.xlu0 %2267, %v2265
        %v2269 = vpop.permute.xlu0 %2268
        %v2271 = vmul.f32 %v1200, %v2269
        %v2272 = vmul.f32 %v1201, %v2269
        %v2273 = vmul.f32 %v1202, %v2269
        %2277 = vrot.lane.b32.xlu0 %v2271, 64
        %v2278 = vpop.permute.xlu0 %2277
        %2279 = vrot.lane.b32.xlu0 %v2272, 64
        %v2280 = vpop.permute.xlu0 %2279
        %2281 = vrot.lane.b32.xlu0 %v2273, 64
        %v2282 = vpop.permute.xlu0 %2281
        %v2283 = vsel %vm404, %v2278, %v2280
        %v2284 = vsel %vm404, %v2280, %v2282
        %v2288 = vadd.f32 %v2261, %v2278
        %v2289 = vadd.f32 %v2262, %v2283
        %v2290 = vadd.f32 %v2263, %v2284
        %s2291 = scalar_lea.vmem %s3, 320
        %v2292 = vld [vmem:[%s2291] sm:$0xff]
        %2294 = vset.pattern.permute.xlu0 0
        %2295 = vperm.xlu0 %2294, %v2292
        %v2296 = vpop.permute.xlu0 %2295
        %v2298 = vmul.f32 %v1200, %v2296
        %v2299 = vmul.f32 %v1201, %v2296
        %v2300 = vmul.f32 %v1202, %v2296
        %2304 = vrot.lane.b32.xlu0 %v2298, 16
        %v2305 = vpop.permute.xlu0 %2304
        %2306 = vrot.lane.b32.xlu0 %v2299, 16
        %v2307 = vpop.permute.xlu0 %2306
        %2308 = vrot.lane.b32.xlu0 %v2300, 16
        %v2309 = vpop.permute.xlu0 %2308
        %v2310 = vsel %vm1249, %v2305, %v2307
        %v2311 = vsel %vm1249, %v2307, %v2309
        %v2315 = vadd.f32 %v2288, %v2305
        %v2316 = vadd.f32 %v2289, %v2310
        %v2317 = vadd.f32 %v2290, %v2311
        %s2318 = scalar_lea.vmem %s3, 376
        %v2319 = vld [vmem:[%s2318] sm:$0xff]
        %2321 = vset.pattern.permute.xlu0 0
        %2322 = vperm.xlu0 %2321, %v2319
        %v2323 = vpop.permute.xlu0 %2322
        %v2325 = vmul.f32 %v1258, %v2323
        %v2326 = vmul.f32 %v1259, %v2323
        %v2327 = vmul.f32 %v1260, %v2323
        %2331 = vrot.lane.b32.xlu0 %v2325, 96
        %v2332 = vpop.permute.xlu0 %2331
        %2333 = vrot.lane.b32.xlu0 %v2326, 96
        %v2334 = vpop.permute.xlu0 %2333
        %2335 = vrot.lane.b32.xlu0 %v2327, 96
        %v2336 = vpop.permute.xlu0 %2335
        %v2337 = vsel %vm345, %v2332, %v2334
        %v2338 = vsel %vm345, %v2334, %v2336
        %v2342 = vadd.f32 %v2315, %v2332
        %v2343 = vadd.f32 %v2316, %v2337
        %v2344 = vadd.f32 %v2317, %v2338
        %s2345 = scalar_lea.vmem %s4, 10
        %v2346 = vld [vmem:[%s2345] sm:$0x3]
        %v2348 = vlaneseq
        %v2349 = vshrl.u32 %v2348, 7
        %v2350 = vsub.s32 0, %v2349
        %v2351 = vrot.slane %v2346, %v2350
        %v2352 = vlaneseq
        %v2353 = vshrl.u32 %v2352, 7
        %v2354 = vsub.s32 1, %v2353
        %v2355 = vrot.slane %v2346, %v2354
        %2356 = vrot.lane.b32.xlu0 %v2351, 118
        %v2357 = vpop.permute.xlu0 %2356
        %2358 = vrot.lane.b32.xlu0 %v2355, 118
        %v2359 = vpop.permute.xlu0 %2358
        %vm2360 = vcmask 965632
        %v2361 = vsel %vm2360, %v2357, %v2359
        %v2365 = vmul.f32 %v2342, %v2357
        %v2366 = vmul.f32 %v2343, %v2361
        %v2367 = vmul.f32 %v2344, %v2359
        %2371 = vrot.lane.b32.xlu0 %v2365, 113
        %v2372 = vpop.permute.xlu0 %2371
        %2373 = vrot.lane.b32.xlu0 %v2366, 113
        %v2374 = vpop.permute.xlu0 %2373
        %2375 = vrot.lane.b32.xlu0 %v2367, 113
        %v2376 = vpop.permute.xlu0 %2375
        %vm2377 = vcmask 924672
        %v2378 = vsel %vm2377, %v2372, %v2374
        %v2379 = vsel %vm2377, %v2374, %v2376
        %v2383 = vadd.f32 %v2167, %v2378
        %v2384 = vadd.f32 %v2168, %v2379
        %v2385 = vadd.f32 %v2169, %v2376
        %s2386 = scalar_lea.vmem %s3, 48
        %v2387 = vld [vmem:[%s2386] sm:$0xff]
        %2389 = vset.pattern.permute.xlu0 0
        %2390 = vperm.xlu0 %2389, %v2387
        %v2391 = vpop.permute.xlu0 %2390
        %v2393 = vmul.f32 %v1100, %v2391
        %v2394 = vmul.f32 %v1101, %v2391
        %v2395 = vmul.f32 %v1102, %v2391
        %v2396 = vadd.f32 %v2393, 0.0
        %v2397 = vadd.f32 %v2394, 0.0
        %v2398 = vadd.f32 %v2395, 0.0
        %s2399 = scalar_lea.vmem %s3, 104
        %v2400 = vld [vmem:[%s2399] sm:$0xff]
        %2402 = vset.pattern.permute.xlu0 0
        %2403 = vperm.xlu0 %2402, %v2400
        %v2404 = vpop.permute.xlu0 %2403
        %v2406 = vmul.f32 %v1115, %v2404
        %v2407 = vmul.f32 %v1116, %v2404
        %v2408 = vmul.f32 %v1117, %v2404
        %2412 = vrot.lane.b32.xlu0 %v2406, 80
        %v2413 = vpop.permute.xlu0 %2412
        %2414 = vrot.lane.b32.xlu0 %v2407, 80
        %v2415 = vpop.permute.xlu0 %2414
        %2416 = vrot.lane.b32.xlu0 %v2408, 80
        %v2417 = vpop.permute.xlu0 %2416
        %v2418 = vsel %vm376, %v2413, %v2415
        %v2419 = vsel %vm376, %v2415, %v2417
        %v2423 = vadd.f32 %v2396, %v2413
        %v2424 = vadd.f32 %v2397, %v2418
        %v2425 = vadd.f32 %v2398, %v2419
        %s2426 = scalar_lea.vmem %s3, 160
        %v2427 = vld [vmem:[%s2426] sm:$0xff]
        %2429 = vset.pattern.permute.xlu0 0
        %2430 = vperm.xlu0 %2429, %v2427
        %v2431 = vpop.permute.xlu0 %2430
        %v2433 = vmul.f32 %v1115, %v2431
        %v2434 = vmul.f32 %v1116, %v2431
        %v2435 = vmul.f32 %v1117, %v2431
        %2439 = vrot.lane.b32.xlu0 %v2433, 32
        %v2440 = vpop.permute.xlu0 %2439
        %2441 = vrot.lane.b32.xlu0 %v2434, 32
        %v2442 = vpop.permute.xlu0 %2441
        %2443 = vrot.lane.b32.xlu0 %v2435, 32
        %v2444 = vpop.permute.xlu0 %2443
        %v2445 = vsel %vm1164, %v2440, %v2442
        %v2446 = vsel %vm1164, %v2442, %v2444
        %v2450 = vadd.f32 %v2423, %v2440
        %v2451 = vadd.f32 %v2424, %v2445
        %v2452 = vadd.f32 %v2425, %v2446
        %s2453 = scalar_lea.vmem %s3, 216
        %v2454 = vld [vmem:[%s2453] sm:$0xff]
        %2456 = vset.pattern.permute.xlu0 0
        %2457 = vperm.xlu0 %2456, %v2454
        %v2458 = vpop.permute.xlu0 %2457
        %v2460 = vmul.f32 %v1200, %v2458
        %v2461 = vmul.f32 %v1201, %v2458
        %v2462 = vmul.f32 %v1202, %v2458
        %2466 = vrot.lane.b32.xlu0 %v2460, 112
        %v2467 = vpop.permute.xlu0 %2466
        %2468 = vrot.lane.b32.xlu0 %v2461, 112
        %v2469 = vpop.permute.xlu0 %2468
        %2470 = vrot.lane.b32.xlu0 %v2462, 112
        %v2471 = vpop.permute.xlu0 %2470
        %v2472 = vsel %vm317, %v2467, %v2469
        %v2473 = vsel %vm317, %v2469, %v2471
        %v2477 = vadd.f32 %v2450, %v2467
        %v2478 = vadd.f32 %v2451, %v2472
        %v2479 = vadd.f32 %v2452, %v2473
        %s2480 = scalar_lea.vmem %s3, 272
        %v2481 = vld [vmem:[%s2480] sm:$0xff]
        %2483 = vset.pattern.permute.xlu0 0
        %2484 = vperm.xlu0 %2483, %v2481
        %v2485 = vpop.permute.xlu0 %2484
        %v2487 = vmul.f32 %v1200, %v2485
        %v2488 = vmul.f32 %v1201, %v2485
        %v2489 = vmul.f32 %v1202, %v2485
        %2493 = vrot.lane.b32.xlu0 %v2487, 64
        %v2494 = vpop.permute.xlu0 %2493
        %2495 = vrot.lane.b32.xlu0 %v2488, 64
        %v2496 = vpop.permute.xlu0 %2495
        %2497 = vrot.lane.b32.xlu0 %v2489, 64
        %v2498 = vpop.permute.xlu0 %2497
        %v2499 = vsel %vm404, %v2494, %v2496
        %v2500 = vsel %vm404, %v2496, %v2498
        %v2504 = vadd.f32 %v2477, %v2494
        %v2505 = vadd.f32 %v2478, %v2499
        %v2506 = vadd.f32 %v2479, %v2500
        %s2507 = scalar_lea.vmem %s3, 328
        %v2508 = vld [vmem:[%s2507] sm:$0xff]
        %2510 = vset.pattern.permute.xlu0 0
        %2511 = vperm.xlu0 %2510, %v2508
        %v2512 = vpop.permute.xlu0 %2511
        %v2514 = vmul.f32 %v1200, %v2512
        %v2515 = vmul.f32 %v1201, %v2512
        %v2516 = vmul.f32 %v1202, %v2512
        %2520 = vrot.lane.b32.xlu0 %v2514, 16
        %v2521 = vpop.permute.xlu0 %2520
        %2522 = vrot.lane.b32.xlu0 %v2515, 16
        %v2523 = vpop.permute.xlu0 %2522
        %2524 = vrot.lane.b32.xlu0 %v2516, 16
        %v2525 = vpop.permute.xlu0 %2524
        %v2526 = vsel %vm1249, %v2521, %v2523
        %v2527 = vsel %vm1249, %v2523, %v2525
        %v2531 = vadd.f32 %v2504, %v2521
        %v2532 = vadd.f32 %v2505, %v2526
        %v2533 = vadd.f32 %v2506, %v2527
        %s2534 = scalar_lea.vmem %s3, 384
        %v2535 = vld [vmem:[%s2534] sm:$0xff]
        %2537 = vset.pattern.permute.xlu0 0
        %2538 = vperm.xlu0 %2537, %v2535
        %v2539 = vpop.permute.xlu0 %2538
        %v2541 = vmul.f32 %v1258, %v2539
        %v2542 = vmul.f32 %v1259, %v2539
        %v2543 = vmul.f32 %v1260, %v2539
        %2547 = vrot.lane.b32.xlu0 %v2541, 96
        %v2548 = vpop.permute.xlu0 %2547
        %2549 = vrot.lane.b32.xlu0 %v2542, 96
        %v2550 = vpop.permute.xlu0 %2549
        %2551 = vrot.lane.b32.xlu0 %v2543, 96
        %v2552 = vpop.permute.xlu0 %2551
        %v2553 = vsel %vm345, %v2548, %v2550
        %v2554 = vsel %vm345, %v2550, %v2552
        %v2558 = vadd.f32 %v2531, %v2548
        %v2559 = vadd.f32 %v2532, %v2553
        %v2560 = vadd.f32 %v2533, %v2554
        %s2561 = scalar_lea.vmem %s4, 12
        %v2562 = vld [vmem:[%s2561] sm:$0x3]
        %v2564 = vlaneseq
        %v2565 = vshrl.u32 %v2564, 7
        %v2566 = vsub.s32 0, %v2565
        %v2567 = vrot.slane %v2562, %v2566
        %v2568 = vlaneseq
        %v2569 = vshrl.u32 %v2568, 7
        %v2570 = vsub.s32 1, %v2569
        %v2571 = vrot.slane %v2562, %v2570
        %2572 = vrot.lane.b32.xlu0 %v2567, 121
        %v2573 = vpop.permute.xlu0 %2572
        %2574 = vrot.lane.b32.xlu0 %v2571, 121
        %v2575 = vpop.permute.xlu0 %2574
        %vm2576 = vcmask 990208
        %v2577 = vsel %vm2576, %v2573, %v2575
        %v2581 = vmul.f32 %v2558, %v2573
        %v2582 = vmul.f32 %v2559, %v2577
        %v2583 = vmul.f32 %v2560, %v2575
        %2587 = vrot.lane.b32.xlu0 %v2581, 110
        %v2588 = vpop.permute.xlu0 %2587
        %2589 = vrot.lane.b32.xlu0 %v2582, 110
        %v2590 = vpop.permute.xlu0 %2589
        %2591 = vrot.lane.b32.xlu0 %v2583, 110
        %v2592 = vpop.permute.xlu0 %2591
        %vm2593 = vcmask 900096
        %v2594 = vsel %vm2593, %v2588, %v2590
        %v2595 = vsel %vm2593, %v2590, %v2592
        %v2599 = vadd.f32 %v2383, %v2594
        %v2600 = vadd.f32 %v2384, %v2595
        %v2601 = vadd.f32 %v2385, %v2592
        %v2602 = vld [vmem:[%s5] sm:$0xff]
        %2604 = vset.pattern.permute.xlu0 0
        %2605 = vperm.xlu0 %2604, %v2602
        %v2606 = vpop.permute.xlu0 %2605
        %v2608 = vlaneseq
        %v2609 = vshrl.u32 %v2608, 7
        %v2610 = vsub.s32 0, %v2609
        %v2611 = vrot.slane %v2599, %v2610
        %v2612 = vlaneseq
        %v2613 = vshrl.u32 %v2612, 7
        %v2614 = vsub.s32 0, %v2613
        %v2615 = vrot.slane %v2600, %v2614
        %v2616 = vlaneseq
        %v2617 = vshrl.u32 %v2616, 7
        %v2618 = vsub.s32 0, %v2617
        %v2619 = vrot.slane %v2601, %v2618
        %v2620 = vmul.f32 %v2606, %v2611
        %v2621 = vmul.f32 %v2606, %v2615
        %v2622 = vmul.f32 %v2606, %v2619
        %v2623 = vadd.f32 %v2620, 0.0
        %v2624 = vadd.f32 %v2621, 0.0
        %v2625 = vadd.f32 %v2622, 0.0
        %s2626 = scalar_lea.vmem %s5, 8
        %v2627 = vld [vmem:[%s2626] sm:$0xff]
        %2629 = vset.pattern.permute.xlu0 0
        %2630 = vperm.xlu0 %2629, %v2627
        %v2631 = vpop.permute.xlu0 %2630
        %v2633 = vlaneseq
        %v2634 = vshrl.u32 %v2633, 7
        %v2635 = vsub.s32 1, %v2634
        %v2636 = vrot.slane %v2599, %v2635
        %v2637 = vlaneseq
        %v2638 = vshrl.u32 %v2637, 7
        %v2639 = vsub.s32 1, %v2638
        %v2640 = vrot.slane %v2600, %v2639
        %v2641 = vlaneseq
        %v2642 = vshrl.u32 %v2641, 7
        %v2643 = vsub.s32 1, %v2642
        %v2644 = vrot.slane %v2601, %v2643
        %v2645 = vmul.f32 %v2631, %v2636
        %v2646 = vmul.f32 %v2631, %v2640
        %v2647 = vmul.f32 %v2631, %v2644
        %v2648 = vadd.f32 %v2623, %v2645
        %v2649 = vadd.f32 %v2624, %v2646
        %v2650 = vadd.f32 %v2625, %v2647
        %s2651 = scalar_lea.vmem %s5, 16
        %v2652 = vld [vmem:[%s2651] sm:$0xff]
        %2654 = vset.pattern.permute.xlu0 0
        %2655 = vperm.xlu0 %2654, %v2652
        %v2656 = vpop.permute.xlu0 %2655
        %v2658 = vlaneseq
        %v2659 = vshrl.u32 %v2658, 7
        %v2660 = vsub.s32 2, %v2659
        %v2661 = vrot.slane %v2599, %v2660
        %v2662 = vlaneseq
        %v2663 = vshrl.u32 %v2662, 7
        %v2664 = vsub.s32 2, %v2663
        %v2665 = vrot.slane %v2600, %v2664
        %v2666 = vlaneseq
        %v2667 = vshrl.u32 %v2666, 7
        %v2668 = vsub.s32 2, %v2667
        %v2669 = vrot.slane %v2601, %v2668
        %v2670 = vmul.f32 %v2656, %v2661
        %v2671 = vmul.f32 %v2656, %v2665
        %v2672 = vmul.f32 %v2656, %v2669
        %v2673 = vadd.f32 %v2648, %v2670
        %v2674 = vadd.f32 %v2649, %v2671
        %v2675 = vadd.f32 %v2650, %v2672
        %s2676 = scalar_lea.vmem %s5, 24
        %v2677 = vld [vmem:[%s2676] sm:$0xff]
        %2679 = vset.pattern.permute.xlu0 0
        %2680 = vperm.xlu0 %2679, %v2677
        %v2681 = vpop.permute.xlu0 %2680
        %v2683 = vlaneseq
        %v2684 = vshrl.u32 %v2683, 7
        %v2685 = vsub.s32 3, %v2684
        %v2686 = vrot.slane %v2599, %v2685
        %v2687 = vlaneseq
        %v2688 = vshrl.u32 %v2687, 7
        %v2689 = vsub.s32 3, %v2688
        %v2690 = vrot.slane %v2600, %v2689
        %v2691 = vlaneseq
        %v2692 = vshrl.u32 %v2691, 7
        %v2693 = vsub.s32 3, %v2692
        %v2694 = vrot.slane %v2601, %v2693
        %v2695 = vmul.f32 %v2681, %v2686
        %v2696 = vmul.f32 %v2681, %v2690
        %v2697 = vmul.f32 %v2681, %v2694
        %v2698 = vadd.f32 %v2673, %v2695
        %v2699 = vadd.f32 %v2674, %v2696
        %v2700 = vadd.f32 %v2675, %v2697
        %s2701 = scalar_lea.vmem %s5, 32
        %v2702 = vld [vmem:[%s2701] sm:$0xff]
        %2704 = vset.pattern.permute.xlu0 0
        %2705 = vperm.xlu0 %2704, %v2702
        %v2706 = vpop.permute.xlu0 %2705
        %v2708 = vlaneseq
        %v2709 = vshrl.u32 %v2708, 7
        %v2710 = vsub.s32 4, %v2709
        %v2711 = vrot.slane %v2599, %v2710
        %v2712 = vlaneseq
        %v2713 = vshrl.u32 %v2712, 7
        %v2714 = vsub.s32 4, %v2713
        %v2715 = vrot.slane %v2600, %v2714
        %v2716 = vlaneseq
        %v2717 = vshrl.u32 %v2716, 7
        %v2718 = vsub.s32 4, %v2717
        %v2719 = vrot.slane %v2601, %v2718
        %v2720 = vmul.f32 %v2706, %v2711
        %v2721 = vmul.f32 %v2706, %v2715
        %v2722 = vmul.f32 %v2706, %v2719
        %v2723 = vadd.f32 %v2698, %v2720
        %v2724 = vadd.f32 %v2699, %v2721
        %v2725 = vadd.f32 %v2700, %v2722
        %s2726 = scalar_lea.vmem %s5, 40
        %v2727 = vld [vmem:[%s2726] sm:$0xff]
        %2729 = vset.pattern.permute.xlu0 0
        %2730 = vperm.xlu0 %2729, %v2727
        %v2731 = vpop.permute.xlu0 %2730
        %v2733 = vlaneseq
        %v2734 = vshrl.u32 %v2733, 7
        %v2735 = vsub.s32 5, %v2734
        %v2736 = vrot.slane %v2599, %v2735
        %v2737 = vlaneseq
        %v2738 = vshrl.u32 %v2737, 7
        %v2739 = vsub.s32 5, %v2738
        %v2740 = vrot.slane %v2600, %v2739
        %v2741 = vlaneseq
        %v2742 = vshrl.u32 %v2741, 7
        %v2743 = vsub.s32 5, %v2742
        %v2744 = vrot.slane %v2601, %v2743
        %v2745 = vmul.f32 %v2731, %v2736
        %v2746 = vmul.f32 %v2731, %v2740
        %v2747 = vmul.f32 %v2731, %v2744
        %v2748 = vadd.f32 %v2723, %v2745
        %v2749 = vadd.f32 %v2724, %v2746
        %v2750 = vadd.f32 %v2725, %v2747
        %s2751 = scalar_lea.vmem %s5, 48
        %v2752 = vld [vmem:[%s2751] sm:$0xff]
        %2754 = vset.pattern.permute.xlu0 0
        %2755 = vperm.xlu0 %2754, %v2752
        %v2756 = vpop.permute.xlu0 %2755
        %v2758 = vlaneseq
        %v2759 = vshrl.u32 %v2758, 7
        %v2760 = vsub.s32 6, %v2759
        %v2761 = vrot.slane %v2599, %v2760
        %v2762 = vlaneseq
        %v2763 = vshrl.u32 %v2762, 7
        %v2764 = vsub.s32 6, %v2763
        %v2765 = vrot.slane %v2600, %v2764
        %v2766 = vlaneseq
        %v2767 = vshrl.u32 %v2766, 7
        %v2768 = vsub.s32 6, %v2767
        %v2769 = vrot.slane %v2601, %v2768
        %v2770 = vmul.f32 %v2756, %v2761
        %v2771 = vmul.f32 %v2756, %v2765
        %v2772 = vmul.f32 %v2756, %v2769
        %v2773 = vadd.f32 %v2748, %v2770
        %v2774 = vadd.f32 %v2749, %v2771
        %v2775 = vadd.f32 %v2750, %v2772
        %s2776 = scalar_lea.vmem %s5, 56
        %v2777 = vld [vmem:[%s2776] sm:$0xff]
        %2779 = vset.pattern.permute.xlu0 0
        %2780 = vperm.xlu0 %2779, %v2777
        %v2781 = vpop.permute.xlu0 %2780
        %v2783 = vlaneseq
        %v2784 = vshrl.u32 %v2783, 7
        %v2785 = vsub.s32 7, %v2784
        %v2786 = vrot.slane %v2599, %v2785
        %v2787 = vlaneseq
        %v2788 = vshrl.u32 %v2787, 7
        %v2789 = vsub.s32 7, %v2788
        %v2790 = vrot.slane %v2600, %v2789
        %v2791 = vlaneseq
        %v2792 = vshrl.u32 %v2791, 7
        %v2793 = vsub.s32 7, %v2792
        %v2794 = vrot.slane %v2601, %v2793
        %v2795 = vmul.f32 %v2781, %v2786
        %v2796 = vmul.f32 %v2781, %v2790
        %v2797 = vmul.f32 %v2781, %v2794
        %v2798 = vadd.f32 %v2773, %v2795
        %v2799 = vadd.f32 %v2774, %v2796
        %v2800 = vadd.f32 %v2775, %v2797
        %v2801 = vld [vmem:[%s6] sm:$0xff]
        %2803 = vset.pattern.permute.xlu0 0
        %2804 = vperm.xlu0 %2803, %v2801
        %v2805 = vpop.permute.xlu0 %2804
        %v2807 = vadd.f32 %v2798, %v2805
        %v2808 = vadd.f32 %v2799, %v2805
        %v2809 = vadd.f32 %v2800, %v2805
        %2813 = vrot.lane.b32.xlu0 %v2807, 25
        %v2814 = vpop.permute.xlu0 %2813
        %2815 = vrot.lane.b32.xlu0 %v2808, 25
        %v2816 = vpop.permute.xlu0 %2815
        %2817 = vrot.lane.b32.xlu0 %v2809, 25
        %v2818 = vpop.permute.xlu0 %2817
        %vm2819 = vcmask 203776
        %v2820 = vsel %vm2819, %v2814, %v2816
        %v2821 = vsel %vm2819, %v2816, %v2818
        %v2824 = vmul.f32 %v277, %v2820
        %v2825 = vmul.f32 %v278, %v2821
        %2826 = vst [vmem:[%s271] sm:$0xff] %v2824
        %2827 = vst [vmem:[%s271 + $0x8] sm:$0xff] %v2825
        %s2828 = sand.u32 %s181, 1
        %s2829 = scalar_lea.sflag [#allocation5], %s2828
        %s2830 = sand.u32 %s181, 1
        %s2831 = smul.addr %s2830, 16
        %s2832 = scalar_lea.vmem [#allocation4], %s2831
        // Predicated region
        $region49: #{tpu_custom_call.1} parent=47 // pred_check
          %p2833 = pneg %p191
        $region50: #{tpu_custom_call.1} parent=47 // pred_check_branch
          %2835 = sbr.rel (%p2833) target = $region52
        $region51: #{tpu_custom_call.1} parent=47 // pred_region
          %s2837 = ssub.s32 256, 256
          %2838 = vsyncadd %s2829, %s2837
          %s2839 = smul.addr %s21, 2
          %s2840 = smul.addr %s2839, 128
          %s2841 = scalar_lea.hbm %s7, %s2840
          %s2843 = sshll.u32 %s2832, 4
          %s2844 = int_to_ptr.vmem [resolvable:$true] %s2843
          %2846 = dma.vmem_to_hbm [thread:$0]  %s2844, 256, %s2841, %s2829
        $region52: #{tpu_custom_call.1} parent=47 // pred_fallthru
          _
      $region48: #{tpu_custom_call.1} parent=5 // pred_fallthru
        _
      %p2847 = scmp.le.s32.totalorder 2, %s16
      // Predicated region
      $region53: #{tpu_custom_call.1} parent=5 // pred_check
        %p2848 = pneg %p2847
      $region54: #{tpu_custom_call.1} parent=5 // pred_check_branch
        %2850 = sbr.rel (%p2848) target = $region56
      $region55: #{tpu_custom_call.1} parent=5 // pred_region
        %s2851 = ssub.s32 %s16, 2
        // Predicated region
        $region57: #{tpu_custom_call.1} parent=55 // pred_check
          %p2852 = pneg %p197
        $region58: #{tpu_custom_call.1} parent=55 // pred_check_branch
          %2854 = sbr.rel (%p2852) target = $region60
        $region59: #{tpu_custom_call.1} parent=55 // pred_region
          %s2855 = sand.u32 %s182, 1
          %s2856 = scalar_lea.sflag [#allocation5], %s2855
          %s2857 = sand.u32 %s182, 1
          %s2858 = smul.addr %s2857, 16
          %s2859 = scalar_lea.vmem [#allocation4], %s2858
          %2860 = dma.done %s2856, 256
        $region60: #{tpu_custom_call.1} parent=55 // pred_fallthru
          _
      $region56: #{tpu_custom_call.1} parent=5 // pred_fallthru
        _
    $region6: #{tpu_custom_call.1} parent=1 // loop_footer
      %s20 = sadd.s32 1, %s16
    $region7: #{tpu_custom_call.1} parent=1 // loop_footer_branch
      %15 = sbr.rel target = $region3
    $region8: #{tpu_custom_call.1} parent=1 // loop_exit
      _
    %2861 = vsyncpa [#allocation5], 1
    %s2862 = scalar_lea.sflag [#allocation5], 1
    %2863 = vsyncpa %s2862, 1

</llo_original>
